<compile_context>
chip_gen: v7x
topology: tpu7x:2x2x1
jax: 0.10.0
libtpu: 0.0.40
codegen_flags: <defaults>
</compile_context>

<pallas_src>
import functools

import jax
import jax.numpy as jnp
from jax import lax
from jax.experimental import pallas as pl
from jax.experimental.pallas import tpu as pltpu


def _vmem_limit_bytes():
    """Per-generation scoped-VMEM budget: ~48 MiB on v7x (64 MiB physical),
    ~96 MiB on v5e/v6e (128 MiB physical)."""
    default = 64 * 1024 * 1024
    try:
        info = pltpu.get_tpu_info()
        phys = getattr(info, "vmem_capacity_bytes", default)
    except Exception:
        phys = default
    return int(min(phys * 3 // 4, 100 * 1024 * 1024))


def _pick_q_tile(n):
    """Largest query-row tile (<= 512) that evenly divides N; keeps the (8,128)
    BlockSpec constraint legal and bounds the per-step score tile to (tq, N)."""
    for t in (512, 256, 128, 64, 32, 16, 8):
        if t <= n and n % t == 0:
            return t
    return n


# ---------------------------------------------------------------------------
# Fused q-proj + kv-proj + multi-head attention + output-projection kernel
# grid = (B, N // tq); kv scratch is computed at qi == 0 and reused across qi.
# ---------------------------------------------------------------------------
def _fused_attn_kernel(tq_ref, x_ref, wq_ref, wkv_ref, wp_ref, bp_ref,
                       o_ref, kv_ref, *, num_heads):
    qi = pl.program_id(1)
    tq, C = tq_ref.shape
    D = C // num_heads

    # k/v projection: one weight-stationary MXU pass per batch (qkv_bias=False),
    # result stays resident in bf16 VMEM scratch for all query tiles of this b.
    @pl.when(qi == 0)
    def _():
        kv_ref[...] = jnp.dot(
            x_ref[0], wkv_ref[...],
            preferred_element_type=jnp.float32).astype(jnp.bfloat16)

    # q projection fused in-kernel; the attention scale is already folded into
    # wq by the wrapper, so no per-score-tile multiply is needed.
    q = jnp.dot(tq_ref[...], wq_ref[...],
                preferred_element_type=jnp.float32).astype(jnp.bfloat16)   # (tq, C)

    kv = kv_ref[...]
    k = kv[:, :C]                       # (N, C)
    v = kv[:, C:]                       # (N, C)
    wp = wp_ref[...]

    # TODO(synk): with head_dim = C // num_heads << 128 (the dim=16/32 configs)
    # the per-head dots underfill the MXU lanes; packing heads per dot needs a
    # layout change that is out of scope here.
    acc = jnp.zeros((tq, C), jnp.float32)
    for h in range(num_heads):          # static, unrolled head loop
        lo, hi = h * D, (h + 1) * D
        # q_h @ k_h^T via dot_general contracting on D -> MXU, no XLU transpose.
        s = lax.dot_general(q[:, lo:hi], k[:, lo:hi], (((1,), (1,)), ((), ())),
                            preferred_element_type=jnp.float32)            # (tq, N)

        # softmax in f32 over the full KV axis (bounded by the (tq, N) tile).
        m = jnp.max(s, axis=-1, keepdims=True)
        p = jnp.exp(s - m)
        denom = jnp.sum(p, axis=-1, keepdims=True)
        p = (p * pl.reciprocal(denom, approx=True)).astype(jnp.bfloat16)

        oh = jnp.dot(p, v[:, lo:hi], preferred_element_type=jnp.float32)   # (tq, D)

        # fused output projection: proj(concat_h o_h) = sum_h o_h @ Wp[hD:(h+1)D,:]
        acc = acc + jnp.dot(oh.astype(jnp.bfloat16), wp[lo:hi, :],
                            preferred_element_type=jnp.float32)            # (tq, C)

    # TODO(synk): if C < 128 (demo C=32) this store is a masked vst; pad C in
    # the wrapper when a lane-dense output slab matters.
    o_ref[0] = (acc + bp_ref[...]).astype(o_ref.dtype)


def fused_attention(tq_up, x, wq, wkv, wproj, bproj, num_heads, out_dtype):
    B, N, C = x.shape
    tq = _pick_q_tile(N)
    grid = (B, N // tq)
    kern = functools.partial(_fused_attn_kernel, num_heads=num_heads)

    def call(single_buffer_resident):
        def resident(shape):
            # Batch-invariant, grid-invariant operands: index_map is constant,
            # so single-buffering halves their VMEM footprint.
            idx = lambda b, qi: (0,) * len(shape)
            if single_buffer_resident:
                return pl.BlockSpec(shape, idx, pipeline_mode=pl.Buffered(1))
            return pl.BlockSpec(shape, idx)

        return pl.pallas_call(
            kern,
            out_shape=jax.ShapeDtypeStruct((B, N, C), out_dtype),
            grid=grid,
            in_specs=[
                pl.BlockSpec((tq, C), lambda b, qi: (qi, 0)),      # task-query tile
                pl.BlockSpec((1, N, C), lambda b, qi: (b, 0, 0)),  # x (per batch)
                resident((C, C)),                                  # wq (scale folded)
                resident((C, 2 * C)),                              # wkv (k|v in one pass)
                resident((C, C)),                                  # wproj
                resident((1, C)),                                  # proj bias
            ],
            out_specs=pl.BlockSpec((1, tq, C), lambda b, qi: (b, qi, 0)),
            scratch_shapes=[pltpu.VMEM((N, 2 * C), jnp.bfloat16)],  # resident k|v
            compiler_params=pltpu.CompilerParams(
                dimension_semantics=("parallel", "arbitrary"),
                vmem_limit_bytes=_vmem_limit_bytes(),
            ),
        )(tq_up, x, wq, wkv, wproj, bproj)

    try:
        return call(True)
    except Exception:
        # Fallback for Pallas versions that reject pipeline_mode / Buffered(1):
        # identical kernel, default (double) buffering for the resident operands.
        return call(False)


# ---------------------------------------------------------------------------
# Module forward (thin JAX glue around the single pallas_call)
# ---------------------------------------------------------------------------
def attention_dec_forward(params, x, H, W, num_heads):
    """sr_ratio == 1, dropout == 0 path of Attention_dec.forward."""
    B, N, C = x.shape
    head_dim = C // num_heads
    scale = head_dim ** (-0.5)

    task_query = params["task_query"]            # (1, Tq, C), shared across batch
    Tq = task_query.shape[1]

    # F.interpolate(q, size=(N, D)) with default mode='nearest': D is unchanged,
    # so it is a nearest row gather idx[i] = floor(i*Tq/N) along the query-seq
    # axis.  The gather commutes with the row-wise q Linear, so gather the
    # task_query rows first and let the kernel do the fused projection.  q is
    # identical for every batch element (matches the PyTorch repeat).
    idx = (jnp.arange(N, dtype=jnp.int32) * Tq) // N
    tq_up = task_query[0][idx]                   # (N, C)

    # bf16 operands in HBM (halves DMA bytes and buffer VMEM); fold the
    # attention scale into wq once instead of scaling every score tile.
    x_bf = x.astype(jnp.bfloat16)
    tq_bf = tq_up.astype(jnp.bfloat16)
    wq_bf = (params["wq"] * scale).astype(jnp.bfloat16)
    wkv_bf = params["wkv"].astype(jnp.bfloat16)          # (C, 2C): cols [0,C)->k, [C,2C)->v
    wp_bf = params["wproj"].astype(jnp.bfloat16)
    bp = params["bproj"].reshape(1, C).astype(jnp.float32)

    # dropouts have p = 0 -> identity
    return fused_attention(tq_bf, x_bf, wq_bf, wkv_bf, wp_bf, bp,
                           num_heads, out_dtype=x.dtype)


# ---------------------------------------------------------------------------
# Deterministic parameter init (matches Attention_dec __init__ shapes)
# ---------------------------------------------------------------------------
def init_params(key, dim, task_len=48):
    k1, k2, k3, k4 = jax.random.split(key, 4)

    def trunc_normal(k, shape, std=0.02):
        return jax.random.truncated_normal(k, -2.0, 2.0, shape, jnp.float32) * std

    return dict(
        task_query=jax.random.normal(k4, (1, task_len, dim), jnp.float32),
        wq=trunc_normal(k1, (dim, dim)),            # stored (Cin, Cout) for x @ W
        wkv=trunc_normal(k2, (dim, 2 * dim)),
        wproj=trunc_normal(k3, (dim, dim)),
        bproj=jnp.zeros((dim,), jnp.float32),       # proj bias init constant 0
    )


if __name__ == "__main__":
    key = jax.random.PRNGKey(0)
    B, C, num_heads = 2, 32, 8
    H = W = 4
    N = H * W

    kx, kp = jax.random.split(key, 2)
    x = jax.random.normal(kx, (B, N, C), jnp.float32)
    params = init_params(kp, C, task_len=48)

    out = attention_dec_forward(params, x, H, W, num_heads)
    jax.block_until_ready(out)
    assert out.shape == (B, N, C), out.shape
    print("KERNEL_OK")
</pallas_src>

<mosaic_0001>
module attributes {stable_mosaic.version = 11 : i64} {
  func.func @_fused_attn_kernel(%arg0: i32, %arg1: i32, %arg2: memref<16x32xbf16, #tpu.memory_space<vmem>>, %arg3: memref<1x16x32xbf16, #tpu.memory_space<vmem>>, %arg4: memref<32x32xbf16, #tpu.memory_space<vmem>>, %arg5: memref<32x64xbf16, #tpu.memory_space<vmem>>, %arg6: memref<32x32xbf16, #tpu.memory_space<vmem>>, %arg7: memref<1x32xf32, #tpu.memory_space<vmem>>, %arg8: memref<1x16x32xf32, #tpu.memory_space<vmem>>, %arg9: memref<16x64xbf16, #tpu.memory_space<vmem>>) attributes {dimension_semantics = [#tpu.dimension_semantics<parallel>, #tpu.dimension_semantics<arbitrary>], iteration_bounds = array<i64: 2, 1>, scalar_prefetch = 0 : i64, scratch_operands = 1 : i64, tpu.core_type = #tpu.core_type<tc>, window_params = [{transform_indices = @transform_0, window_bounds = array<i64: 16, 32>}, {transform_indices = @transform_1, window_bounds = array<i64: 1, 16, 32>}, {pipeline_mode = #tpu.pipeline_mode<synchronous>, transform_indices = @transform_2, window_bounds = array<i64: 32, 32>}, {pipeline_mode = #tpu.pipeline_mode<synchronous>, transform_indices = @transform_3, window_bounds = array<i64: 32, 64>}, {pipeline_mode = #tpu.pipeline_mode<synchronous>, transform_indices = @transform_4, window_bounds = array<i64: 32, 32>}, {pipeline_mode = #tpu.pipeline_mode<synchronous>, transform_indices = @transform_5, window_bounds = array<i64: 1, 32>}, {transform_indices = @transform_6, window_bounds = array<i64: 1, 16, 32>}]} {
    %c0_i32 = arith.constant 0 : i32
    %0 = arith.cmpi eq, %arg1, %c0_i32 : i32
    %1 = arith.extui %0 : i1 to i32
    %c0_i32_0 = arith.constant 0 : i32
    %2 = arith.cmpi ne, %1, %c0_i32_0 : i32
    scf.if %2 {
      %c0_54 = arith.constant 0 : index
      %c0_55 = arith.constant 0 : index
      %c0_56 = arith.constant 0 : index
      %178 = vector.load %arg3[%c0_54, %c0_55, %c0_56] : memref<1x16x32xbf16, #tpu.memory_space<vmem>>, vector<1x16x32xbf16>
      %179 = vector.shape_cast %178 : vector<1x16x32xbf16> to vector<16x32xbf16>
      %c0_57 = arith.constant 0 : index
      %c0_58 = arith.constant 0 : index
      %180 = vector.load %arg5[%c0_57, %c0_58] : memref<32x64xbf16, #tpu.memory_space<vmem>>, vector<32x64xbf16>
      %cst_59 = arith.constant dense<0.000000e+00> : vector<16x64xf32>
      %181 = tpu.matmul %179, %180, %cst_59 {dimension_numbers = #tpu.dot_dimension_numbers<[1], [0], [0], [1], [0, 0, 1, 1], [], []>} : vector<16x32xbf16>, vector<32x64xbf16>, vector<16x64xf32> -> vector<16x64xf32>
      %182 = arith.truncf %181 : vector<16x64xf32> to vector<16x64xbf16>
      %c0_60 = arith.constant 0 : index
      %c0_61 = arith.constant 0 : index
      %183 = vector.load %arg9[%c0_60, %c0_61] : memref<16x64xbf16, #tpu.memory_space<vmem>>, vector<16x64xbf16>
      tpu.vector_store %arg9[%c0_60, %c0_61], %182 {strides = array<i32>} : memref<16x64xbf16, #tpu.memory_space<vmem>>, vector<16x64xbf16>,
    } else {
    }
    %c0 = arith.constant 0 : index
    %c0_1 = arith.constant 0 : index
    %3 = vector.load %arg2[%c0, %c0_1] : memref<16x32xbf16, #tpu.memory_space<vmem>>, vector<16x32xbf16>
    %c0_2 = arith.constant 0 : index
    %c0_3 = arith.constant 0 : index
    %4 = vector.load %arg4[%c0_2, %c0_3] : memref<32x32xbf16, #tpu.memory_space<vmem>>, vector<32x32xbf16>
    %cst = arith.constant dense<0.000000e+00> : vector<16x32xf32>
    %5 = tpu.matmul %3, %4, %cst {dimension_numbers = #tpu.dot_dimension_numbers<[1], [0], [0], [1], [0, 0, 1, 1], [], []>} : vector<16x32xbf16>, vector<32x32xbf16>, vector<16x32xf32> -> vector<16x32xf32>
    %6 = arith.truncf %5 : vector<16x32xf32> to vector<16x32xbf16>
    %c0_4 = arith.constant 0 : index
    %c0_5 = arith.constant 0 : index
    %7 = vector.load %arg9[%c0_4, %c0_5] : memref<16x64xbf16, #tpu.memory_space<vmem>>, vector<16x64xbf16>
    %8 = vector.extract_strided_slice %7 {offsets = [0, 0], sizes = [16, 32], strides = [1, 1]} : vector<16x64xbf16> to vector<16x32xbf16>
    %9 = vector.extract_strided_slice %7 {offsets = [0, 32], sizes = [16, 32], strides = [1, 1]} : vector<16x64xbf16> to vector<16x32xbf16>
    %c0_6 = arith.constant 0 : index
    %c0_7 = arith.constant 0 : index
    %10 = vector.load %arg6[%c0_6, %c0_7] : memref<32x32xbf16, #tpu.memory_space<vmem>>, vector<32x32xbf16>
    %cst_8 = arith.constant 0.000000e+00 : f32
    %11 = vector.broadcast %cst_8 : f32 to vector<16x32xf32>
    %12 = vector.extract_strided_slice %6 {offsets = [0, 0], sizes = [16, 4], strides = [1, 1]} : vector<16x32xbf16> to vector<16x4xbf16>
    %13 = vector.extract_strided_slice %8 {offsets = [0, 0], sizes = [16, 4], strides = [1, 1]} : vector<16x32xbf16> to vector<16x4xbf16>
    %cst_9 = arith.constant dense<0.000000e+00> : vector<16x16xf32>
    %14 = tpu.matmul %12, %13, %cst_9 {dimension_numbers = #tpu.dot_dimension_numbers<[1], [1], [0], [0], [0, 0, 1, 0], [], []>} : vector<16x4xbf16>, vector<16x4xbf16>, vector<16x16xf32> -> vector<16x16xf32>
    %cst_10 = arith.constant dense<0xFF800000> : vector<16xf32>
    %15 = vector.multi_reduction <maximumf>, %14, %cst_10 [1] : vector<16x16xf32> to vector<16xf32>
    %16 = vector.shape_cast %15 : vector<16xf32> to vector<16x1xf32>
    %17 = vector.broadcast %16 : vector<16x1xf32> to vector<16x16xf32>
    %18 = arith.subf %14, %17 : vector<16x16xf32>
    %19 = math.exp %18 : vector<16x16xf32>
    %cst_11 = arith.constant dense<0.000000e+00> : vector<16xf32>
    %20 = vector.multi_reduction <add>, %19, %cst_11 [1] : vector<16x16xf32> to vector<16xf32>
    %21 = vector.shape_cast %20 : vector<16xf32> to vector<16x1xf32>
    %22 = tpu.reciprocal %21 {approx = true} : vector<16x1xf32> -> vector<16x1xf32>
    %23 = vector.broadcast %22 : vector<16x1xf32> to vector<16x16xf32>
    %24 = arith.mulf %19, %23 : vector<16x16xf32>
    %25 = arith.truncf %24 : vector<16x16xf32> to vector<16x16xbf16>
    %26 = vector.extract_strided_slice %9 {offsets = [0, 0], sizes = [16, 4], strides = [1, 1]} : vector<16x32xbf16> to vector<16x4xbf16>
    %cst_12 = arith.constant dense<0.000000e+00> : vector<16x4xf32>
    %27 = tpu.matmul %25, %26, %cst_12 {dimension_numbers = #tpu.dot_dimension_numbers<[1], [0], [0], [1], [0, 0, 1, 1], [], []>} : vector<16x16xbf16>, vector<16x4xbf16>, vector<16x4xf32> -> vector<16x4xf32>
    %28 = arith.truncf %27 : vector<16x4xf32> to vector<16x4xbf16>
    %29 = vector.extract_strided_slice %10 {offsets = [0, 0], sizes = [4, 32], strides = [1, 1]} : vector<32x32xbf16> to vector<4x32xbf16>
    %cst_13 = arith.constant dense<0.000000e+00> : vector<16x32xf32>
    %30 = tpu.matmul %28, %29, %cst_13 {dimension_numbers = #tpu.dot_dimension_numbers<[1], [0], [0], [1], [0, 0, 1, 1], [], []>} : vector<16x4xbf16>, vector<4x32xbf16>, vector<16x32xf32> -> vector<16x32xf32>
    %31 = arith.addf %11, %30 : vector<16x32xf32>
    %32 = vector.extract_strided_slice %6 {offsets = [0, 4], sizes = [16, 4], strides = [1, 1]} : vector<16x32xbf16> to vector<16x4xbf16>
    %33 = vector.extract_strided_slice %8 {offsets = [0, 4], sizes = [16, 4], strides = [1, 1]} : vector<16x32xbf16> to vector<16x4xbf16>
    %cst_14 = arith.constant dense<0.000000e+00> : vector<16x16xf32>
    %34 = tpu.matmul %32, %33, %cst_14 {dimension_numbers = #tpu.dot_dimension_numbers<[1], [1], [0], [0], [0, 0, 1, 0], [], []>} : vector<16x4xbf16>, vector<16x4xbf16>, vector<16x16xf32> -> vector<16x16xf32>
    %cst_15 = arith.constant dense<0xFF800000> : vector<16xf32>
    %35 = vector.multi_reduction <maximumf>, %34, %cst_15 [1] : vector<16x16xf32> to vector<16xf32>
    %36 = vector.shape_cast %35 : vector<16xf32> to vector<16x1xf32>
    %37 = vector.broadcast %36 : vector<16x1xf32> to vector<16x16xf32>
    %38 = arith.subf %34, %37 : vector<16x16xf32>
    %39 = math.exp %38 : vector<16x16xf32>
    %cst_16 = arith.constant dense<0.000000e+00> : vector<16xf32>
    %40 = vector.multi_reduction <add>, %39, %cst_16 [1] : vector<16x16xf32> to vector<16xf32>
    %41 = vector.shape_cast %40 : vector<16xf32> to vector<16x1xf32>
    %42 = tpu.reciprocal %41 {approx = true} : vector<16x1xf32> -> vector<16x1xf32>
    %43 = vector.broadcast %42 : vector<16x1xf32> to vector<16x16xf32>
    %44 = arith.mulf %39, %43 : vector<16x16xf32>
    %45 = arith.truncf %44 : vector<16x16xf32> to vector<16x16xbf16>
    %46 = vector.extract_strided_slice %9 {offsets = [0, 4], sizes = [16, 4], strides = [1, 1]} : vector<16x32xbf16> to vector<16x4xbf16>
    %cst_17 = arith.constant dense<0.000000e+00> : vector<16x4xf32>
    %47 = tpu.matmul %45, %46, %cst_17 {dimension_numbers = #tpu.dot_dimension_numbers<[1], [0], [0], [1], [0, 0, 1, 1], [], []>} : vector<16x16xbf16>, vector<16x4xbf16>, vector<16x4xf32> -> vector<16x4xf32>
    %48 = arith.truncf %47 : vector<16x4xf32> to vector<16x4xbf16>
    %49 = vector.extract_strided_slice %10 {offsets = [4, 0], sizes = [4, 32], strides = [1, 1]} : vector<32x32xbf16> to vector<4x32xbf16>
    %cst_18 = arith.constant dense<0.000000e+00> : vector<16x32xf32>
    %50 = tpu.matmul %48, %49, %cst_18 {dimension_numbers = #tpu.dot_dimension_numbers<[1], [0], [0], [1], [0, 0, 1, 1], [], []>} : vector<16x4xbf16>, vector<4x32xbf16>, vector<16x32xf32> -> vector<16x32xf32>
    %51 = arith.addf %31, %50 : vector<16x32xf32>
    %52 = vector.extract_strided_slice %6 {offsets = [0, 8], sizes = [16, 4], strides = [1, 1]} : vector<16x32xbf16> to vector<16x4xbf16>
    %53 = vector.extract_strided_slice %8 {offsets = [0, 8], sizes = [16, 4], strides = [1, 1]} : vector<16x32xbf16> to vector<16x4xbf16>
    %cst_19 = arith.constant dense<0.000000e+00> : vector<16x16xf32>
    %54 = tpu.matmul %52, %53, %cst_19 {dimension_numbers = #tpu.dot_dimension_numbers<[1], [1], [0], [0], [0, 0, 1, 0], [], []>} : vector<16x4xbf16>, vector<16x4xbf16>, vector<16x16xf32> -> vector<16x16xf32>
    %cst_20 = arith.constant dense<0xFF800000> : vector<16xf32>
    %55 = vector.multi_reduction <maximumf>, %54, %cst_20 [1] : vector<16x16xf32> to vector<16xf32>
    %56 = vector.shape_cast %55 : vector<16xf32> to vector<16x1xf32>
    %57 = vector.broadcast %56 : vector<16x1xf32> to vector<16x16xf32>
    %58 = arith.subf %54, %57 : vector<16x16xf32>
    %59 = math.exp %58 : vector<16x16xf32>
    %cst_21 = arith.constant dense<0.000000e+00> : vector<16xf32>
    %60 = vector.multi_reduction <add>, %59, %cst_21 [1] : vector<16x16xf32> to vector<16xf32>
    %61 = vector.shape_cast %60 : vector<16xf32> to vector<16x1xf32>
    %62 = tpu.reciprocal %61 {approx = true} : vector<16x1xf32> -> vector<16x1xf32>
    %63 = vector.broadcast %62 : vector<16x1xf32> to vector<16x16xf32>
    %64 = arith.mulf %59, %63 : vector<16x16xf32>
    %65 = arith.truncf %64 : vector<16x16xf32> to vector<16x16xbf16>
    %66 = vector.extract_strided_slice %9 {offsets = [0, 8], sizes = [16, 4], strides = [1, 1]} : vector<16x32xbf16> to vector<16x4xbf16>
    %cst_22 = arith.constant dense<0.000000e+00> : vector<16x4xf32>
    %67 = tpu.matmul %65, %66, %cst_22 {dimension_numbers = #tpu.dot_dimension_numbers<[1], [0], [0], [1], [0, 0, 1, 1], [], []>} : vector<16x16xbf16>, vector<16x4xbf16>, vector<16x4xf32> -> vector<16x4xf32>
    %68 = arith.truncf %67 : vector<16x4xf32> to vector<16x4xbf16>
    %69 = vector.extract_strided_slice %10 {offsets = [8, 0], sizes = [4, 32], strides = [1, 1]} : vector<32x32xbf16> to vector<4x32xbf16>
    %cst_23 = arith.constant dense<0.000000e+00> : vector<16x32xf32>
    %70 = tpu.matmul %68, %69, %cst_23 {dimension_numbers = #tpu.dot_dimension_numbers<[1], [0], [0], [1], [0, 0, 1, 1], [], []>} : vector<16x4xbf16>, vector<4x32xbf16>, vector<16x32xf32> -> vector<16x32xf32>
    %71 = arith.addf %51, %70 : vector<16x32xf32>
    %72 = vector.extract_strided_slice %6 {offsets = [0, 12], sizes = [16, 4], strides = [1, 1]} : vector<16x32xbf16> to vector<16x4xbf16>
    %73 = vector.extract_strided_slice %8 {offsets = [0, 12], sizes = [16, 4], strides = [1, 1]} : vector<16x32xbf16> to vector<16x4xbf16>
    %cst_24 = arith.constant dense<0.000000e+00> : vector<16x16xf32>
    %74 = tpu.matmul %72, %73, %cst_24 {dimension_numbers = #tpu.dot_dimension_numbers<[1], [1], [0], [0], [0, 0, 1, 0], [], []>} : vector<16x4xbf16>, vector<16x4xbf16>, vector<16x16xf32> -> vector<16x16xf32>
    %cst_25 = arith.constant dense<0xFF800000> : vector<16xf32>
    %75 = vector.multi_reduction <maximumf>, %74, %cst_25 [1] : vector<16x16xf32> to vector<16xf32>
    %76 = vector.shape_cast %75 : vector<16xf32> to vector<16x1xf32>
    %77 = vector.broadcast %76 : vector<16x1xf32> to vector<16x16xf32>
    %78 = arith.subf %74, %77 : vector<16x16xf32>
    %79 = math.exp %78 : vector<16x16xf32>
    %cst_26 = arith.constant dense<0.000000e+00> : vector<16xf32>
    %80 = vector.multi_reduction <add>, %79, %cst_26 [1] : vector<16x16xf32> to vector<16xf32>
    %81 = vector.shape_cast %80 : vector<16xf32> to vector<16x1xf32>
    %82 = tpu.reciprocal %81 {approx = true} : vector<16x1xf32> -> vector<16x1xf32>
    %83 = vector.broadcast %82 : vector<16x1xf32> to vector<16x16xf32>
    %84 = arith.mulf %79, %83 : vector<16x16xf32>
    %85 = arith.truncf %84 : vector<16x16xf32> to vector<16x16xbf16>
    %86 = vector.extract_strided_slice %9 {offsets = [0, 12], sizes = [16, 4], strides = [1, 1]} : vector<16x32xbf16> to vector<16x4xbf16>
    %cst_27 = arith.constant dense<0.000000e+00> : vector<16x4xf32>
    %87 = tpu.matmul %85, %86, %cst_27 {dimension_numbers = #tpu.dot_dimension_numbers<[1], [0], [0], [1], [0, 0, 1, 1], [], []>} : vector<16x16xbf16>, vector<16x4xbf16>, vector<16x4xf32> -> vector<16x4xf32>
    %88 = arith.truncf %87 : vector<16x4xf32> to vector<16x4xbf16>
    %89 = vector.extract_strided_slice %10 {offsets = [12, 0], sizes = [4, 32], strides = [1, 1]} : vector<32x32xbf16> to vector<4x32xbf16>
    %cst_28 = arith.constant dense<0.000000e+00> : vector<16x32xf32>
    %90 = tpu.matmul %88, %89, %cst_28 {dimension_numbers = #tpu.dot_dimension_numbers<[1], [0], [0], [1], [0, 0, 1, 1], [], []>} : vector<16x4xbf16>, vector<4x32xbf16>, vector<16x32xf32> -> vector<16x32xf32>
    %91 = arith.addf %71, %90 : vector<16x32xf32>
    %92 = vector.extract_strided_slice %6 {offsets = [0, 16], sizes = [16, 4], strides = [1, 1]} : vector<16x32xbf16> to vector<16x4xbf16>
    %93 = vector.extract_strided_slice %8 {offsets = [0, 16], sizes = [16, 4], strides = [1, 1]} : vector<16x32xbf16> to vector<16x4xbf16>
    %cst_29 = arith.constant dense<0.000000e+00> : vector<16x16xf32>
    %94 = tpu.matmul %92, %93, %cst_29 {dimension_numbers = #tpu.dot_dimension_numbers<[1], [1], [0], [0], [0, 0, 1, 0], [], []>} : vector<16x4xbf16>, vector<16x4xbf16>, vector<16x16xf32> -> vector<16x16xf32>
    %cst_30 = arith.constant dense<0xFF800000> : vector<16xf32>
    %95 = vector.multi_reduction <maximumf>, %94, %cst_30 [1] : vector<16x16xf32> to vector<16xf32>
    %96 = vector.shape_cast %95 : vector<16xf32> to vector<16x1xf32>
    %97 = vector.broadcast %96 : vector<16x1xf32> to vector<16x16xf32>
    %98 = arith.subf %94, %97 : vector<16x16xf32>
    %99 = math.exp %98 : vector<16x16xf32>
    %cst_31 = arith.constant dense<0.000000e+00> : vector<16xf32>
    %100 = vector.multi_reduction <add>, %99, %cst_31 [1] : vector<16x16xf32> to vector<16xf32>
    %101 = vector.shape_cast %100 : vector<16xf32> to vector<16x1xf32>
    %102 = tpu.reciprocal %101 {approx = true} : vector<16x1xf32> -> vector<16x1xf32>
    %103 = vector.broadcast %102 : vector<16x1xf32> to vector<16x16xf32>
    %104 = arith.mulf %99, %103 : vector<16x16xf32>
    %105 = arith.truncf %104 : vector<16x16xf32> to vector<16x16xbf16>
    %106 = vector.extract_strided_slice %9 {offsets = [0, 16], sizes = [16, 4], strides = [1, 1]} : vector<16x32xbf16> to vector<16x4xbf16>
    %cst_32 = arith.constant dense<0.000000e+00> : vector<16x4xf32>
    %107 = tpu.matmul %105, %106, %cst_32 {dimension_numbers = #tpu.dot_dimension_numbers<[1], [0], [0], [1], [0, 0, 1, 1], [], []>} : vector<16x16xbf16>, vector<16x4xbf16>, vector<16x4xf32> -> vector<16x4xf32>
    %108 = arith.truncf %107 : vector<16x4xf32> to vector<16x4xbf16>
    %109 = vector.extract_strided_slice %10 {offsets = [16, 0], sizes = [4, 32], strides = [1, 1]} : vector<32x32xbf16> to vector<4x32xbf16>
    %cst_33 = arith.constant dense<0.000000e+00> : vector<16x32xf32>
    %110 = tpu.matmul %108, %109, %cst_33 {dimension_numbers = #tpu.dot_dimension_numbers<[1], [0], [0], [1], [0, 0, 1, 1], [], []>} : vector<16x4xbf16>, vector<4x32xbf16>, vector<16x32xf32> -> vector<16x32xf32>
    %111 = arith.addf %91, %110 : vector<16x32xf32>
    %112 = vector.extract_strided_slice %6 {offsets = [0, 20], sizes = [16, 4], strides = [1, 1]} : vector<16x32xbf16> to vector<16x4xbf16>
    %113 = vector.extract_strided_slice %8 {offsets = [0, 20], sizes = [16, 4], strides = [1, 1]} : vector<16x32xbf16> to vector<16x4xbf16>
    %cst_34 = arith.constant dense<0.000000e+00> : vector<16x16xf32>
    %114 = tpu.matmul %112, %113, %cst_34 {dimension_numbers = #tpu.dot_dimension_numbers<[1], [1], [0], [0], [0, 0, 1, 0], [], []>} : vector<16x4xbf16>, vector<16x4xbf16>, vector<16x16xf32> -> vector<16x16xf32>
    %cst_35 = arith.constant dense<0xFF800000> : vector<16xf32>
    %115 = vector.multi_reduction <maximumf>, %114, %cst_35 [1] : vector<16x16xf32> to vector<16xf32>
    %116 = vector.shape_cast %115 : vector<16xf32> to vector<16x1xf32>
    %117 = vector.broadcast %116 : vector<16x1xf32> to vector<16x16xf32>
    %118 = arith.subf %114, %117 : vector<16x16xf32>
    %119 = math.exp %118 : vector<16x16xf32>
    %cst_36 = arith.constant dense<0.000000e+00> : vector<16xf32>
    %120 = vector.multi_reduction <add>, %119, %cst_36 [1] : vector<16x16xf32> to vector<16xf32>
    %121 = vector.shape_cast %120 : vector<16xf32> to vector<16x1xf32>
    %122 = tpu.reciprocal %121 {approx = true} : vector<16x1xf32> -> vector<16x1xf32>
    %123 = vector.broadcast %122 : vector<16x1xf32> to vector<16x16xf32>
    %124 = arith.mulf %119, %123 : vector<16x16xf32>
    %125 = arith.truncf %124 : vector<16x16xf32> to vector<16x16xbf16>
    %126 = vector.extract_strided_slice %9 {offsets = [0, 20], sizes = [16, 4], strides = [1, 1]} : vector<16x32xbf16> to vector<16x4xbf16>
    %cst_37 = arith.constant dense<0.000000e+00> : vector<16x4xf32>
    %127 = tpu.matmul %125, %126, %cst_37 {dimension_numbers = #tpu.dot_dimension_numbers<[1], [0], [0], [1], [0, 0, 1, 1], [], []>} : vector<16x16xbf16>, vector<16x4xbf16>, vector<16x4xf32> -> vector<16x4xf32>
    %128 = arith.truncf %127 : vector<16x4xf32> to vector<16x4xbf16>
    %129 = vector.extract_strided_slice %10 {offsets = [20, 0], sizes = [4, 32], strides = [1, 1]} : vector<32x32xbf16> to vector<4x32xbf16>
    %cst_38 = arith.constant dense<0.000000e+00> : vector<16x32xf32>
    %130 = tpu.matmul %128, %129, %cst_38 {dimension_numbers = #tpu.dot_dimension_numbers<[1], [0], [0], [1], [0, 0, 1, 1], [], []>} : vector<16x4xbf16>, vector<4x32xbf16>, vector<16x32xf32> -> vector<16x32xf32>
    %131 = arith.addf %111, %130 : vector<16x32xf32>
    %132 = vector.extract_strided_slice %6 {offsets = [0, 24], sizes = [16, 4], strides = [1, 1]} : vector<16x32xbf16> to vector<16x4xbf16>
    %133 = vector.extract_strided_slice %8 {offsets = [0, 24], sizes = [16, 4], strides = [1, 1]} : vector<16x32xbf16> to vector<16x4xbf16>
    %cst_39 = arith.constant dense<0.000000e+00> : vector<16x16xf32>
    %134 = tpu.matmul %132, %133, %cst_39 {dimension_numbers = #tpu.dot_dimension_numbers<[1], [1], [0], [0], [0, 0, 1, 0], [], []>} : vector<16x4xbf16>, vector<16x4xbf16>, vector<16x16xf32> -> vector<16x16xf32>
    %cst_40 = arith.constant dense<0xFF800000> : vector<16xf32>
    %135 = vector.multi_reduction <maximumf>, %134, %cst_40 [1] : vector<16x16xf32> to vector<16xf32>
    %136 = vector.shape_cast %135 : vector<16xf32> to vector<16x1xf32>
    %137 = vector.broadcast %136 : vector<16x1xf32> to vector<16x16xf32>
    %138 = arith.subf %134, %137 : vector<16x16xf32>
    %139 = math.exp %138 : vector<16x16xf32>
    %cst_41 = arith.constant dense<0.000000e+00> : vector<16xf32>
    %140 = vector.multi_reduction <add>, %139, %cst_41 [1] : vector<16x16xf32> to vector<16xf32>
    %141 = vector.shape_cast %140 : vector<16xf32> to vector<16x1xf32>
    %142 = tpu.reciprocal %141 {approx = true} : vector<16x1xf32> -> vector<16x1xf32>
    %143 = vector.broadcast %142 : vector<16x1xf32> to vector<16x16xf32>
    %144 = arith.mulf %139, %143 : vector<16x16xf32>
    %145 = arith.truncf %144 : vector<16x16xf32> to vector<16x16xbf16>
    %146 = vector.extract_strided_slice %9 {offsets = [0, 24], sizes = [16, 4], strides = [1, 1]} : vector<16x32xbf16> to vector<16x4xbf16>
    %cst_42 = arith.constant dense<0.000000e+00> : vector<16x4xf32>
    %147 = tpu.matmul %145, %146, %cst_42 {dimension_numbers = #tpu.dot_dimension_numbers<[1], [0], [0], [1], [0, 0, 1, 1], [], []>} : vector<16x16xbf16>, vector<16x4xbf16>, vector<16x4xf32> -> vector<16x4xf32>
    %148 = arith.truncf %147 : vector<16x4xf32> to vector<16x4xbf16>
    %149 = vector.extract_strided_slice %10 {offsets = [24, 0], sizes = [4, 32], strides = [1, 1]} : vector<32x32xbf16> to vector<4x32xbf16>
    %cst_43 = arith.constant dense<0.000000e+00> : vector<16x32xf32>
    %150 = tpu.matmul %148, %149, %cst_43 {dimension_numbers = #tpu.dot_dimension_numbers<[1], [0], [0], [1], [0, 0, 1, 1], [], []>} : vector<16x4xbf16>, vector<4x32xbf16>, vector<16x32xf32> -> vector<16x32xf32>
    %151 = arith.addf %131, %150 : vector<16x32xf32>
    %152 = vector.extract_strided_slice %6 {offsets = [0, 28], sizes = [16, 4], strides = [1, 1]} : vector<16x32xbf16> to vector<16x4xbf16>
    %153 = vector.extract_strided_slice %8 {offsets = [0, 28], sizes = [16, 4], strides = [1, 1]} : vector<16x32xbf16> to vector<16x4xbf16>
    %cst_44 = arith.constant dense<0.000000e+00> : vector<16x16xf32>
    %154 = tpu.matmul %152, %153, %cst_44 {dimension_numbers = #tpu.dot_dimension_numbers<[1], [1], [0], [0], [0, 0, 1, 0], [], []>} : vector<16x4xbf16>, vector<16x4xbf16>, vector<16x16xf32> -> vector<16x16xf32>
    %cst_45 = arith.constant dense<0xFF800000> : vector<16xf32>
    %155 = vector.multi_reduction <maximumf>, %154, %cst_45 [1] : vector<16x16xf32> to vector<16xf32>
    %156 = vector.shape_cast %155 : vector<16xf32> to vector<16x1xf32>
    %157 = vector.broadcast %156 : vector<16x1xf32> to vector<16x16xf32>
    %158 = arith.subf %154, %157 : vector<16x16xf32>
    %159 = math.exp %158 : vector<16x16xf32>
    %cst_46 = arith.constant dense<0.000000e+00> : vector<16xf32>
    %160 = vector.multi_reduction <add>, %159, %cst_46 [1] : vector<16x16xf32> to vector<16xf32>
    %161 = vector.shape_cast %160 : vector<16xf32> to vector<16x1xf32>
    %162 = tpu.reciprocal %161 {approx = true} : vector<16x1xf32> -> vector<16x1xf32>
    %163 = vector.broadcast %162 : vector<16x1xf32> to vector<16x16xf32>
    %164 = arith.mulf %159, %163 : vector<16x16xf32>
    %165 = arith.truncf %164 : vector<16x16xf32> to vector<16x16xbf16>
    %166 = vector.extract_strided_slice %9 {offsets = [0, 28], sizes = [16, 4], strides = [1, 1]} : vector<16x32xbf16> to vector<16x4xbf16>
    %cst_47 = arith.constant dense<0.000000e+00> : vector<16x4xf32>
    %167 = tpu.matmul %165, %166, %cst_47 {dimension_numbers = #tpu.dot_dimension_numbers<[1], [0], [0], [1], [0, 0, 1, 1], [], []>} : vector<16x16xbf16>, vector<16x4xbf16>, vector<16x4xf32> -> vector<16x4xf32>
    %168 = arith.truncf %167 : vector<16x4xf32> to vector<16x4xbf16>
    %169 = vector.extract_strided_slice %10 {offsets = [28, 0], sizes = [4, 32], strides = [1, 1]} : vector<32x32xbf16> to vector<4x32xbf16>
    %cst_48 = arith.constant dense<0.000000e+00> : vector<16x32xf32>
    %170 = tpu.matmul %168, %169, %cst_48 {dimension_numbers = #tpu.dot_dimension_numbers<[1], [0], [0], [1], [0, 0, 1, 1], [], []>} : vector<16x4xbf16>, vector<4x32xbf16>, vector<16x32xf32> -> vector<16x32xf32>
    %171 = arith.addf %151, %170 : vector<16x32xf32>
    %c0_49 = arith.constant 0 : index
    %c0_50 = arith.constant 0 : index
    %172 = vector.load %arg7[%c0_49, %c0_50] : memref<1x32xf32, #tpu.memory_space<vmem>>, vector<1x32xf32>
    %173 = vector.broadcast %172 : vector<1x32xf32> to vector<16x32xf32>
    %174 = arith.addf %171, %173 : vector<16x32xf32>
    %c0_51 = arith.constant 0 : index
    %c0_52 = arith.constant 0 : index
    %c0_53 = arith.constant 0 : index
    %175 = vector.load %arg8[%c0_51, %c0_52, %c0_53] : memref<1x16x32xf32, #tpu.memory_space<vmem>>, vector<1x16x32xf32>
    %176 = vector.shape_cast %175 : vector<1x16x32xf32> to vector<16x32xf32>
    %177 = vector.shape_cast %174 : vector<16x32xf32> to vector<1x16x32xf32>
    tpu.vector_store %arg8[%c0_51, %c0_52, %c0_53], %177 {strides = array<i32>} : memref<1x16x32xf32, #tpu.memory_space<vmem>>, vector<1x16x32xf32>,
    return
  }
  func.func @transform_0(%arg0: i32, %arg1: i32) -> (i32, i32) {
    %c0_i32 = arith.constant 0 : i32
    %c0_i32_0 = arith.constant 0 : i32
    return %arg1, %c0_i32 : i32, i32
  }
  func.func @transform_1(%arg0: i32, %arg1: i32) -> (i32, i32, i32) {
    %c0_i32 = arith.constant 0 : i32
    %c0_i32_0 = arith.constant 0 : i32
    %c0_i32_1 = arith.constant 0 : i32
    return %arg0, %c0_i32, %c0_i32_0 : i32, i32, i32
  }
  func.func @transform_2(%arg0: i32, %arg1: i32) -> (i32, i32) {
    %c0_i32 = arith.constant 0 : i32
    %c0_i32_0 = arith.constant 0 : i32
    %c0_i32_1 = arith.constant 0 : i32
    return %c0_i32, %c0_i32_0 : i32, i32
  }
  func.func @transform_3(%arg0: i32, %arg1: i32) -> (i32, i32) {
    %c0_i32 = arith.constant 0 : i32
    %c0_i32_0 = arith.constant 0 : i32
    %c0_i32_1 = arith.constant 0 : i32
    return %c0_i32, %c0_i32_0 : i32, i32
  }
  func.func @transform_4(%arg0: i32, %arg1: i32) -> (i32, i32) {
    %c0_i32 = arith.constant 0 : i32
    %c0_i32_0 = arith.constant 0 : i32
    %c0_i32_1 = arith.constant 0 : i32
    return %c0_i32, %c0_i32_0 : i32, i32
  }
  func.func @transform_5(%arg0: i32, %arg1: i32) -> (i32, i32) {
    %c0_i32 = arith.constant 0 : i32
    %c0_i32_0 = arith.constant 0 : i32
    %c0_i32_1 = arith.constant 0 : i32
    return %c0_i32, %c0_i32_0 : i32, i32
  }
  func.func @transform_6(%arg0: i32, %arg1: i32) -> (i32, i32, i32) {
    %c0_i32 = arith.constant 0 : i32
    %c0_i32_0 = arith.constant 0 : i32
    return %arg0, %arg1, %c0_i32 : i32, i32, i32
  }
}

module attributes {stable_mosaic.version = 11 : i64} {
  func.func @_fused_attn_kernel(%arg0: i32, %arg1: i32, %arg2: memref<16x32xbf16, #tpu.memory_space<vmem>>, %arg3: memref<1x16x32xbf16, #tpu.memory_space<vmem>>, %arg4: memref<32x32xbf16, #tpu.memory_space<vmem>>, %arg5: memref<32x64xbf16, #tpu.memory_space<vmem>>, %arg6: memref<32x32xbf16, #tpu.memory_space<vmem>>, %arg7: memref<1x32xf32, #tpu.memory_space<vmem>>, %arg8: memref<1x16x32xf32, #tpu.memory_space<vmem>>, %arg9: memref<16x64xbf16, #tpu.memory_space<vmem>>) attributes {dimension_semantics = [#tpu.dimension_semantics<parallel>, #tpu.dimension_semantics<arbitrary>], iteration_bounds = array<i64: 2, 1>, scalar_prefetch = 0 : i64, scratch_operands = 1 : i64, tpu.core_type = #tpu.core_type<tc>, window_params = [{transform_indices = @transform_0, window_bounds = array<i64: 16, 32>}, {transform_indices = @transform_1, window_bounds = array<i64: 1, 16, 32>}, {pipeline_mode = #tpu.pipeline_mode<synchronous>, transform_indices = @transform_2, window_bounds = array<i64: 32, 32>}, {pipeline_mode = #tpu.pipeline_mode<synchronous>, transform_indices = @transform_3, window_bounds = array<i64: 32, 64>}, {pipeline_mode = #tpu.pipeline_mode<synchronous>, transform_indices = @transform_4, window_bounds = array<i64: 32, 32>}, {pipeline_mode = #tpu.pipeline_mode<synchronous>, transform_indices = @transform_5, window_bounds = array<i64: 1, 32>}, {transform_indices = @transform_6, window_bounds = array<i64: 1, 16, 32>}]} {
    %c0_i32 = arith.constant 0 : i32
    %0 = arith.cmpi eq, %arg1, %c0_i32 : i32
    %1 = arith.extui %0 : i1 to i32
    %c0_i32_0 = arith.constant 0 : i32
    %2 = arith.cmpi ne, %1, %c0_i32_0 : i32
    scf.if %2 {
      %c0_54 = arith.constant 0 : index
      %c0_55 = arith.constant 0 : index
      %c0_56 = arith.constant 0 : index
      %178 = vector.load %arg3[%c0_54, %c0_55, %c0_56] : memref<1x16x32xbf16, #tpu.memory_space<vmem>>, vector<1x16x32xbf16>
      %179 = vector.shape_cast %178 : vector<1x16x32xbf16> to vector<16x32xbf16>
      %c0_57 = arith.constant 0 : index
      %c0_58 = arith.constant 0 : index
      %180 = vector.load %arg5[%c0_57, %c0_58] : memref<32x64xbf16, #tpu.memory_space<vmem>>, vector<32x64xbf16>
      %cst_59 = arith.constant dense<0.000000e+00> : vector<16x64xf32>
      %181 = tpu.matmul %179, %180, %cst_59 {dimension_numbers = #tpu.dot_dimension_numbers<[1], [0], [0], [1], [0, 0, 1, 1], [], []>} : vector<16x32xbf16>, vector<32x64xbf16>, vector<16x64xf32> -> vector<16x64xf32>
      %182 = arith.truncf %181 : vector<16x64xf32> to vector<16x64xbf16>
      %c0_60 = arith.constant 0 : index
      %c0_61 = arith.constant 0 : index
      %183 = vector.load %arg9[%c0_60, %c0_61] : memref<16x64xbf16, #tpu.memory_space<vmem>>, vector<16x64xbf16>
      tpu.vector_store %arg9[%c0_60, %c0_61], %182 {strides = array<i32>} : memref<16x64xbf16, #tpu.memory_space<vmem>>, vector<16x64xbf16>,
    } else {
    }
    %c0 = arith.constant 0 : index
    %c0_1 = arith.constant 0 : index
    %3 = vector.load %arg2[%c0, %c0_1] : memref<16x32xbf16, #tpu.memory_space<vmem>>, vector<16x32xbf16>
    %c0_2 = arith.constant 0 : index
    %c0_3 = arith.constant 0 : index
    %4 = vector.load %arg4[%c0_2, %c0_3] : memref<32x32xbf16, #tpu.memory_space<vmem>>, vector<32x32xbf16>
    %cst = arith.constant dense<0.000000e+00> : vector<16x32xf32>
    %5 = tpu.matmul %3, %4, %cst {dimension_numbers = #tpu.dot_dimension_numbers<[1], [0], [0], [1], [0, 0, 1, 1], [], []>} : vector<16x32xbf16>, vector<32x32xbf16>, vector<16x32xf32> -> vector<16x32xf32>
    %6 = arith.truncf %5 : vector<16x32xf32> to vector<16x32xbf16>
    %c0_4 = arith.constant 0 : index
    %c0_5 = arith.constant 0 : index
    %7 = vector.load %arg9[%c0_4, %c0_5] : memref<16x64xbf16, #tpu.memory_space<vmem>>, vector<16x64xbf16>
    %8 = vector.extract_strided_slice %7 {offsets = [0, 0], sizes = [16, 32], strides = [1, 1]} : vector<16x64xbf16> to vector<16x32xbf16>
    %9 = vector.extract_strided_slice %7 {offsets = [0, 32], sizes = [16, 32], strides = [1, 1]} : vector<16x64xbf16> to vector<16x32xbf16>
    %c0_6 = arith.constant 0 : index
    %c0_7 = arith.constant 0 : index
    %10 = vector.load %arg6[%c0_6, %c0_7] : memref<32x32xbf16, #tpu.memory_space<vmem>>, vector<32x32xbf16>
    %cst_8 = arith.constant 0.000000e+00 : f32
    %11 = vector.broadcast %cst_8 : f32 to vector<16x32xf32>
    %12 = vector.extract_strided_slice %6 {offsets = [0, 0], sizes = [16, 4], strides = [1, 1]} : vector<16x32xbf16> to vector<16x4xbf16>
    %13 = vector.extract_strided_slice %8 {offsets = [0, 0], sizes = [16, 4], strides = [1, 1]} : vector<16x32xbf16> to vector<16x4xbf16>
    %cst_9 = arith.constant dense<0.000000e+00> : vector<16x16xf32>
    %14 = tpu.matmul %12, %13, %cst_9 {dimension_numbers = #tpu.dot_dimension_numbers<[1], [1], [0], [0], [0, 0, 1, 0], [], []>} : vector<16x4xbf16>, vector<16x4xbf16>, vector<16x16xf32> -> vector<16x16xf32>
    %cst_10 = arith.constant dense<0xFF800000> : vector<16xf32>
    %15 = vector.multi_reduction <maximumf>, %14, %cst_10 [1] : vector<16x16xf32> to vector<16xf32>
    %16 = vector.shape_cast %15 : vector<16xf32> to vector<16x1xf32>
    %17 = vector.broadcast %16 : vector<16x1xf32> to vector<16x16xf32>
    %18 = arith.subf %14, %17 : vector<16x16xf32>
    %19 = math.exp %18 : vector<16x16xf32>
    %cst_11 = arith.constant dense<0.000000e+00> : vector<16xf32>
    %20 = vector.multi_reduction <add>, %19, %cst_11 [1] : vector<16x16xf32> to vector<16xf32>
    %21 = vector.shape_cast %20 : vector<16xf32> to vector<16x1xf32>
    %22 = tpu.reciprocal %21 {approx = true} : vector<16x1xf32> -> vector<16x1xf32>
    %23 = vector.broadcast %22 : vector<16x1xf32> to vector<16x16xf32>
    %24 = arith.mulf %19, %23 : vector<16x16xf32>
    %25 = arith.truncf %24 : vector<16x16xf32> to vector<16x16xbf16>
    %26 = vector.extract_strided_slice %9 {offsets = [0, 0], sizes = [16, 4], strides = [1, 1]} : vector<16x32xbf16> to vector<16x4xbf16>
    %cst_12 = arith.constant dense<0.000000e+00> : vector<16x4xf32>
    %27 = tpu.matmul %25, %26, %cst_12 {dimension_numbers = #tpu.dot_dimension_numbers<[1], [0], [0], [1], [0, 0, 1, 1], [], []>} : vector<16x16xbf16>, vector<16x4xbf16>, vector<16x4xf32> -> vector<16x4xf32>
    %28 = arith.truncf %27 : vector<16x4xf32> to vector<16x4xbf16>
    %29 = vector.extract_strided_slice %10 {offsets = [0, 0], sizes = [4, 32], strides = [1, 1]} : vector<32x32xbf16> to vector<4x32xbf16>
    %cst_13 = arith.constant dense<0.000000e+00> : vector<16x32xf32>
    %30 = tpu.matmul %28, %29, %cst_13 {dimension_numbers = #tpu.dot_dimension_numbers<[1], [0], [0], [1], [0, 0, 1, 1], [], []>} : vector<16x4xbf16>, vector<4x32xbf16>, vector<16x32xf32> -> vector<16x32xf32>
    %31 = arith.addf %11, %30 : vector<16x32xf32>
    %32 = vector.extract_strided_slice %6 {offsets = [0, 4], sizes = [16, 4], strides = [1, 1]} : vector<16x32xbf16> to vector<16x4xbf16>
    %33 = vector.extract_strided_slice %8 {offsets = [0, 4], sizes = [16, 4], strides = [1, 1]} : vector<16x32xbf16> to vector<16x4xbf16>
    %cst_14 = arith.constant dense<0.000000e+00> : vector<16x16xf32>
    %34 = tpu.matmul %32, %33, %cst_14 {dimension_numbers = #tpu.dot_dimension_numbers<[1], [1], [0], [0], [0, 0, 1, 0], [], []>} : vector<16x4xbf16>, vector<16x4xbf16>, vector<16x16xf32> -> vector<16x16xf32>
    %cst_15 = arith.constant dense<0xFF800000> : vector<16xf32>
    %35 = vector.multi_reduction <maximumf>, %34, %cst_15 [1] : vector<16x16xf32> to vector<16xf32>
    %36 = vector.shape_cast %35 : vector<16xf32> to vector<16x1xf32>
    %37 = vector.broadcast %36 : vector<16x1xf32> to vector<16x16xf32>
    %38 = arith.subf %34, %37 : vector<16x16xf32>
    %39 = math.exp %38 : vector<16x16xf32>
    %cst_16 = arith.constant dense<0.000000e+00> : vector<16xf32>
    %40 = vector.multi_reduction <add>, %39, %cst_16 [1] : vector<16x16xf32> to vector<16xf32>
    %41 = vector.shape_cast %40 : vector<16xf32> to vector<16x1xf32>
    %42 = tpu.reciprocal %41 {approx = true} : vector<16x1xf32> -> vector<16x1xf32>
    %43 = vector.broadcast %42 : vector<16x1xf32> to vector<16x16xf32>
    %44 = arith.mulf %39, %43 : vector<16x16xf32>
    %45 = arith.truncf %44 : vector<16x16xf32> to vector<16x16xbf16>
    %46 = vector.extract_strided_slice %9 {offsets = [0, 4], sizes = [16, 4], strides = [1, 1]} : vector<16x32xbf16> to vector<16x4xbf16>
    %cst_17 = arith.constant dense<0.000000e+00> : vector<16x4xf32>
    %47 = tpu.matmul %45, %46, %cst_17 {dimension_numbers = #tpu.dot_dimension_numbers<[1], [0], [0], [1], [0, 0, 1, 1], [], []>} : vector<16x16xbf16>, vector<16x4xbf16>, vector<16x4xf32> -> vector<16x4xf32>
    %48 = arith.truncf %47 : vector<16x4xf32> to vector<16x4xbf16>
    %49 = vector.extract_strided_slice %10 {offsets = [4, 0], sizes = [4, 32], strides = [1, 1]} : vector<32x32xbf16> to vector<4x32xbf16>
    %cst_18 = arith.constant dense<0.000000e+00> : vector<16x32xf32>
    %50 = tpu.matmul %48, %49, %cst_18 {dimension_numbers = #tpu.dot_dimension_numbers<[1], [0], [0], [1], [0, 0, 1, 1], [], []>} : vector<16x4xbf16>, vector<4x32xbf16>, vector<16x32xf32> -> vector<16x32xf32>
    %51 = arith.addf %31, %50 : vector<16x32xf32>
    %52 = vector.extract_strided_slice %6 {offsets = [0, 8], sizes = [16, 4], strides = [1, 1]} : vector<16x32xbf16> to vector<16x4xbf16>
    %53 = vector.extract_strided_slice %8 {offsets = [0, 8], sizes = [16, 4], strides = [1, 1]} : vector<16x32xbf16> to vector<16x4xbf16>
    %cst_19 = arith.constant dense<0.000000e+00> : vector<16x16xf32>
    %54 = tpu.matmul %52, %53, %cst_19 {dimension_numbers = #tpu.dot_dimension_numbers<[1], [1], [0], [0], [0, 0, 1, 0], [], []>} : vector<16x4xbf16>, vector<16x4xbf16>, vector<16x16xf32> -> vector<16x16xf32>
    %cst_20 = arith.constant dense<0xFF800000> : vector<16xf32>
    %55 = vector.multi_reduction <maximumf>, %54, %cst_20 [1] : vector<16x16xf32> to vector<16xf32>
    %56 = vector.shape_cast %55 : vector<16xf32> to vector<16x1xf32>
    %57 = vector.broadcast %56 : vector<16x1xf32> to vector<16x16xf32>
    %58 = arith.subf %54, %57 : vector<16x16xf32>
    %59 = math.exp %58 : vector<16x16xf32>
    %cst_21 = arith.constant dense<0.000000e+00> : vector<16xf32>
    %60 = vector.multi_reduction <add>, %59, %cst_21 [1] : vector<16x16xf32> to vector<16xf32>
    %61 = vector.shape_cast %60 : vector<16xf32> to vector<16x1xf32>
    %62 = tpu.reciprocal %61 {approx = true} : vector<16x1xf32> -> vector<16x1xf32>
    %63 = vector.broadcast %62 : vector<16x1xf32> to vector<16x16xf32>
    %64 = arith.mulf %59, %63 : vector<16x16xf32>
    %65 = arith.truncf %64 : vector<16x16xf32> to vector<16x16xbf16>
    %66 = vector.extract_strided_slice %9 {offsets = [0, 8], sizes = [16, 4], strides = [1, 1]} : vector<16x32xbf16> to vector<16x4xbf16>
    %cst_22 = arith.constant dense<0.000000e+00> : vector<16x4xf32>
    %67 = tpu.matmul %65, %66, %cst_22 {dimension_numbers = #tpu.dot_dimension_numbers<[1], [0], [0], [1], [0, 0, 1, 1], [], []>} : vector<16x16xbf16>, vector<16x4xbf16>, vector<16x4xf32> -> vector<16x4xf32>
    %68 = arith.truncf %67 : vector<16x4xf32> to vector<16x4xbf16>
    %69 = vector.extract_strided_slice %10 {offsets = [8, 0], sizes = [4, 32], strides = [1, 1]} : vector<32x32xbf16> to vector<4x32xbf16>
    %cst_23 = arith.constant dense<0.000000e+00> : vector<16x32xf32>
    %70 = tpu.matmul %68, %69, %cst_23 {dimension_numbers = #tpu.dot_dimension_numbers<[1], [0], [0], [1], [0, 0, 1, 1], [], []>} : vector<16x4xbf16>, vector<4x32xbf16>, vector<16x32xf32> -> vector<16x32xf32>
    %71 = arith.addf %51, %70 : vector<16x32xf32>
    %72 = vector.extract_strided_slice %6 {offsets = [0, 12], sizes = [16, 4], strides = [1, 1]} : vector<16x32xbf16> to vector<16x4xbf16>
    %73 = vector.extract_strided_slice %8 {offsets = [0, 12], sizes = [16, 4], strides = [1, 1]} : vector<16x32xbf16> to vector<16x4xbf16>
    %cst_24 = arith.constant dense<0.000000e+00> : vector<16x16xf32>
    %74 = tpu.matmul %72, %73, %cst_24 {dimension_numbers = #tpu.dot_dimension_numbers<[1], [1], [0], [0], [0, 0, 1, 0], [], []>} : vector<16x4xbf16>, vector<16x4xbf16>, vector<16x16xf32> -> vector<16x16xf32>
    %cst_25 = arith.constant dense<0xFF800000> : vector<16xf32>
    %75 = vector.multi_reduction <maximumf>, %74, %cst_25 [1] : vector<16x16xf32> to vector<16xf32>
    %76 = vector.shape_cast %75 : vector<16xf32> to vector<16x1xf32>
    %77 = vector.broadcast %76 : vector<16x1xf32> to vector<16x16xf32>
    %78 = arith.subf %74, %77 : vector<16x16xf32>
    %79 = math.exp %78 : vector<16x16xf32>
    %cst_26 = arith.constant dense<0.000000e+00> : vector<16xf32>
    %80 = vector.multi_reduction <add>, %79, %cst_26 [1] : vector<16x16xf32> to vector<16xf32>
    %81 = vector.shape_cast %80 : vector<16xf32> to vector<16x1xf32>
    %82 = tpu.reciprocal %81 {approx = true} : vector<16x1xf32> -> vector<16x1xf32>
    %83 = vector.broadcast %82 : vector<16x1xf32> to vector<16x16xf32>
    %84 = arith.mulf %79, %83 : vector<16x16xf32>
    %85 = arith.truncf %84 : vector<16x16xf32> to vector<16x16xbf16>
    %86 = vector.extract_strided_slice %9 {offsets = [0, 12], sizes = [16, 4], strides = [1, 1]} : vector<16x32xbf16> to vector<16x4xbf16>
    %cst_27 = arith.constant dense<0.000000e+00> : vector<16x4xf32>
    %87 = tpu.matmul %85, %86, %cst_27 {dimension_numbers = #tpu.dot_dimension_numbers<[1], [0], [0], [1], [0, 0, 1, 1], [], []>} : vector<16x16xbf16>, vector<16x4xbf16>, vector<16x4xf32> -> vector<16x4xf32>
    %88 = arith.truncf %87 : vector<16x4xf32> to vector<16x4xbf16>
    %89 = vector.extract_strided_slice %10 {offsets = [12, 0], sizes = [4, 32], strides = [1, 1]} : vector<32x32xbf16> to vector<4x32xbf16>
    %cst_28 = arith.constant dense<0.000000e+00> : vector<16x32xf32>
    %90 = tpu.matmul %88, %89, %cst_28 {dimension_numbers = #tpu.dot_dimension_numbers<[1], [0], [0], [1], [0, 0, 1, 1], [], []>} : vector<16x4xbf16>, vector<4x32xbf16>, vector<16x32xf32> -> vector<16x32xf32>
    %91 = arith.addf %71, %90 : vector<16x32xf32>
    %92 = vector.extract_strided_slice %6 {offsets = [0, 16], sizes = [16, 4], strides = [1, 1]} : vector<16x32xbf16> to vector<16x4xbf16>
    %93 = vector.extract_strided_slice %8 {offsets = [0, 16], sizes = [16, 4], strides = [1, 1]} : vector<16x32xbf16> to vector<16x4xbf16>
    %cst_29 = arith.constant dense<0.000000e+00> : vector<16x16xf32>
    %94 = tpu.matmul %92, %93, %cst_29 {dimension_numbers = #tpu.dot_dimension_numbers<[1], [1], [0], [0], [0, 0, 1, 0], [], []>} : vector<16x4xbf16>, vector<16x4xbf16>, vector<16x16xf32> -> vector<16x16xf32>
    %cst_30 = arith.constant dense<0xFF800000> : vector<16xf32>
    %95 = vector.multi_reduction <maximumf>, %94, %cst_30 [1] : vector<16x16xf32> to vector<16xf32>
    %96 = vector.shape_cast %95 : vector<16xf32> to vector<16x1xf32>
    %97 = vector.broadcast %96 : vector<16x1xf32> to vector<16x16xf32>
    %98 = arith.subf %94, %97 : vector<16x16xf32>
    %99 = math.exp %98 : vector<16x16xf32>
    %cst_31 = arith.constant dense<0.000000e+00> : vector<16xf32>
    %100 = vector.multi_reduction <add>, %99, %cst_31 [1] : vector<16x16xf32> to vector<16xf32>
    %101 = vector.shape_cast %100 : vector<16xf32> to vector<16x1xf32>
    %102 = tpu.reciprocal %101 {approx = true} : vector<16x1xf32> -> vector<16x1xf32>
    %103 = vector.broadcast %102 : vector<16x1xf32> to vector<16x16xf32>
    %104 = arith.mulf %99, %103 : vector<16x16xf32>
    %105 = arith.truncf %104 : vector<16x16xf32> to vector<16x16xbf16>
    %106 = vector.extract_strided_slice %9 {offsets = [0, 16], sizes = [16, 4], strides = [1, 1]} : vector<16x32xbf16> to vector<16x4xbf16>
    %cst_32 = arith.constant dense<0.000000e+00> : vector<16x4xf32>
    %107 = tpu.matmul %105, %106, %cst_32 {dimension_numbers = #tpu.dot_dimension_numbers<[1], [0], [0], [1], [0, 0, 1, 1], [], []>} : vector<16x16xbf16>, vector<16x4xbf16>, vector<16x4xf32> -> vector<16x4xf32>
    %108 = arith.truncf %107 : vector<16x4xf32> to vector<16x4xbf16>
    %109 = vector.extract_strided_slice %10 {offsets = [16, 0], sizes = [4, 32], strides = [1, 1]} : vector<32x32xbf16> to vector<4x32xbf16>
    %cst_33 = arith.constant dense<0.000000e+00> : vector<16x32xf32>
    %110 = tpu.matmul %108, %109, %cst_33 {dimension_numbers = #tpu.dot_dimension_numbers<[1], [0], [0], [1], [0, 0, 1, 1], [], []>} : vector<16x4xbf16>, vector<4x32xbf16>, vector<16x32xf32> -> vector<16x32xf32>
    %111 = arith.addf %91, %110 : vector<16x32xf32>
    %112 = vector.extract_strided_slice %6 {offsets = [0, 20], sizes = [16, 4], strides = [1, 1]} : vector<16x32xbf16> to vector<16x4xbf16>
    %113 = vector.extract_strided_slice %8 {offsets = [0, 20], sizes = [16, 4], strides = [1, 1]} : vector<16x32xbf16> to vector<16x4xbf16>
    %cst_34 = arith.constant dense<0.000000e+00> : vector<16x16xf32>
    %114 = tpu.matmul %112, %113, %cst_34 {dimension_numbers = #tpu.dot_dimension_numbers<[1], [1], [0], [0], [0, 0, 1, 0], [], []>} : vector<16x4xbf16>, vector<16x4xbf16>, vector<16x16xf32> -> vector<16x16xf32>
    %cst_35 = arith.constant dense<0xFF800000> : vector<16xf32>
    %115 = vector.multi_reduction <maximumf>, %114, %cst_35 [1] : vector<16x16xf32> to vector<16xf32>
    %116 = vector.shape_cast %115 : vector<16xf32> to vector<16x1xf32>
    %117 = vector.broadcast %116 : vector<16x1xf32> to vector<16x16xf32>
    %118 = arith.subf %114, %117 : vector<16x16xf32>
    %119 = math.exp %118 : vector<16x16xf32>
    %cst_36 = arith.constant dense<0.000000e+00> : vector<16xf32>
    %120 = vector.multi_reduction <add>, %119, %cst_36 [1] : vector<16x16xf32> to vector<16xf32>
    %121 = vector.shape_cast %120 : vector<16xf32> to vector<16x1xf32>
    %122 = tpu.reciprocal %121 {approx = true} : vector<16x1xf32> -> vector<16x1xf32>
    %123 = vector.broadcast %122 : vector<16x1xf32> to vector<16x16xf32>
    %124 = arith.mulf %119, %123 : vector<16x16xf32>
    %125 = arith.truncf %124 : vector<16x16xf32> to vector<16x16xbf16>
    %126 = vector.extract_strided_slice %9 {offsets = [0, 20], sizes = [16, 4], strides = [1, 1]} : vector<16x32xbf16> to vector<16x4xbf16>
    %cst_37 = arith.constant dense<0.000000e+00> : vector<16x4xf32>
    %127 = tpu.matmul %125, %126, %cst_37 {dimension_numbers = #tpu.dot_dimension_numbers<[1], [0], [0], [1], [0, 0, 1, 1], [], []>} : vector<16x16xbf16>, vector<16x4xbf16>, vector<16x4xf32> -> vector<16x4xf32>
    %128 = arith.truncf %127 : vector<16x4xf32> to vector<16x4xbf16>
    %129 = vector.extract_strided_slice %10 {offsets = [20, 0], sizes = [4, 32], strides = [1, 1]} : vector<32x32xbf16> to vector<4x32xbf16>
    %cst_38 = arith.constant dense<0.000000e+00> : vector<16x32xf32>
    %130 = tpu.matmul %128, %129, %cst_38 {dimension_numbers = #tpu.dot_dimension_numbers<[1], [0], [0], [1], [0, 0, 1, 1], [], []>} : vector<16x4xbf16>, vector<4x32xbf16>, vector<16x32xf32> -> vector<16x32xf32>
    %131 = arith.addf %111, %130 : vector<16x32xf32>
    %132 = vector.extract_strided_slice %6 {offsets = [0, 24], sizes = [16, 4], strides = [1, 1]} : vector<16x32xbf16> to vector<16x4xbf16>
    %133 = vector.extract_strided_slice %8 {offsets = [0, 24], sizes = [16, 4], strides = [1, 1]} : vector<16x32xbf16> to vector<16x4xbf16>
    %cst_39 = arith.constant dense<0.000000e+00> : vector<16x16xf32>
    %134 = tpu.matmul %132, %133, %cst_39 {dimension_numbers = #tpu.dot_dimension_numbers<[1], [1], [0], [0], [0, 0, 1, 0], [], []>} : vector<16x4xbf16>, vector<16x4xbf16>, vector<16x16xf32> -> vector<16x16xf32>
    %cst_40 = arith.constant dense<0xFF800000> : vector<16xf32>
    %135 = vector.multi_reduction <maximumf>, %134, %cst_40 [1] : vector<16x16xf32> to vector<16xf32>
    %136 = vector.shape_cast %135 : vector<16xf32> to vector<16x1xf32>
    %137 = vector.broadcast %136 : vector<16x1xf32> to vector<16x16xf32>
    %138 = arith.subf %134, %137 : vector<16x16xf32>
    %139 = math.exp %138 : vector<16x16xf32>
    %cst_41 = arith.constant dense<0.000000e+00> : vector<16xf32>
    %140 = vector.multi_reduction <add>, %139, %cst_41 [1] : vector<16x16xf32> to vector<16xf32>
    %141 = vector.shape_cast %140 : vector<16xf32> to vector<16x1xf32>
    %142 = tpu.reciprocal %141 {approx = true} : vector<16x1xf32> -> vector<16x1xf32>
    %143 = vector.broadcast %142 : vector<16x1xf32> to vector<16x16xf32>
    %144 = arith.mulf %139, %143 : vector<16x16xf32>
    %145 = arith.truncf %144 : vector<16x16xf32> to vector<16x16xbf16>
    %146 = vector.extract_strided_slice %9 {offsets = [0, 24], sizes = [16, 4], strides = [1, 1]} : vector<16x32xbf16> to vector<16x4xbf16>
    %cst_42 = arith.constant dense<0.000000e+00> : vector<16x4xf32>
    %147 = tpu.matmul %145, %146, %cst_42 {dimension_numbers = #tpu.dot_dimension_numbers<[1], [0], [0], [1], [0, 0, 1, 1], [], []>} : vector<16x16xbf16>, vector<16x4xbf16>, vector<16x4xf32> -> vector<16x4xf32>
    %148 = arith.truncf %147 : vector<16x4xf32> to vector<16x4xbf16>
    %149 = vector.extract_strided_slice %10 {offsets = [24, 0], sizes = [4, 32], strides = [1, 1]} : vector<32x32xbf16> to vector<4x32xbf16>
    %cst_43 = arith.constant dense<0.000000e+00> : vector<16x32xf32>
    %150 = tpu.matmul %148, %149, %cst_43 {dimension_numbers = #tpu.dot_dimension_numbers<[1], [0], [0], [1], [0, 0, 1, 1], [], []>} : vector<16x4xbf16>, vector<4x32xbf16>, vector<16x32xf32> -> vector<16x32xf32>
    %151 = arith.addf %131, %150 : vector<16x32xf32>
    %152 = vector.extract_strided_slice %6 {offsets = [0, 28], sizes = [16, 4], strides = [1, 1]} : vector<16x32xbf16> to vector<16x4xbf16>
    %153 = vector.extract_strided_slice %8 {offsets = [0, 28], sizes = [16, 4], strides = [1, 1]} : vector<16x32xbf16> to vector<16x4xbf16>
    %cst_44 = arith.constant dense<0.000000e+00> : vector<16x16xf32>
    %154 = tpu.matmul %152, %153, %cst_44 {dimension_numbers = #tpu.dot_dimension_numbers<[1], [1], [0], [0], [0, 0, 1, 0], [], []>} : vector<16x4xbf16>, vector<16x4xbf16>, vector<16x16xf32> -> vector<16x16xf32>
    %cst_45 = arith.constant dense<0xFF800000> : vector<16xf32>
    %155 = vector.multi_reduction <maximumf>, %154, %cst_45 [1] : vector<16x16xf32> to vector<16xf32>
    %156 = vector.shape_cast %155 : vector<16xf32> to vector<16x1xf32>
    %157 = vector.broadcast %156 : vector<16x1xf32> to vector<16x16xf32>
    %158 = arith.subf %154, %157 : vector<16x16xf32>
    %159 = math.exp %158 : vector<16x16xf32>
    %cst_46 = arith.constant dense<0.000000e+00> : vector<16xf32>
    %160 = vector.multi_reduction <add>, %159, %cst_46 [1] : vector<16x16xf32> to vector<16xf32>
    %161 = vector.shape_cast %160 : vector<16xf32> to vector<16x1xf32>
    %162 = tpu.reciprocal %161 {approx = true} : vector<16x1xf32> -> vector<16x1xf32>
    %163 = vector.broadcast %162 : vector<16x1xf32> to vector<16x16xf32>
    %164 = arith.mulf %159, %163 : vector<16x16xf32>
    %165 = arith.truncf %164 : vector<16x16xf32> to vector<16x16xbf16>
    %166 = vector.extract_strided_slice %9 {offsets = [0, 28], sizes = [16, 4], strides = [1, 1]} : vector<16x32xbf16> to vector<16x4xbf16>
    %cst_47 = arith.constant dense<0.000000e+00> : vector<16x4xf32>
    %167 = tpu.matmul %165, %166, %cst_47 {dimension_numbers = #tpu.dot_dimension_numbers<[1], [0], [0], [1], [0, 0, 1, 1], [], []>} : vector<16x16xbf16>, vector<16x4xbf16>, vector<16x4xf32> -> vector<16x4xf32>
    %168 = arith.truncf %167 : vector<16x4xf32> to vector<16x4xbf16>
    %169 = vector.extract_strided_slice %10 {offsets = [28, 0], sizes = [4, 32], strides = [1, 1]} : vector<32x32xbf16> to vector<4x32xbf16>
    %cst_48 = arith.constant dense<0.000000e+00> : vector<16x32xf32>
    %170 = tpu.matmul %168, %169, %cst_48 {dimension_numbers = #tpu.dot_dimension_numbers<[1], [0], [0], [1], [0, 0, 1, 1], [], []>} : vector<16x4xbf16>, vector<4x32xbf16>, vector<16x32xf32> -> vector<16x32xf32>
    %171 = arith.addf %151, %170 : vector<16x32xf32>
    %c0_49 = arith.constant 0 : index
    %c0_50 = arith.constant 0 : index
    %172 = vector.load %arg7[%c0_49, %c0_50] : memref<1x32xf32, #tpu.memory_space<vmem>>, vector<1x32xf32>
    %173 = vector.broadcast %172 : vector<1x32xf32> to vector<16x32xf32>
    %174 = arith.addf %171, %173 : vector<16x32xf32>
    %c0_51 = arith.constant 0 : index
    %c0_52 = arith.constant 0 : index
    %c0_53 = arith.constant 0 : index
    %175 = vector.load %arg8[%c0_51, %c0_52, %c0_53] : memref<1x16x32xf32, #tpu.memory_space<vmem>>, vector<1x16x32xf32>
    %176 = vector.shape_cast %175 : vector<1x16x32xf32> to vector<16x32xf32>
    %177 = vector.shape_cast %174 : vector<16x32xf32> to vector<1x16x32xf32>
    tpu.vector_store %arg8[%c0_51, %c0_52, %c0_53], %177 {strides = array<i32>} : memref<1x16x32xf32, #tpu.memory_space<vmem>>, vector<1x16x32xf32>,
    return
  }
  func.func @transform_0(%arg0: i32, %arg1: i32) -> (i32, i32) {
    %c0_i32 = arith.constant 0 : i32
    %c0_i32_0 = arith.constant 0 : i32
    return %arg1, %c0_i32 : i32, i32
  }
  func.func @transform_1(%arg0: i32, %arg1: i32) -> (i32, i32, i32) {
    %c0_i32 = arith.constant 0 : i32
    %c0_i32_0 = arith.constant 0 : i32
    %c0_i32_1 = arith.constant 0 : i32
    return %arg0, %c0_i32, %c0_i32_0 : i32, i32, i32
  }
  func.func @transform_2(%arg0: i32, %arg1: i32) -> (i32, i32) {
    %c0_i32 = arith.constant 0 : i32
    %c0_i32_0 = arith.constant 0 : i32
    %c0_i32_1 = arith.constant 0 : i32
    return %c0_i32, %c0_i32_0 : i32, i32
  }
  func.func @transform_3(%arg0: i32, %arg1: i32) -> (i32, i32) {
    %c0_i32 = arith.constant 0 : i32
    %c0_i32_0 = arith.constant 0 : i32
    %c0_i32_1 = arith.constant 0 : i32
    return %c0_i32, %c0_i32_0 : i32, i32
  }
  func.func @transform_4(%arg0: i32, %arg1: i32) -> (i32, i32) {
    %c0_i32 = arith.constant 0 : i32
    %c0_i32_0 = arith.constant 0 : i32
    %c0_i32_1 = arith.constant 0 : i32
    return %c0_i32, %c0_i32_0 : i32, i32
  }
  func.func @transform_5(%arg0: i32, %arg1: i32) -> (i32, i32) {
    %c0_i32 = arith.constant 0 : i32
    %c0_i32_0 = arith.constant 0 : i32
    %c0_i32_1 = arith.constant 0 : i32
    return %c0_i32, %c0_i32_0 : i32, i32
  }
  func.func @transform_6(%arg0: i32, %arg1: i32) -> (i32, i32, i32) {
    %c0_i32 = arith.constant 0 : i32
    %c0_i32_0 = arith.constant 0 : i32
    return %arg0, %arg1, %c0_i32 : i32, i32, i32
  }
}

</mosaic_0001>

<llo_original>
// kernel: tpu_custom_call.1
$region0: #{tpu_custom_call.1}
  #allocation0 [shape = 'u32[]', space=smem, size = 0x4, offset = 0x4, fixed_abs, tag = 'smem constant byte address 0x4 - core index']
  #allocation1 [shape = 'u32[144,128]{1,0:T(1,128)}', space=vmem, size = 0x12000, scoped, tag = 'internal scratch']
  #allocation2 [shape = 'bf16[16,64]{1,0:T(16,128)(2,1)}', space=vmem, size = 0x1000, scoped, tag = 'scratch operand']
  %s0 = inlined_call_operand.hbm [shape: bf16[16,32], index: 0, kind: input, shape index: {}]
  %s1 = inlined_call_operand.hbm [shape: bf16[2,16,32], index: 1, kind: input, shape index: {}]
  %s2 = inlined_call_operand.hbm [shape: bf16[32,32], index: 2, kind: input, shape index: {}]
  %s3 = inlined_call_operand.hbm [shape: bf16[32,64], index: 3, kind: input, shape index: {}]
  %s4 = inlined_call_operand.hbm [shape: bf16[32,32], index: 4, kind: input, shape index: {}]
  %s5 = inlined_call_operand.vmem [shape: f32[1,32], index: 5, kind: input, shape index: {}]
  %s6 = inlined_call_operand.hbm [shape: f32[2,16,32], index: 6, kind: output, shape index: {}]
  %s7 = sld [smem:[#allocation0]]
  $region81: #{tpu_custom_call.1} parent=0
    _
  %s9 = ssub.s32 1, %s7
  %s10 = scalar_select 0, %s9, %s7
  $region1: #{tpu_custom_call.1} parent=0
    #allocation3 [shape = 'u8[4096]{0}', space=vmem, size = 0x1000, scoped, tag = 'input window, operand 0, single buffered']
    #allocation4 [shape = 's32[2]{0}', space=sflag, size = 0x8, scoped, tag = 'scoped memory for tpu_custom_call.1']
    #allocation5 [shape = 's32[2]{0}', space=sflag, size = 0x8, scoped, tag = 'scoped memory for tpu_custom_call.1']
    #allocation6 [shape = 'u8[8192]{0}', space=vmem, size = 0x2000, scoped, tag = 'input window, operand 1']
    #allocation7 [shape = 's32[2]{0}', space=sflag, size = 0x8, scoped, tag = 'scoped memory for tpu_custom_call.1']
    #allocation8 [shape = 'u8[8192]{0}', space=vmem, size = 0x2000, scoped, tag = 'input window, operand 2, single buffered']
    #allocation9 [shape = 'u8[8192]{0}', space=vmem, size = 0x2000, scoped, tag = 'input window, operand 3, single buffered']
    #allocation10 [shape = 's32[1]{0}', space=sflag, size = 0x4, scoped, tag = 'scoped memory for tpu_custom_call.1']
    #allocation11 [shape = 'u8[8192]{0}', space=vmem, size = 0x2000, scoped, tag = 'input window, operand 4, single buffered']
    #allocation12 [shape = 'u8[16384]{0}', space=vmem, size = 0x4000, scoped, tag = 'output window, operand 0']
    %11 = vsyncpa [#allocation4], 0
    %12 = vsyncpa [#allocation7], 0
    %s13 = scalar_lea.sflag [#allocation7], 1
    %14 = vsyncpa %s13, 0
    %15 = vsyncpa [#allocation10], 0
    %16 = vsyncpa [#allocation5], 0
    %s17 = scalar_lea.sflag [#allocation5], 1
    %18 = vsyncpa %s17, 0
    loop: start=0, step=1, limit=4
    $region2: #{tpu_custom_call.1} parent=1 // loop_pre_header
      _
    $region3: #{tpu_custom_call.1} parent=1 // loop_header
      %s20 = sphi 0, %s24
      %p21 = scmp.ge.s32.totalorder %s20, 4
      %s27 = sphi 0, %s39
      %s28 = sphi 0, %s35
      %s29 = sphi 0, %s27
      %s30 = sphi 0, %s28
      %s31 = sphi 0, %s29
      %s32 = sphi 0, %s30
      %s42 = sphi 0, %s44
      %s45 = sphi 0, %s42
      %s46 = sphi 0, %s45
      %s62 = sphi 0, %s46
      %s68 = sphi 0, %s70
      %s71 = sphi 0, %s68
      %s72 = sphi 0, %s71
      %s88 = sphi 0, %s72
      %s92 = sphi 0, %s92
      %s94 = sphi 0, %s92
      %s95 = sphi 0, %s94
      %s109 = sphi 0, %s95
      %s113 = sphi 0, %s113
      %s115 = sphi 0, %s113
      %s116 = sphi 0, %s115
      %s130 = sphi 0, %s116
      %s134 = sphi 0, %s134
      %s136 = sphi 0, %s134
      %s137 = sphi 0, %s136
      %s151 = sphi 0, %s137
      %s155 = sphi 0, %s155
      %s157 = sphi 0, %s155
      %s158 = sphi 0, %s157
      %s172 = sphi 0, %s158
      %s180 = sphi 0, %s182
      %s183 = sphi 0, %s180
      %s184 = sphi 0, %s183
      %s200 = sphi 0, %s184
    $region4: #{tpu_custom_call.1} parent=1 // loop_header_branch
      %23 = sbr.rel (%p21) target = $region8
    $region5: #{tpu_custom_call.1} parent=1 // loop_body
      %s25 = ssub.s32 %s20, 1
      %s26 = ssub.s32 %s20, 2
      %s33 = sadd.s32 1, %s28
      %p34 = scmp.ge.s32.totalorder %s33, 1
      %s35 = scalar_select %p34, 0, %s33
      %s36 = sadd.s32 1, %s27
      %s37 = scalar_select %p34, %s36, %s27
      %p38 = scmp.ge.s32.totalorder %s37, 2
      %s39 = scalar_select %p38, 0, %s37
      %s40 = ssub.s32 %s28, %s35
      %p41 = scmp.eq.s32.totalorder %s40, 0
      %s43 = sadd.s32 %s42, 1
      %s44 = scalar_select %p41, %s42, %s43
      %p47 = pneg %p41
      %p48 = scmp.eq.s32.totalorder %s20, 1
      %p49 = por %p47, %p48
      %p50 = scmp.ne.s32.totalorder %s42, %s45
      %p51 = scmp.eq.s32.totalorder %s20, 0
      %p52 = por %p50, %p51
      %p53 = scmp.ne.s32.totalorder %s42, %s45
      %p54 = scmp.eq.s32.totalorder %s25, 1
      %p55 = por %p53, %p54
      %p56 = scmp.ne.s32.totalorder %s45, %s46
      %p57 = scmp.eq.s32.totalorder %s25, 0
      %p58 = por %p56, %p57
      %p59 = scmp.ne.s32.totalorder %s45, %s46
      %p60 = scmp.eq.s32.totalorder %s26, 1
      %p61 = por %p59, %p60
      %p63 = scmp.ne.s32.totalorder %s46, %s62
      %p64 = scmp.eq.s32.totalorder %s26, 0
      %p65 = por %p63, %p64
      %s66 = ssub.s32 %s27, %s39
      %p67 = scmp.eq.s32.totalorder %s66, 0
      %s69 = sadd.s32 %s68, 1
      %s70 = scalar_select %p67, %s68, %s69
      %p73 = pneg %p67
      %p74 = scmp.eq.s32.totalorder %s20, 1
      %p75 = por %p73, %p74
      %p76 = scmp.ne.s32.totalorder %s68, %s71
      %p77 = scmp.eq.s32.totalorder %s20, 0
      %p78 = por %p76, %p77
      %p79 = scmp.ne.s32.totalorder %s68, %s71
      %p80 = scmp.eq.s32.totalorder %s25, 1
      %p81 = por %p79, %p80
      %p82 = scmp.ne.s32.totalorder %s71, %s72
      %p83 = scmp.eq.s32.totalorder %s25, 0
      %p84 = por %p82, %p83
      %p85 = scmp.ne.s32.totalorder %s71, %s72
      %p86 = scmp.eq.s32.totalorder %s26, 1
      %p87 = por %p85, %p86
      %p89 = scmp.ne.s32.totalorder %s72, %s88
      %p90 = scmp.eq.s32.totalorder %s26, 0
      %p91 = por %p89, %p90
      %s93 = sadd.s32 %s92, 1
      %p96 = scmp.eq.s32.totalorder %s20, 1
      %p97 = scmp.ne.s32.totalorder %s92, %s94
      %p98 = scmp.eq.s32.totalorder %s20, 0
      %p99 = por %p97, %p98
      %p100 = scmp.ne.s32.totalorder %s92, %s94
      %p101 = scmp.eq.s32.totalorder %s25, 1
      %p102 = por %p100, %p101
      %p103 = scmp.ne.s32.totalorder %s94, %s95
      %p104 = scmp.eq.s32.totalorder %s25, 0
      %p105 = por %p103, %p104
      %p106 = scmp.ne.s32.totalorder %s94, %s95
      %p107 = scmp.eq.s32.totalorder %s26, 1
      %p108 = por %p106, %p107
      %p110 = scmp.ne.s32.totalorder %s95, %s109
      %p111 = scmp.eq.s32.totalorder %s26, 0
      %p112 = por %p110, %p111
      %s114 = sadd.s32 %s113, 1
      %p117 = scmp.eq.s32.totalorder %s20, 1
      %p118 = scmp.ne.s32.totalorder %s113, %s115
      %p119 = scmp.eq.s32.totalorder %s20, 0
      %p120 = por %p118, %p119
      %p121 = scmp.ne.s32.totalorder %s113, %s115
      %p122 = scmp.eq.s32.totalorder %s25, 1
      %p123 = por %p121, %p122
      %p124 = scmp.ne.s32.totalorder %s115, %s116
      %p125 = scmp.eq.s32.totalorder %s25, 0
      %p126 = por %p124, %p125
      %p127 = scmp.ne.s32.totalorder %s115, %s116
      %p128 = scmp.eq.s32.totalorder %s26, 1
      %p129 = por %p127, %p128
      %p131 = scmp.ne.s32.totalorder %s116, %s130
      %p132 = scmp.eq.s32.totalorder %s26, 0
      %p133 = por %p131, %p132
      %s135 = sadd.s32 %s134, 1
      %p138 = scmp.eq.s32.totalorder %s20, 1
      %p139 = scmp.ne.s32.totalorder %s134, %s136
      %p140 = scmp.eq.s32.totalorder %s20, 0
      %p141 = por %p139, %p140
      %p142 = scmp.ne.s32.totalorder %s134, %s136
      %p143 = scmp.eq.s32.totalorder %s25, 1
      %p144 = por %p142, %p143
      %p145 = scmp.ne.s32.totalorder %s136, %s137
      %p146 = scmp.eq.s32.totalorder %s25, 0
      %p147 = por %p145, %p146
      %p148 = scmp.ne.s32.totalorder %s136, %s137
      %p149 = scmp.eq.s32.totalorder %s26, 1
      %p150 = por %p148, %p149
      %p152 = scmp.ne.s32.totalorder %s137, %s151
      %p153 = scmp.eq.s32.totalorder %s26, 0
      %p154 = por %p152, %p153
      %s156 = sadd.s32 %s155, 1
      %p159 = scmp.eq.s32.totalorder %s20, 1
      %p160 = scmp.ne.s32.totalorder %s155, %s157
      %p161 = scmp.eq.s32.totalorder %s20, 0
      %p162 = por %p160, %p161
      %p163 = scmp.ne.s32.totalorder %s155, %s157
      %p164 = scmp.eq.s32.totalorder %s25, 1
      %p165 = por %p163, %p164
      %p166 = scmp.ne.s32.totalorder %s157, %s158
      %p167 = scmp.eq.s32.totalorder %s25, 0
      %p168 = por %p166, %p167
      %p169 = scmp.ne.s32.totalorder %s157, %s158
      %p170 = scmp.eq.s32.totalorder %s26, 1
      %p171 = por %p169, %p170
      %p173 = scmp.ne.s32.totalorder %s158, %s172
      %p174 = scmp.eq.s32.totalorder %s26, 0
      %p175 = por %p173, %p174
      %s176 = ssub.s32 %s27, %s39
      %s177 = ssub.s32 %s28, %s35
      %s178 = sor.u32 %s176, %s177
      %p179 = scmp.eq.s32.totalorder %s178, 0
      %s181 = sadd.s32 %s180, 1
      %s182 = scalar_select %p179, %s180, %s181
      %p185 = pneg %p179
      %p186 = scmp.eq.s32.totalorder %s20, 1
      %p187 = por %p185, %p186
      %p188 = scmp.ne.s32.totalorder %s180, %s183
      %p189 = scmp.eq.s32.totalorder %s20, 0
      %p190 = por %p188, %p189
      %p191 = scmp.ne.s32.totalorder %s180, %s183
      %p192 = scmp.eq.s32.totalorder %s25, 1
      %p193 = por %p191, %p192
      %p194 = scmp.ne.s32.totalorder %s183, %s184
      %p195 = scmp.eq.s32.totalorder %s25, 0
      %p196 = por %p194, %p195
      %p197 = scmp.ne.s32.totalorder %s183, %s184
      %p198 = scmp.eq.s32.totalorder %s26, 1
      %p199 = por %p197, %p198
      %p201 = scmp.ne.s32.totalorder %s184, %s200
      %p202 = scmp.eq.s32.totalorder %s26, 0
      %p203 = por %p201, %p202
      %p204 = scmp.le.s32.totalorder 1, %s20
      %p205 = scmp.lt.s32.totalorder %s20, 3
      %p206 = pnand %p204, %p205
      %p207 = pneg %p206
      // Predicated region
      $region9: #{tpu_custom_call.1} parent=5 // pred_check
        _
      $region10: #{tpu_custom_call.1} parent=5 // pred_check_branch
        %209 = sbr.rel (%p206) target = $region12
      $region11: #{tpu_custom_call.1} parent=5 // pred_region
        %s210 = ssub.s32 %s20, 1
        // Predicated region
        $region13: #{tpu_custom_call.1} parent=11 // pred_check
          %p211 = pneg %p58
        $region14: #{tpu_custom_call.1} parent=11 // pred_check_branch
          %213 = sbr.rel (%p211) target = $region16
        $region15: #{tpu_custom_call.1} parent=11 // pred_region
          %s214 = smul.u32 2, %s30
          %s216 = ssub.s32 128, 128
          %217 = vsyncadd [#allocation4], %s216
          %s218 = smul.addr %s214, 64
          %s219 = scalar_lea.hbm %s0, %s218
          %s220 = sshll.u32 [#allocation3], 4
          %s221 = int_to_ptr.vmem [resolvable:$true] %s220
          %226 = dma.hbm_to_vmem [thread:$0]  %s219, 128, %s221, [#allocation4], 64, 64, 4
        $region16: #{tpu_custom_call.1} parent=11 // pred_fallthru
          _
        // Predicated region
        $region17: #{tpu_custom_call.1} parent=11 // pred_check
          %p227 = pneg %p105
        $region18: #{tpu_custom_call.1} parent=11 // pred_check_branch
          %229 = sbr.rel (%p227) target = $region20
        $region19: #{tpu_custom_call.1} parent=11 // pred_region
          %s231 = ssub.s32 256, 256
          %232 = vsyncadd [#allocation7], %s231
          %s233 = sshll.u32 [#allocation8], 4
          %s234 = int_to_ptr.vmem [resolvable:$true] %s233
          %239 = dma.hbm_to_vmem [thread:$0]  %s2, 256, %s234, [#allocation7], 64, 64, 4
        $region20: #{tpu_custom_call.1} parent=11 // pred_fallthru
          _
        // Predicated region
        $region21: #{tpu_custom_call.1} parent=11 // pred_check
          %p240 = pneg %p126
        $region22: #{tpu_custom_call.1} parent=11 // pred_check_branch
          %242 = sbr.rel (%p240) target = $region24
        $region23: #{tpu_custom_call.1} parent=11 // pred_region
          %s244 = ssub.s32 256, 256
          %245 = vsyncadd [#allocation10], %s244
          %s246 = sshll.u32 [#allocation9], 4
          %s247 = int_to_ptr.vmem [resolvable:$true] %s246
          %252 = dma.hbm_to_vmem [thread:$0]  %s3, 256, %s247, [#allocation10], 64, 64, 4
        $region24: #{tpu_custom_call.1} parent=11 // pred_fallthru
          _
        // Predicated region
        $region25: #{tpu_custom_call.1} parent=11 // pred_check
          %p253 = pneg %p147
        $region26: #{tpu_custom_call.1} parent=11 // pred_check_branch
          %255 = sbr.rel (%p253) target = $region28
        $region27: #{tpu_custom_call.1} parent=11 // pred_region
          %s257 = ssub.s32 256, 256
          %258 = vsyncadd [#allocation10], %s257
          %s259 = sshll.u32 [#allocation11], 4
          %s260 = int_to_ptr.vmem [resolvable:$true] %s259
          %265 = dma.hbm_to_vmem [thread:$0]  %s4, 256, %s260, [#allocation10], 64, 64, 4
        $region28: #{tpu_custom_call.1} parent=11 // pred_fallthru
          _
        // Predicated region
        $region29: #{tpu_custom_call.1} parent=11 // pred_check
          %p266 = pneg %p168
        $region30: #{tpu_custom_call.1} parent=11 // pred_check_branch
          %268 = sbr.rel (%p266) target = $region32
        $region31: #{tpu_custom_call.1} parent=11 // pred_region
          _
        $region32: #{tpu_custom_call.1} parent=11 // pred_fallthru
          _
      $region12: #{tpu_custom_call.1} parent=5 // pred_fallthru
        _
      %p269 = scmp.lt.s32.totalorder %s20, 2
      // Predicated region
      $region33: #{tpu_custom_call.1} parent=5 // pred_check
        %p270 = pneg %p269
      $region34: #{tpu_custom_call.1} parent=5 // pred_check_branch
        %272 = sbr.rel (%p270) target = $region36
      $region35: #{tpu_custom_call.1} parent=5 // pred_region
        // Predicated region
        $region37: #{tpu_custom_call.1} parent=35 // pred_check
          %p273 = pneg %p78
        $region38: #{tpu_custom_call.1} parent=35 // pred_check_branch
          %275 = sbr.rel (%p273) target = $region40
        $region39: #{tpu_custom_call.1} parent=35 // pred_region
          %s276 = sand.u32 %s20, 1
          %s277 = scalar_lea.sflag [#allocation7], %s276
          %s278 = sand.u32 %s68, 1
          %s279 = smul.addr %s278, 8
          %s280 = scalar_lea.vmem [#allocation6], %s279
          %s282 = ssub.s32 128, 128
          %283 = vsyncadd %s277, %s282
          %s284 = smul.addr %s27, 2
          %s285 = smul.addr %s284, 64
          %s286 = scalar_lea.hbm %s1, %s285
          %s287 = sshll.u32 %s280, 4
          %s288 = int_to_ptr.vmem [resolvable:$true] %s287
          %293 = dma.hbm_to_vmem [thread:$0]  %s286, 128, %s288, %s277, 64, 64, 4
        $region40: #{tpu_custom_call.1} parent=35 // pred_fallthru
          _
      $region36: #{tpu_custom_call.1} parent=5 // pred_fallthru
        _
      %p294 = scmp.le.s32.totalorder 1, %s20
      %p295 = scmp.lt.s32.totalorder %s20, 3
      %p296 = pnand %p294, %p295
      %p297 = pneg %p296
      // Predicated region
      $region41: #{tpu_custom_call.1} parent=5 // pred_check
        _
      $region42: #{tpu_custom_call.1} parent=5 // pred_check_branch
        %299 = sbr.rel (%p296) target = $region44
      $region43: #{tpu_custom_call.1} parent=5 // pred_region
        %s300 = ssub.s32 %s20, 1
        // Predicated region
        $region45: #{tpu_custom_call.1} parent=43 // pred_check
          %p301 = pneg %p58
        $region46: #{tpu_custom_call.1} parent=43 // pred_check_branch
          %303 = sbr.rel (%p301) target = $region48
        $region47: #{tpu_custom_call.1} parent=43 // pred_region
          %304 = dma.done [#allocation4], 128
        $region48: #{tpu_custom_call.1} parent=43 // pred_fallthru
          _
        %s305 = sand.u32 %s25, 1
        %s306 = scalar_lea.sflag [#allocation7], %s305
        %s307 = sand.u32 %s71, 1
        %s308 = smul.addr %s307, 8
        %s309 = scalar_lea.vmem [#allocation6], %s308
        // Predicated region
        $region49: #{tpu_custom_call.1} parent=43 // pred_check
          %p310 = pneg %p84
        $region50: #{tpu_custom_call.1} parent=43 // pred_check_branch
          %312 = sbr.rel (%p310) target = $region52
        $region51: #{tpu_custom_call.1} parent=43 // pred_region
          %313 = dma.done %s306, 128
        $region52: #{tpu_custom_call.1} parent=43 // pred_fallthru
          _
        // Predicated region
        $region53: #{tpu_custom_call.1} parent=43 // pred_check
          %p314 = pneg %p105
        $region54: #{tpu_custom_call.1} parent=43 // pred_check_branch
          %316 = sbr.rel (%p314) target = $region56
        $region55: #{tpu_custom_call.1} parent=43 // pred_region
          %317 = dma.done [#allocation7], 256
        $region56: #{tpu_custom_call.1} parent=43 // pred_fallthru
          _
        // Predicated region
        $region57: #{tpu_custom_call.1} parent=43 // pred_check
          %p318 = pneg %p126
        $region58: #{tpu_custom_call.1} parent=43 // pred_check_branch
          %320 = sbr.rel (%p318) target = $region60
        $region59: #{tpu_custom_call.1} parent=43 // pred_region
          %321 = dma.done [#allocation10], 256
        $region60: #{tpu_custom_call.1} parent=43 // pred_fallthru
          _
        // Predicated region
        $region61: #{tpu_custom_call.1} parent=43 // pred_check
          %p322 = pneg %p147
        $region62: #{tpu_custom_call.1} parent=43 // pred_check_branch
          %324 = sbr.rel (%p322) target = $region64
        $region63: #{tpu_custom_call.1} parent=43 // pred_region
          %325 = dma.done [#allocation10], 256
        $region64: #{tpu_custom_call.1} parent=43 // pred_fallthru
          _
        %p326 = pneg %p58
        %p327 = pneg %p55
        %s328 = sand.u32 %s25, 1
        %s329 = scalar_lea.sflag [#allocation7], %s328
        %s330 = sand.u32 %s71, 1
        %s331 = smul.addr %s330, 8
        %s332 = scalar_lea.vmem [#allocation6], %s331
        %p333 = pneg %p84
        %p334 = pneg %p81
        %p335 = pneg %p105
        %p336 = pneg %p102
        %p337 = pneg %p126
        %p338 = pneg %p123
        %p339 = pneg %p147
        %p340 = pneg %p144
        %p341 = pneg %p168
        %p342 = pneg %p165
        %p343 = pneg %p196
        %p344 = pneg %p193
        %s345 = sand.u32 %s183, 1
        %s346 = scalar_lea.sflag [#allocation5], %s345
        %s347 = sand.u32 %s183, 1
        %s348 = smul.addr %s347, 16
        %s349 = scalar_lea.vmem [#allocation12], %s348
        %s350 = smul.u32 2, %s30
        %s351 = smul.u32 2, %s30
        %p353 = scmp.eq.s32.totalorder %s30, 0
        // Predicated region
        $region65: #{tpu_custom_call.1} parent=43 // pred_check
          %p354 = pneg %p353
        $region66: #{tpu_custom_call.1} parent=43 // pred_check_branch
          %356 = sbr.rel (%p354) target = $region68
        $region67: #{tpu_custom_call.1} parent=43 // pred_region
          %v357 = vld [vmem:[%s309] sm:$0xf]
          %v358 = vld [vmem:[%s309 + $0x4] sm:$0xf]
          %v359 = vld [vmem:[#allocation9] sm:$0xf]
          %v360 = vld [vmem:[#allocation9 + $0x4] sm:$0xf]
          %v361 = vld [vmem:[#allocation9 + $0x8] sm:$0xf]
          %v362 = vld [vmem:[#allocation9 + $0xc] sm:$0xf]
          %v365 = vunpack.c.l.b16 %v357
          %v366 = vunpack.c.l.b16 %v358
          %v367 = vpack.c.b16 %v366, %v365
          %v372 = vunpack.c.l.b16 %v359
          %v373 = vunpack.c.l.b16 %v360
          %v374 = vunpack.c.l.b16 %v361
          %v375 = vunpack.c.l.b16 %v362
          %v376 = vpack.c.b16 %v373, %v372
          %v377 = vpack.c.b16 %v375, %v374
          %vm380 = vcmask 261120
          %v382 = vsel %vm380, %v367, 0
          %384 = vmatprep.subr.bf16.mxu0 0
          %385 = vmatpush1.bf16.msra.mxu0 %v376
          %386 = vmatprep.subr.bf16.mxu0 0
          %387 = vmatpush1.bf16.msra.mxu0 %v377
          %388 = vmatprep.subr.bf16.mxu0 0
          %389 = vmatpush1.bf16.msra.mxu0 0
          %390 = vmatprep.subr.bf16.mxu0 0
          %391 = vmatpush1.bf16.msra.mxu0 0
          %392 = vmatprep.subr.bf16.mxu0 0
          %393 = vmatpush1.bf16.msra.mxu0 0
          %394 = vmatprep.subr.bf16.mxu0 0
          %395 = vmatpush1.bf16.msra.mxu0 0
          %396 = vmatprep.subr.bf16.mxu0 0
          %397 = vmatpush1.bf16.msra.mxu0 0
          %398 = vmatprep.subr.bf16.mxu0 0
          %399 = vmatpush1.bf16.msra.mxu0 0
          %400 = vmatprep.subr.bf16.mxu0 0
          %401 = vmatpush1.bf16.msra.mxu0 0
          %402 = vmatprep.subr.bf16.mxu0 0
          %403 = vmatpush1.bf16.msra.mxu0 0
          %404 = vmatprep.subr.bf16.mxu0 0
          %405 = vmatpush1.bf16.msra.mxu0 0
          %406 = vmatprep.subr.bf16.mxu0 0
          %407 = vmatpush1.bf16.msra.mxu0 0
          %408 = vmatprep.subr.bf16.mxu0 0
          %409 = vmatpush1.bf16.msra.mxu0 0
          %410 = vmatprep.subr.bf16.mxu0 0
          %411 = vmatpush1.bf16.msra.mxu0 0
          %412 = vmatprep.subr.bf16.mxu0 0
          %413 = vmatpush1.bf16.msra.mxu0 0
          %414 = vmatprep.subr.bf16.mxu0 0
          %415 = vmatpush1.bf16.msra.mxu0 0
          %416 = vmatprep.mubr.bf16.mxu0 0
          %417 = vmatmul.mubr.bf16.gmra.mrb[0].mxu0 %v382
          %v418 = vpop.f32.mrb[0].mxu0
          %v419 = vadd.f32 0.0, %v418
          %v420 = vpop.f32.mrb[0].mxu0
          %v421 = vpop.f32.mrb[0].mxu0
          %v422 = vadd.f32 0.0, %v421
          %v423 = vpop.f32.mrb[0].mxu0
          %424 = vdwg.mxu0
          %v425 = vpack.c.bf16 %v422, %v419
          %vm426 = vcmask 523264
          %427 = vst.msk [vmem:[#allocation2] sm:$0xff] %vm426, %v425
        $region68: #{tpu_custom_call.1} parent=43 // pred_fallthru
          _
        %v428 = vld [vmem:[#allocation3] sm:$0xf]
        %v429 = vld [vmem:[#allocation3 + $0x4] sm:$0xf]
        %v430 = vld [vmem:[#allocation8] sm:$0xf]
        %v431 = vld [vmem:[#allocation8 + $0x4] sm:$0xf]
        %v432 = vld [vmem:[#allocation8 + $0x8] sm:$0xf]
        %v433 = vld [vmem:[#allocation8 + $0xc] sm:$0xf]
        %v436 = vunpack.c.l.b16 %v428
        %v437 = vunpack.c.l.b16 %v429
        %v438 = vpack.c.b16 %v437, %v436
        %v443 = vunpack.c.l.b16 %v430
        %v444 = vunpack.c.l.b16 %v431
        %v445 = vunpack.c.l.b16 %v432
        %v446 = vunpack.c.l.b16 %v433
        %v447 = vpack.c.b16 %v444, %v443
        %v448 = vpack.c.b16 %v446, %v445
        %vm451 = vcmask 261120
        %v453 = vsel %vm451, %v438, 0
        %455 = vmatprep.subr.bf16.mxu0 0
        %456 = vmatpush1.bf16.msra.mxu0 %v447
        %457 = vmatprep.subr.bf16.mxu0 0
        %458 = vmatpush1.bf16.msra.mxu0 %v448
        %459 = vmatprep.subr.bf16.mxu0 0
        %460 = vmatpush1.bf16.msra.mxu0 0
        %461 = vmatprep.subr.bf16.mxu0 0
        %462 = vmatpush1.bf16.msra.mxu0 0
        %463 = vmatprep.subr.bf16.mxu0 0
        %464 = vmatpush1.bf16.msra.mxu0 0
        %465 = vmatprep.subr.bf16.mxu0 0
        %466 = vmatpush1.bf16.msra.mxu0 0
        %467 = vmatprep.subr.bf16.mxu0 0
        %468 = vmatpush1.bf16.msra.mxu0 0
        %469 = vmatprep.subr.bf16.mxu0 0
        %470 = vmatpush1.bf16.msra.mxu0 0
        %471 = vmatprep.subr.bf16.mxu0 0
        %472 = vmatpush1.bf16.msra.mxu0 0
        %473 = vmatprep.subr.bf16.mxu0 0
        %474 = vmatpush1.bf16.msra.mxu0 0
        %475 = vmatprep.subr.bf16.mxu0 0
        %476 = vmatpush1.bf16.msra.mxu0 0
        %477 = vmatprep.subr.bf16.mxu0 0
        %478 = vmatpush1.bf16.msra.mxu0 0
        %479 = vmatprep.subr.bf16.mxu0 0
        %480 = vmatpush1.bf16.msra.mxu0 0
        %481 = vmatprep.subr.bf16.mxu0 0
        %482 = vmatpush1.bf16.msra.mxu0 0
        %483 = vmatprep.subr.bf16.mxu0 0
        %484 = vmatpush1.bf16.msra.mxu0 0
        %485 = vmatprep.subr.bf16.mxu0 0
        %486 = vmatpush1.bf16.msra.mxu0 0
        %487 = vmatprep.mubr.bf16.mxu0 0
        %488 = vmatmul.mubr.bf16.gmra.mrb[0].mxu0 %v453
        %v489 = vpop.f32.mrb[0].mxu0
        %v490 = vadd.f32 0.0, %v489
        %v491 = vpop.f32.mrb[0].mxu0
        %v492 = vpop.f32.mrb[0].mxu0
        %v493 = vadd.f32 0.0, %v492
        %v494 = vpop.f32.mrb[0].mxu0
        %495 = vdwg.mxu0
        %v496 = vpack.c.bf16 %v493, %v490
        %v497 = vld [vmem:[#allocation2] sm:$0xff]
        %v498 = vld [vmem:[#allocation11] sm:$0xf]
        %v499 = vld [vmem:[#allocation11 + $0x4] sm:$0xf]
        %v500 = vld [vmem:[#allocation11 + $0x8] sm:$0xf]
        %v501 = vld [vmem:[#allocation11 + $0xc] sm:$0xf]
        %vm502 = vcmask 31744
        %v504 = vsel %vm502, %v496, 0
        %v507 = vsel %vm502, %v497, 0
        %509 = vmatprep.subr.bf16.mxu0 0
        %510 = vmatpush1.bf16.xpose.msra.mxu0 %v507
        %511 = vmatprep.subr.bf16.mxu0 0
        %512 = vmatpush1.bf16.xpose.msra.mxu0 0
        %513 = vmatprep.subr.bf16.mxu0 0
        %514 = vmatpush1.bf16.xpose.msra.mxu0 0
        %515 = vmatprep.subr.bf16.mxu0 0
        %516 = vmatpush1.bf16.xpose.msra.mxu0 0
        %517 = vmatprep.subr.bf16.mxu0 0
        %518 = vmatpush1.bf16.xpose.msra.mxu0 0
        %519 = vmatprep.subr.bf16.mxu0 0
        %520 = vmatpush1.bf16.xpose.msra.mxu0 0
        %521 = vmatprep.subr.bf16.mxu0 0
        %522 = vmatpush1.bf16.xpose.msra.mxu0 0
        %523 = vmatprep.subr.bf16.mxu0 0
        %524 = vmatpush1.bf16.xpose.msra.mxu0 0
        %525 = vmatprep.subr.bf16.mxu0 0
        %526 = vmatpush1.bf16.xpose.msra.mxu0 0
        %527 = vmatprep.subr.bf16.mxu0 0
        %528 = vmatpush1.bf16.xpose.msra.mxu0 0
        %529 = vmatprep.subr.bf16.mxu0 0
        %530 = vmatpush1.bf16.xpose.msra.mxu0 0
        %531 = vmatprep.subr.bf16.mxu0 0
        %532 = vmatpush1.bf16.xpose.msra.mxu0 0
        %533 = vmatprep.subr.bf16.mxu0 0
        %534 = vmatpush1.bf16.xpose.msra.mxu0 0
        %535 = vmatprep.subr.bf16.mxu0 0
        %536 = vmatpush1.bf16.xpose.msra.mxu0 0
        %537 = vmatprep.subr.bf16.mxu0 0
        %538 = vmatpush1.bf16.xpose.msra.mxu0 0
        %539 = vmatprep.subr.bf16.mxu0 0
        %540 = vmatpush1.bf16.xpose.msra.mxu0 0
        %541 = vmatprep.mubr.bf16.mxu0 0
        %542 = vmatmul.mubr.bf16.gmra.mrb[0].mxu0 %v504
        %v543 = vpop.f32.mrb[0].mxu0
        %v544 = vadd.f32 0.0, %v543
        %v545 = vpop.f32.mrb[0].mxu0
        %v546 = vpop.f32.mrb[0].mxu0
        %v547 = vadd.f32 0.0, %v546
        %v548 = vpop.f32.mrb[0].mxu0
        %549 = vdwg.mxu0
        %vm550 = vcmask 130048
        %v551 = vsel %vm550, %v544, -inf
        %552 = vmax.xlane.f32.xlu0 %v551
        %v553 = vpop.xlane.xlu0 %552
        %v554 = vsel %vm550, %v547, -inf
        %555 = vmax.xlane.f32.xlu0 %v554
        %v556 = vpop.xlane.xlu0 %555
        %v557 = vsub.f32 %v544, %v553
        %v558 = vsub.f32 %v547, %v556
        %v559 = vmul.f32 %v557, 1.442695
        %v560 = vpow.pop %v559
        %v561 = vmul.f32 %v558, 1.442695
        %v562 = vpow.pop %v561
        %v563 = vsel %vm550, %v560, 0.0
        %564 = vadd.xlane.f32.xlu0 %v563
        %v565 = vpop.xlane.xlu0 %564
        %v566 = vsel %vm550, %v562, 0.0
        %567 = vadd.xlane.f32.xlu0 %v566
        %v568 = vpop.xlane.xlu0 %567
        %v569 = vrcp.pop %v565
        %v570 = vrcp.pop %v568
        %v571 = vmul.f32 %v560, %v569
        %v572 = vmul.f32 %v562, %v570
        %v573 = vpack.c.bf16 %v572, %v571
        %575 = vrot.lane.b32.xlu0 %v497, 96
        %v576 = vpop.permute.xlu0 %575
        %v579 = vsel %vm550, %v573, 0
        %581 = vmatprep.subr.bf16.mxu0 0
        %582 = vmatpush1.bf16.msra.mxu0 %v576
        %583 = vmatprep.subr.bf16.mxu0 0
        %584 = vmatpush1.bf16.msra.mxu0 0
        %585 = vmatprep.subr.bf16.mxu0 0
        %586 = vmatpush1.bf16.msra.mxu0 0
        %587 = vmatprep.subr.bf16.mxu0 0
        %588 = vmatpush1.bf16.msra.mxu0 0
        %589 = vmatprep.subr.bf16.mxu0 0
        %590 = vmatpush1.bf16.msra.mxu0 0
        %591 = vmatprep.subr.bf16.mxu0 0
        %592 = vmatpush1.bf16.msra.mxu0 0
        %593 = vmatprep.subr.bf16.mxu0 0
        %594 = vmatpush1.bf16.msra.mxu0 0
        %595 = vmatprep.subr.bf16.mxu0 0
        %596 = vmatpush1.bf16.msra.mxu0 0
        %597 = vmatprep.subr.bf16.mxu0 0
        %598 = vmatpush1.bf16.msra.mxu0 0
        %599 = vmatprep.subr.bf16.mxu0 0
        %600 = vmatpush1.bf16.msra.mxu0 0
        %601 = vmatprep.subr.bf16.mxu0 0
        %602 = vmatpush1.bf16.msra.mxu0 0
        %603 = vmatprep.subr.bf16.mxu0 0
        %604 = vmatpush1.bf16.msra.mxu0 0
        %605 = vmatprep.subr.bf16.mxu0 0
        %606 = vmatpush1.bf16.msra.mxu0 0
        %607 = vmatprep.subr.bf16.mxu0 0
        %608 = vmatpush1.bf16.msra.mxu0 0
        %609 = vmatprep.subr.bf16.mxu0 0
        %610 = vmatpush1.bf16.msra.mxu0 0
        %611 = vmatprep.subr.bf16.mxu0 0
        %612 = vmatpush1.bf16.msra.mxu0 0
        %613 = vmatprep.mubr.bf16.mxu0 0
        %614 = vmatmul.mubr.bf16.gmra.mrb[0].mxu0 %v579
        %v615 = vpop.f32.mrb[0].mxu0
        %v616 = vadd.f32 0.0, %v615
        %v617 = vpop.f32.mrb[0].mxu0
        %v618 = vpop.f32.mrb[0].mxu0
        %v619 = vadd.f32 0.0, %v618
        %v620 = vpop.f32.mrb[0].mxu0
        %621 = vdwg.mxu0
        %v622 = vpack.c.bf16 %v619, %v616
        %624 = vrot.lane.b32.xlu0 %v496, 124
        %v625 = vpop.permute.xlu0 %624
        %626 = vrot.lane.b32.xlu0 %v497, 124
        %v627 = vpop.permute.xlu0 %626
        %v629 = vsel %vm502, %v625, 0
        %v632 = vsel %vm502, %v627, 0
        %634 = vmatprep.subr.bf16.mxu0 0
        %635 = vmatpush1.bf16.xpose.msra.mxu0 %v632
        %636 = vmatprep.subr.bf16.mxu0 0
        %637 = vmatpush1.bf16.xpose.msra.mxu0 0
        %638 = vmatprep.subr.bf16.mxu0 0
        %639 = vmatpush1.bf16.xpose.msra.mxu0 0
        %640 = vmatprep.subr.bf16.mxu0 0
        %641 = vmatpush1.bf16.xpose.msra.mxu0 0
        %642 = vmatprep.subr.bf16.mxu0 0
        %643 = vmatpush1.bf16.xpose.msra.mxu0 0
        %644 = vmatprep.subr.bf16.mxu0 0
        %645 = vmatpush1.bf16.xpose.msra.mxu0 0
        %646 = vmatprep.subr.bf16.mxu0 0
        %647 = vmatpush1.bf16.xpose.msra.mxu0 0
        %648 = vmatprep.subr.bf16.mxu0 0
        %649 = vmatpush1.bf16.xpose.msra.mxu0 0
        %650 = vmatprep.subr.bf16.mxu0 0
        %651 = vmatpush1.bf16.xpose.msra.mxu0 0
        %652 = vmatprep.subr.bf16.mxu0 0
        %653 = vmatpush1.bf16.xpose.msra.mxu0 0
        %654 = vmatprep.subr.bf16.mxu0 0
        %655 = vmatpush1.bf16.xpose.msra.mxu0 0
        %656 = vmatprep.subr.bf16.mxu0 0
        %657 = vmatpush1.bf16.xpose.msra.mxu0 0
        %658 = vmatprep.subr.bf16.mxu0 0
        %659 = vmatpush1.bf16.xpose.msra.mxu0 0
        %660 = vmatprep.subr.bf16.mxu0 0
        %661 = vmatpush1.bf16.xpose.msra.mxu0 0
        %662 = vmatprep.subr.bf16.mxu0 0
        %663 = vmatpush1.bf16.xpose.msra.mxu0 0
        %664 = vmatprep.subr.bf16.mxu0 0
        %665 = vmatpush1.bf16.xpose.msra.mxu0 0
        %666 = vmatprep.mubr.bf16.mxu0 0
        %667 = vmatmul.mubr.bf16.gmra.mrb[0].mxu0 %v629
        %v668 = vpop.f32.mrb[0].mxu0
        %v669 = vadd.f32 0.0, %v668
        %v670 = vpop.f32.mrb[0].mxu0
        %v671 = vpop.f32.mrb[0].mxu0
        %v672 = vadd.f32 0.0, %v671
        %v673 = vpop.f32.mrb[0].mxu0
        %674 = vdwg.mxu0
        %v675 = vsel %vm550, %v669, -inf
        %676 = vmax.xlane.f32.xlu0 %v675
        %v677 = vpop.xlane.xlu0 %676
        %v678 = vsel %vm550, %v672, -inf
        %679 = vmax.xlane.f32.xlu0 %v678
        %v680 = vpop.xlane.xlu0 %679
        %v681 = vsub.f32 %v669, %v677
        %v682 = vsub.f32 %v672, %v680
        %v683 = vmul.f32 %v681, 1.442695
        %v684 = vpow.pop %v683
        %v685 = vmul.f32 %v682, 1.442695
        %v686 = vpow.pop %v685
        %v687 = vsel %vm550, %v684, 0.0
        %688 = vadd.xlane.f32.xlu0 %v687
        %v689 = vpop.xlane.xlu0 %688
        %v690 = vsel %vm550, %v686, 0.0
        %691 = vadd.xlane.f32.xlu0 %v690
        %v692 = vpop.xlane.xlu0 %691
        %v693 = vrcp.pop %v689
        %v694 = vrcp.pop %v692
        %v695 = vmul.f32 %v684, %v693
        %v696 = vmul.f32 %v686, %v694
        %v697 = vpack.c.bf16 %v696, %v695
        %698 = vrot.lane.b32.xlu0 %v497, 92
        %v699 = vpop.permute.xlu0 %698
        %v702 = vsel %vm550, %v697, 0
        %704 = vmatprep.subr.bf16.mxu0 0
        %705 = vmatpush1.bf16.msra.mxu0 %v699
        %706 = vmatprep.subr.bf16.mxu0 0
        %707 = vmatpush1.bf16.msra.mxu0 0
        %708 = vmatprep.subr.bf16.mxu0 0
        %709 = vmatpush1.bf16.msra.mxu0 0
        %710 = vmatprep.subr.bf16.mxu0 0
        %711 = vmatpush1.bf16.msra.mxu0 0
        %712 = vmatprep.subr.bf16.mxu0 0
        %713 = vmatpush1.bf16.msra.mxu0 0
        %714 = vmatprep.subr.bf16.mxu0 0
        %715 = vmatpush1.bf16.msra.mxu0 0
        %716 = vmatprep.subr.bf16.mxu0 0
        %717 = vmatpush1.bf16.msra.mxu0 0
        %718 = vmatprep.subr.bf16.mxu0 0
        %719 = vmatpush1.bf16.msra.mxu0 0
        %720 = vmatprep.subr.bf16.mxu0 0
        %721 = vmatpush1.bf16.msra.mxu0 0
        %722 = vmatprep.subr.bf16.mxu0 0
        %723 = vmatpush1.bf16.msra.mxu0 0
        %724 = vmatprep.subr.bf16.mxu0 0
        %725 = vmatpush1.bf16.msra.mxu0 0
        %726 = vmatprep.subr.bf16.mxu0 0
        %727 = vmatpush1.bf16.msra.mxu0 0
        %728 = vmatprep.subr.bf16.mxu0 0
        %729 = vmatpush1.bf16.msra.mxu0 0
        %730 = vmatprep.subr.bf16.mxu0 0
        %731 = vmatpush1.bf16.msra.mxu0 0
        %732 = vmatprep.subr.bf16.mxu0 0
        %733 = vmatpush1.bf16.msra.mxu0 0
        %734 = vmatprep.subr.bf16.mxu0 0
        %735 = vmatpush1.bf16.msra.mxu0 0
        %736 = vmatprep.mubr.bf16.mxu0 0
        %737 = vmatmul.mubr.bf16.gmra.mrb[0].mxu0 %v702
        %v738 = vpop.f32.mrb[0].mxu0
        %v739 = vadd.f32 0.0, %v738
        %v740 = vpop.f32.mrb[0].mxu0
        %v741 = vpop.f32.mrb[0].mxu0
        %v742 = vadd.f32 0.0, %v741
        %v743 = vpop.f32.mrb[0].mxu0
        %744 = vdwg.mxu0
        %v745 = vpack.c.bf16 %v742, %v739
        %v747 = vunpack.c.l.b16 %v498
        %v748 = vpack.c.b16 %v747, %v747
        %v749 = vrot.slane %v748, 2
        %v751 = vsel %vm502, %v745, 0
        %vm753 = vcmask 1041408
        %v755 = vsel %vm753, %v749, 0
        %757 = vmatprep.subr.bf16.mxu0 0
        %758 = vmatpush1.bf16.msra.mxu0 %v755
        %759 = vmatprep.subr.bf16.mxu0 0
        %760 = vmatpush1.bf16.msra.mxu0 0
        %761 = vmatprep.subr.bf16.mxu0 0
        %762 = vmatpush1.bf16.msra.mxu0 0
        %763 = vmatprep.subr.bf16.mxu0 0
        %764 = vmatpush1.bf16.msra.mxu0 0
        %765 = vmatprep.subr.bf16.mxu0 0
        %766 = vmatpush1.bf16.msra.mxu0 0
        %767 = vmatprep.subr.bf16.mxu0 0
        %768 = vmatpush1.bf16.msra.mxu0 0
        %769 = vmatprep.subr.bf16.mxu0 0
        %770 = vmatpush1.bf16.msra.mxu0 0
        %771 = vmatprep.subr.bf16.mxu0 0
        %772 = vmatpush1.bf16.msra.mxu0 0
        %773 = vmatprep.subr.bf16.mxu0 0
        %774 = vmatpush1.bf16.msra.mxu0 0
        %775 = vmatprep.subr.bf16.mxu0 0
        %776 = vmatpush1.bf16.msra.mxu0 0
        %777 = vmatprep.subr.bf16.mxu0 0
        %778 = vmatpush1.bf16.msra.mxu0 0
        %779 = vmatprep.subr.bf16.mxu0 0
        %780 = vmatpush1.bf16.msra.mxu0 0
        %781 = vmatprep.subr.bf16.mxu0 0
        %782 = vmatpush1.bf16.msra.mxu0 0
        %783 = vmatprep.subr.bf16.mxu0 0
        %784 = vmatpush1.bf16.msra.mxu0 0
        %785 = vmatprep.subr.bf16.mxu0 0
        %786 = vmatpush1.bf16.msra.mxu0 0
        %787 = vmatprep.subr.bf16.mxu0 0
        %788 = vmatpush1.bf16.msra.mxu0 0
        %789 = vmatprep.mubr.bf16.mxu0 0
        %790 = vmatmul.mubr.bf16.gmra.mrb[0].mxu0 %v751
        %v791 = vpop.f32.mrb[0].mxu0
        %v792 = vadd.f32 0.0, %v791
        %v793 = vpop.f32.mrb[0].mxu0
        %v794 = vpop.f32.mrb[0].mxu0
        %v795 = vadd.f32 0.0, %v794
        %v796 = vpop.f32.mrb[0].mxu0
        %797 = vdwg.mxu0
        %v799 = vsel %vm502, %v622, 0
        %v802 = vsel %vm753, %v498, 0
        %804 = vmatprep.subr.bf16.mxu0 0
        %805 = vmatpush1.bf16.msra.mxu0 %v802
        %806 = vmatprep.subr.bf16.mxu0 0
        %807 = vmatpush1.bf16.msra.mxu0 0
        %808 = vmatprep.subr.bf16.mxu0 0
        %809 = vmatpush1.bf16.msra.mxu0 0
        %810 = vmatprep.subr.bf16.mxu0 0
        %811 = vmatpush1.bf16.msra.mxu0 0
        %812 = vmatprep.subr.bf16.mxu0 0
        %813 = vmatpush1.bf16.msra.mxu0 0
        %814 = vmatprep.subr.bf16.mxu0 0
        %815 = vmatpush1.bf16.msra.mxu0 0
        %816 = vmatprep.subr.bf16.mxu0 0
        %817 = vmatpush1.bf16.msra.mxu0 0
        %818 = vmatprep.subr.bf16.mxu0 0
        %819 = vmatpush1.bf16.msra.mxu0 0
        %820 = vmatprep.subr.bf16.mxu0 0
        %821 = vmatpush1.bf16.msra.mxu0 0
        %822 = vmatprep.subr.bf16.mxu0 0
        %823 = vmatpush1.bf16.msra.mxu0 0
        %824 = vmatprep.subr.bf16.mxu0 0
        %825 = vmatpush1.bf16.msra.mxu0 0
        %826 = vmatprep.subr.bf16.mxu0 0
        %827 = vmatpush1.bf16.msra.mxu0 0
        %828 = vmatprep.subr.bf16.mxu0 0
        %829 = vmatpush1.bf16.msra.mxu0 0
        %830 = vmatprep.subr.bf16.mxu0 0
        %831 = vmatpush1.bf16.msra.mxu0 0
        %832 = vmatprep.subr.bf16.mxu0 0
        %833 = vmatpush1.bf16.msra.mxu0 0
        %834 = vmatprep.subr.bf16.mxu0 0
        %835 = vmatpush1.bf16.msra.mxu0 0
        %836 = vmatprep.mubr.bf16.mxu0 0
        %837 = vmatmul.mubr.bf16.gmra.mrb[0].mxu0 %v799
        %v838 = vpop.f32.mrb[0].mxu0
        %v839 = vadd.f32 %v792, %v838
        %v840 = vpop.f32.mrb[0].mxu0
        %v841 = vpop.f32.mrb[0].mxu0
        %v842 = vadd.f32 %v795, %v841
        %v843 = vpop.f32.mrb[0].mxu0
        %844 = vdwg.mxu0
        %845 = vrot.lane.b32.xlu0 %v496, 120
        %v846 = vpop.permute.xlu0 %845
        %847 = vrot.lane.b32.xlu0 %v497, 120
        %v848 = vpop.permute.xlu0 %847
        %v850 = vsel %vm502, %v846, 0
        %v853 = vsel %vm502, %v848, 0
        %855 = vmatprep.subr.bf16.mxu0 0
        %856 = vmatpush1.bf16.xpose.msra.mxu0 %v853
        %857 = vmatprep.subr.bf16.mxu0 0
        %858 = vmatpush1.bf16.xpose.msra.mxu0 0
        %859 = vmatprep.subr.bf16.mxu0 0
        %860 = vmatpush1.bf16.xpose.msra.mxu0 0
        %861 = vmatprep.subr.bf16.mxu0 0
        %862 = vmatpush1.bf16.xpose.msra.mxu0 0
        %863 = vmatprep.subr.bf16.mxu0 0
        %864 = vmatpush1.bf16.xpose.msra.mxu0 0
        %865 = vmatprep.subr.bf16.mxu0 0
        %866 = vmatpush1.bf16.xpose.msra.mxu0 0
        %867 = vmatprep.subr.bf16.mxu0 0
        %868 = vmatpush1.bf16.xpose.msra.mxu0 0
        %869 = vmatprep.subr.bf16.mxu0 0
        %870 = vmatpush1.bf16.xpose.msra.mxu0 0
        %871 = vmatprep.subr.bf16.mxu0 0
        %872 = vmatpush1.bf16.xpose.msra.mxu0 0
        %873 = vmatprep.subr.bf16.mxu0 0
        %874 = vmatpush1.bf16.xpose.msra.mxu0 0
        %875 = vmatprep.subr.bf16.mxu0 0
        %876 = vmatpush1.bf16.xpose.msra.mxu0 0
        %877 = vmatprep.subr.bf16.mxu0 0
        %878 = vmatpush1.bf16.xpose.msra.mxu0 0
        %879 = vmatprep.subr.bf16.mxu0 0
        %880 = vmatpush1.bf16.xpose.msra.mxu0 0
        %881 = vmatprep.subr.bf16.mxu0 0
        %882 = vmatpush1.bf16.xpose.msra.mxu0 0
        %883 = vmatprep.subr.bf16.mxu0 0
        %884 = vmatpush1.bf16.xpose.msra.mxu0 0
        %885 = vmatprep.subr.bf16.mxu0 0
        %886 = vmatpush1.bf16.xpose.msra.mxu0 0
        %887 = vmatprep.mubr.bf16.mxu0 0
        %888 = vmatmul.mubr.bf16.gmra.mrb[0].mxu0 %v850
        %v889 = vpop.f32.mrb[0].mxu0
        %v890 = vadd.f32 0.0, %v889
        %v891 = vpop.f32.mrb[0].mxu0
        %v892 = vpop.f32.mrb[0].mxu0
        %v893 = vadd.f32 0.0, %v892
        %v894 = vpop.f32.mrb[0].mxu0
        %895 = vdwg.mxu0
        %v896 = vsel %vm550, %v890, -inf
        %897 = vmax.xlane.f32.xlu0 %v896
        %v898 = vpop.xlane.xlu0 %897
        %v899 = vsel %vm550, %v893, -inf
        %900 = vmax.xlane.f32.xlu0 %v899
        %v901 = vpop.xlane.xlu0 %900
        %v902 = vsub.f32 %v890, %v898
        %v903 = vsub.f32 %v893, %v901
        %v904 = vmul.f32 %v902, 1.442695
        %v905 = vpow.pop %v904
        %v906 = vmul.f32 %v903, 1.442695
        %v907 = vpow.pop %v906
        %v908 = vsel %vm550, %v905, 0.0
        %909 = vadd.xlane.f32.xlu0 %v908
        %v910 = vpop.xlane.xlu0 %909
        %v911 = vsel %vm550, %v907, 0.0
        %912 = vadd.xlane.f32.xlu0 %v911
        %v913 = vpop.xlane.xlu0 %912
        %v914 = vrcp.pop %v910
        %v915 = vrcp.pop %v913
        %v916 = vmul.f32 %v905, %v914
        %v917 = vmul.f32 %v907, %v915
        %v918 = vpack.c.bf16 %v917, %v916
        %919 = vrot.lane.b32.xlu0 %v497, 88
        %v920 = vpop.permute.xlu0 %919
        %v923 = vsel %vm550, %v918, 0
        %925 = vmatprep.subr.bf16.mxu0 0
        %926 = vmatpush1.bf16.msra.mxu0 %v920
        %927 = vmatprep.subr.bf16.mxu0 0
        %928 = vmatpush1.bf16.msra.mxu0 0
        %929 = vmatprep.subr.bf16.mxu0 0
        %930 = vmatpush1.bf16.msra.mxu0 0
        %931 = vmatprep.subr.bf16.mxu0 0
        %932 = vmatpush1.bf16.msra.mxu0 0
        %933 = vmatprep.subr.bf16.mxu0 0
        %934 = vmatpush1.bf16.msra.mxu0 0
        %935 = vmatprep.subr.bf16.mxu0 0
        %936 = vmatpush1.bf16.msra.mxu0 0
        %937 = vmatprep.subr.bf16.mxu0 0
        %938 = vmatpush1.bf16.msra.mxu0 0
        %939 = vmatprep.subr.bf16.mxu0 0
        %940 = vmatpush1.bf16.msra.mxu0 0
        %941 = vmatprep.subr.bf16.mxu0 0
        %942 = vmatpush1.bf16.msra.mxu0 0
        %943 = vmatprep.subr.bf16.mxu0 0
        %944 = vmatpush1.bf16.msra.mxu0 0
        %945 = vmatprep.subr.bf16.mxu0 0
        %946 = vmatpush1.bf16.msra.mxu0 0
        %947 = vmatprep.subr.bf16.mxu0 0
        %948 = vmatpush1.bf16.msra.mxu0 0
        %949 = vmatprep.subr.bf16.mxu0 0
        %950 = vmatpush1.bf16.msra.mxu0 0
        %951 = vmatprep.subr.bf16.mxu0 0
        %952 = vmatpush1.bf16.msra.mxu0 0
        %953 = vmatprep.subr.bf16.mxu0 0
        %954 = vmatpush1.bf16.msra.mxu0 0
        %955 = vmatprep.subr.bf16.mxu0 0
        %956 = vmatpush1.bf16.msra.mxu0 0
        %957 = vmatprep.mubr.bf16.mxu0 0
        %958 = vmatmul.mubr.bf16.gmra.mrb[0].mxu0 %v923
        %v959 = vpop.f32.mrb[0].mxu0
        %v960 = vadd.f32 0.0, %v959
        %v961 = vpop.f32.mrb[0].mxu0
        %v962 = vpop.f32.mrb[0].mxu0
        %v963 = vadd.f32 0.0, %v962
        %v964 = vpop.f32.mrb[0].mxu0
        %965 = vdwg.mxu0
        %v966 = vpack.c.bf16 %v963, %v960
        %v968 = vsel %vm502, %v966, 0
        %v971 = vsel %vm753, %v499, 0
        %973 = vmatprep.subr.bf16.mxu0 0
        %974 = vmatpush1.bf16.msra.mxu0 %v971
        %975 = vmatprep.subr.bf16.mxu0 0
        %976 = vmatpush1.bf16.msra.mxu0 0
        %977 = vmatprep.subr.bf16.mxu0 0
        %978 = vmatpush1.bf16.msra.mxu0 0
        %979 = vmatprep.subr.bf16.mxu0 0
        %980 = vmatpush1.bf16.msra.mxu0 0
        %981 = vmatprep.subr.bf16.mxu0 0
        %982 = vmatpush1.bf16.msra.mxu0 0
        %983 = vmatprep.subr.bf16.mxu0 0
        %984 = vmatpush1.bf16.msra.mxu0 0
        %985 = vmatprep.subr.bf16.mxu0 0
        %986 = vmatpush1.bf16.msra.mxu0 0
        %987 = vmatprep.subr.bf16.mxu0 0
        %988 = vmatpush1.bf16.msra.mxu0 0
        %989 = vmatprep.subr.bf16.mxu0 0
        %990 = vmatpush1.bf16.msra.mxu0 0
        %991 = vmatprep.subr.bf16.mxu0 0
        %992 = vmatpush1.bf16.msra.mxu0 0
        %993 = vmatprep.subr.bf16.mxu0 0
        %994 = vmatpush1.bf16.msra.mxu0 0
        %995 = vmatprep.subr.bf16.mxu0 0
        %996 = vmatpush1.bf16.msra.mxu0 0
        %997 = vmatprep.subr.bf16.mxu0 0
        %998 = vmatpush1.bf16.msra.mxu0 0
        %999 = vmatprep.subr.bf16.mxu0 0
        %1000 = vmatpush1.bf16.msra.mxu0 0
        %1001 = vmatprep.subr.bf16.mxu0 0
        %1002 = vmatpush1.bf16.msra.mxu0 0
        %1003 = vmatprep.subr.bf16.mxu0 0
        %1004 = vmatpush1.bf16.msra.mxu0 0
        %1005 = vmatprep.mubr.bf16.mxu0 0
        %1006 = vmatmul.mubr.bf16.gmra.mrb[0].mxu0 %v968
        %v1007 = vpop.f32.mrb[0].mxu0
        %v1008 = vadd.f32 0.0, %v1007
        %v1009 = vpop.f32.mrb[0].mxu0
        %v1010 = vpop.f32.mrb[0].mxu0
        %v1011 = vadd.f32 0.0, %v1010
        %v1012 = vpop.f32.mrb[0].mxu0
        %1013 = vdwg.mxu0
        %v1014 = vadd.f32 %v839, %v1008
        %v1015 = vadd.f32 %v842, %v1011
        %1016 = vrot.lane.b32.xlu0 %v496, 116
        %v1017 = vpop.permute.xlu0 %1016
        %1018 = vrot.lane.b32.xlu0 %v497, 116
        %v1019 = vpop.permute.xlu0 %1018
        %v1021 = vsel %vm502, %v1017, 0
        %v1024 = vsel %vm502, %v1019, 0
        %1026 = vmatprep.subr.bf16.mxu0 0
        %1027 = vmatpush1.bf16.xpose.msra.mxu0 %v1024
        %1028 = vmatprep.subr.bf16.mxu0 0
        %1029 = vmatpush1.bf16.xpose.msra.mxu0 0
        %1030 = vmatprep.subr.bf16.mxu0 0
        %1031 = vmatpush1.bf16.xpose.msra.mxu0 0
        %1032 = vmatprep.subr.bf16.mxu0 0
        %1033 = vmatpush1.bf16.xpose.msra.mxu0 0
        %1034 = vmatprep.subr.bf16.mxu0 0
        %1035 = vmatpush1.bf16.xpose.msra.mxu0 0
        %1036 = vmatprep.subr.bf16.mxu0 0
        %1037 = vmatpush1.bf16.xpose.msra.mxu0 0
        %1038 = vmatprep.subr.bf16.mxu0 0
        %1039 = vmatpush1.bf16.xpose.msra.mxu0 0
        %1040 = vmatprep.subr.bf16.mxu0 0
        %1041 = vmatpush1.bf16.xpose.msra.mxu0 0
        %1042 = vmatprep.subr.bf16.mxu0 0
        %1043 = vmatpush1.bf16.xpose.msra.mxu0 0
        %1044 = vmatprep.subr.bf16.mxu0 0
        %1045 = vmatpush1.bf16.xpose.msra.mxu0 0
        %1046 = vmatprep.subr.bf16.mxu0 0
        %1047 = vmatpush1.bf16.xpose.msra.mxu0 0
        %1048 = vmatprep.subr.bf16.mxu0 0
        %1049 = vmatpush1.bf16.xpose.msra.mxu0 0
        %1050 = vmatprep.subr.bf16.mxu0 0
        %1051 = vmatpush1.bf16.xpose.msra.mxu0 0
        %1052 = vmatprep.subr.bf16.mxu0 0
        %1053 = vmatpush1.bf16.xpose.msra.mxu0 0
        %1054 = vmatprep.subr.bf16.mxu0 0
        %1055 = vmatpush1.bf16.xpose.msra.mxu0 0
        %1056 = vmatprep.subr.bf16.mxu0 0
        %1057 = vmatpush1.bf16.xpose.msra.mxu0 0
        %1058 = vmatprep.mubr.bf16.mxu0 0
        %1059 = vmatmul.mubr.bf16.gmra.mrb[0].mxu0 %v1021
        %v1060 = vpop.f32.mrb[0].mxu0
        %v1061 = vadd.f32 0.0, %v1060
        %v1062 = vpop.f32.mrb[0].mxu0
        %v1063 = vpop.f32.mrb[0].mxu0
        %v1064 = vadd.f32 0.0, %v1063
        %v1065 = vpop.f32.mrb[0].mxu0
        %1066 = vdwg.mxu0
        %v1067 = vsel %vm550, %v1061, -inf
        %1068 = vmax.xlane.f32.xlu0 %v1067
        %v1069 = vpop.xlane.xlu0 %1068
        %v1070 = vsel %vm550, %v1064, -inf
        %1071 = vmax.xlane.f32.xlu0 %v1070
        %v1072 = vpop.xlane.xlu0 %1071
        %v1073 = vsub.f32 %v1061, %v1069
        %v1074 = vsub.f32 %v1064, %v1072
        %v1075 = vmul.f32 %v1073, 1.442695
        %v1076 = vpow.pop %v1075
        %v1077 = vmul.f32 %v1074, 1.442695
        %v1078 = vpow.pop %v1077
        %v1079 = vsel %vm550, %v1076, 0.0
        %1080 = vadd.xlane.f32.xlu0 %v1079
        %v1081 = vpop.xlane.xlu0 %1080
        %v1082 = vsel %vm550, %v1078, 0.0
        %1083 = vadd.xlane.f32.xlu0 %v1082
        %v1084 = vpop.xlane.xlu0 %1083
        %v1085 = vrcp.pop %v1081
        %v1086 = vrcp.pop %v1084
        %v1087 = vmul.f32 %v1076, %v1085
        %v1088 = vmul.f32 %v1078, %v1086
        %v1089 = vpack.c.bf16 %v1088, %v1087
        %1090 = vrot.lane.b32.xlu0 %v497, 84
        %v1091 = vpop.permute.xlu0 %1090
        %v1094 = vsel %vm550, %v1089, 0
        %1096 = vmatprep.subr.bf16.mxu0 0
        %1097 = vmatpush1.bf16.msra.mxu0 %v1091
        %1098 = vmatprep.subr.bf16.mxu0 0
        %1099 = vmatpush1.bf16.msra.mxu0 0
        %1100 = vmatprep.subr.bf16.mxu0 0
        %1101 = vmatpush1.bf16.msra.mxu0 0
        %1102 = vmatprep.subr.bf16.mxu0 0
        %1103 = vmatpush1.bf16.msra.mxu0 0
        %1104 = vmatprep.subr.bf16.mxu0 0
        %1105 = vmatpush1.bf16.msra.mxu0 0
        %1106 = vmatprep.subr.bf16.mxu0 0
        %1107 = vmatpush1.bf16.msra.mxu0 0
        %1108 = vmatprep.subr.bf16.mxu0 0
        %1109 = vmatpush1.bf16.msra.mxu0 0
        %1110 = vmatprep.subr.bf16.mxu0 0
        %1111 = vmatpush1.bf16.msra.mxu0 0
        %1112 = vmatprep.subr.bf16.mxu0 0
        %1113 = vmatpush1.bf16.msra.mxu0 0
        %1114 = vmatprep.subr.bf16.mxu0 0
        %1115 = vmatpush1.bf16.msra.mxu0 0
        %1116 = vmatprep.subr.bf16.mxu0 0
        %1117 = vmatpush1.bf16.msra.mxu0 0
        %1118 = vmatprep.subr.bf16.mxu0 0
        %1119 = vmatpush1.bf16.msra.mxu0 0
        %1120 = vmatprep.subr.bf16.mxu0 0
        %1121 = vmatpush1.bf16.msra.mxu0 0
        %1122 = vmatprep.subr.bf16.mxu0 0
        %1123 = vmatpush1.bf16.msra.mxu0 0
        %1124 = vmatprep.subr.bf16.mxu0 0
        %1125 = vmatpush1.bf16.msra.mxu0 0
        %1126 = vmatprep.subr.bf16.mxu0 0
        %1127 = vmatpush1.bf16.msra.mxu0 0
        %1128 = vmatprep.mubr.bf16.mxu0 0
        %1129 = vmatmul.mubr.bf16.gmra.mrb[0].mxu0 %v1094
        %v1130 = vpop.f32.mrb[0].mxu0
        %v1131 = vadd.f32 0.0, %v1130
        %v1132 = vpop.f32.mrb[0].mxu0
        %v1133 = vpop.f32.mrb[0].mxu0
        %v1134 = vadd.f32 0.0, %v1133
        %v1135 = vpop.f32.mrb[0].mxu0
        %1136 = vdwg.mxu0
        %v1137 = vpack.c.bf16 %v1134, %v1131
        %v1139 = vunpack.c.l.b16 %v499
        %v1140 = vpack.c.b16 %v1139, %v1139
        %v1141 = vrot.slane %v1140, 2
        %v1143 = vsel %vm502, %v1137, 0
        %v1146 = vsel %vm753, %v1141, 0
        %1148 = vmatprep.subr.bf16.mxu0 0
        %1149 = vmatpush1.bf16.msra.mxu0 %v1146
        %1150 = vmatprep.subr.bf16.mxu0 0
        %1151 = vmatpush1.bf16.msra.mxu0 0
        %1152 = vmatprep.subr.bf16.mxu0 0
        %1153 = vmatpush1.bf16.msra.mxu0 0
        %1154 = vmatprep.subr.bf16.mxu0 0
        %1155 = vmatpush1.bf16.msra.mxu0 0
        %1156 = vmatprep.subr.bf16.mxu0 0
        %1157 = vmatpush1.bf16.msra.mxu0 0
        %1158 = vmatprep.subr.bf16.mxu0 0
        %1159 = vmatpush1.bf16.msra.mxu0 0
        %1160 = vmatprep.subr.bf16.mxu0 0
        %1161 = vmatpush1.bf16.msra.mxu0 0
        %1162 = vmatprep.subr.bf16.mxu0 0
        %1163 = vmatpush1.bf16.msra.mxu0 0
        %1164 = vmatprep.subr.bf16.mxu0 0
        %1165 = vmatpush1.bf16.msra.mxu0 0
        %1166 = vmatprep.subr.bf16.mxu0 0
        %1167 = vmatpush1.bf16.msra.mxu0 0
        %1168 = vmatprep.subr.bf16.mxu0 0
        %1169 = vmatpush1.bf16.msra.mxu0 0
        %1170 = vmatprep.subr.bf16.mxu0 0
        %1171 = vmatpush1.bf16.msra.mxu0 0
        %1172 = vmatprep.subr.bf16.mxu0 0
        %1173 = vmatpush1.bf16.msra.mxu0 0
        %1174 = vmatprep.subr.bf16.mxu0 0
        %1175 = vmatpush1.bf16.msra.mxu0 0
        %1176 = vmatprep.subr.bf16.mxu0 0
        %1177 = vmatpush1.bf16.msra.mxu0 0
        %1178 = vmatprep.subr.bf16.mxu0 0
        %1179 = vmatpush1.bf16.msra.mxu0 0
        %1180 = vmatprep.mubr.bf16.mxu0 0
        %1181 = vmatmul.mubr.bf16.gmra.mrb[0].mxu0 %v1143
        %v1182 = vpop.f32.mrb[0].mxu0
        %v1183 = vadd.f32 0.0, %v1182
        %v1184 = vpop.f32.mrb[0].mxu0
        %v1185 = vpop.f32.mrb[0].mxu0
        %v1186 = vadd.f32 0.0, %v1185
        %v1187 = vpop.f32.mrb[0].mxu0
        %1188 = vdwg.mxu0
        %v1189 = vadd.f32 %v1014, %v1183
        %v1190 = vadd.f32 %v1015, %v1186
        %1191 = vrot.lane.b32.xlu0 %v496, 112
        %v1192 = vpop.permute.xlu0 %1191
        %1193 = vrot.lane.b32.xlu0 %v497, 112
        %v1194 = vpop.permute.xlu0 %1193
        %v1196 = vsel %vm502, %v1192, 0
        %v1199 = vsel %vm502, %v1194, 0
        %1201 = vmatprep.subr.bf16.mxu0 0
        %1202 = vmatpush1.bf16.xpose.msra.mxu0 %v1199
        %1203 = vmatprep.subr.bf16.mxu0 0
        %1204 = vmatpush1.bf16.xpose.msra.mxu0 0
        %1205 = vmatprep.subr.bf16.mxu0 0
        %1206 = vmatpush1.bf16.xpose.msra.mxu0 0
        %1207 = vmatprep.subr.bf16.mxu0 0
        %1208 = vmatpush1.bf16.xpose.msra.mxu0 0
        %1209 = vmatprep.subr.bf16.mxu0 0
        %1210 = vmatpush1.bf16.xpose.msra.mxu0 0
        %1211 = vmatprep.subr.bf16.mxu0 0
        %1212 = vmatpush1.bf16.xpose.msra.mxu0 0
        %1213 = vmatprep.subr.bf16.mxu0 0
        %1214 = vmatpush1.bf16.xpose.msra.mxu0 0
        %1215 = vmatprep.subr.bf16.mxu0 0
        %1216 = vmatpush1.bf16.xpose.msra.mxu0 0
        %1217 = vmatprep.subr.bf16.mxu0 0
        %1218 = vmatpush1.bf16.xpose.msra.mxu0 0
        %1219 = vmatprep.subr.bf16.mxu0 0
        %1220 = vmatpush1.bf16.xpose.msra.mxu0 0
        %1221 = vmatprep.subr.bf16.mxu0 0
        %1222 = vmatpush1.bf16.xpose.msra.mxu0 0
        %1223 = vmatprep.subr.bf16.mxu0 0
        %1224 = vmatpush1.bf16.xpose.msra.mxu0 0
        %1225 = vmatprep.subr.bf16.mxu0 0
        %1226 = vmatpush1.bf16.xpose.msra.mxu0 0
        %1227 = vmatprep.subr.bf16.mxu0 0
        %1228 = vmatpush1.bf16.xpose.msra.mxu0 0
        %1229 = vmatprep.subr.bf16.mxu0 0
        %1230 = vmatpush1.bf16.xpose.msra.mxu0 0
        %1231 = vmatprep.subr.bf16.mxu0 0
        %1232 = vmatpush1.bf16.xpose.msra.mxu0 0
        %1233 = vmatprep.mubr.bf16.mxu0 0
        %1234 = vmatmul.mubr.bf16.gmra.mrb[0].mxu0 %v1196
        %v1235 = vpop.f32.mrb[0].mxu0
        %v1236 = vadd.f32 0.0, %v1235
        %v1237 = vpop.f32.mrb[0].mxu0
        %v1238 = vpop.f32.mrb[0].mxu0
        %v1239 = vadd.f32 0.0, %v1238
        %v1240 = vpop.f32.mrb[0].mxu0
        %1241 = vdwg.mxu0
        %v1242 = vsel %vm550, %v1236, -inf
        %1243 = vmax.xlane.f32.xlu0 %v1242
        %v1244 = vpop.xlane.xlu0 %1243
        %v1245 = vsel %vm550, %v1239, -inf
        %1246 = vmax.xlane.f32.xlu0 %v1245
        %v1247 = vpop.xlane.xlu0 %1246
        %v1248 = vsub.f32 %v1236, %v1244
        %v1249 = vsub.f32 %v1239, %v1247
        %v1250 = vmul.f32 %v1248, 1.442695
        %v1251 = vpow.pop %v1250
        %v1252 = vmul.f32 %v1249, 1.442695
        %v1253 = vpow.pop %v1252
        %v1254 = vsel %vm550, %v1251, 0.0
        %1255 = vadd.xlane.f32.xlu0 %v1254
        %v1256 = vpop.xlane.xlu0 %1255
        %v1257 = vsel %vm550, %v1253, 0.0
        %1258 = vadd.xlane.f32.xlu0 %v1257
        %v1259 = vpop.xlane.xlu0 %1258
        %v1260 = vrcp.pop %v1256
        %v1261 = vrcp.pop %v1259
        %v1262 = vmul.f32 %v1251, %v1260
        %v1263 = vmul.f32 %v1253, %v1261
        %v1264 = vpack.c.bf16 %v1263, %v1262
        %1265 = vrot.lane.b32.xlu0 %v497, 80
        %v1266 = vpop.permute.xlu0 %1265
        %v1269 = vsel %vm550, %v1264, 0
        %1271 = vmatprep.subr.bf16.mxu0 0
        %1272 = vmatpush1.bf16.msra.mxu0 %v1266
        %1273 = vmatprep.subr.bf16.mxu0 0
        %1274 = vmatpush1.bf16.msra.mxu0 0
        %1275 = vmatprep.subr.bf16.mxu0 0
        %1276 = vmatpush1.bf16.msra.mxu0 0
        %1277 = vmatprep.subr.bf16.mxu0 0
        %1278 = vmatpush1.bf16.msra.mxu0 0
        %1279 = vmatprep.subr.bf16.mxu0 0
        %1280 = vmatpush1.bf16.msra.mxu0 0
        %1281 = vmatprep.subr.bf16.mxu0 0
        %1282 = vmatpush1.bf16.msra.mxu0 0
        %1283 = vmatprep.subr.bf16.mxu0 0
        %1284 = vmatpush1.bf16.msra.mxu0 0
        %1285 = vmatprep.subr.bf16.mxu0 0
        %1286 = vmatpush1.bf16.msra.mxu0 0
        %1287 = vmatprep.subr.bf16.mxu0 0
        %1288 = vmatpush1.bf16.msra.mxu0 0
        %1289 = vmatprep.subr.bf16.mxu0 0
        %1290 = vmatpush1.bf16.msra.mxu0 0
        %1291 = vmatprep.subr.bf16.mxu0 0
        %1292 = vmatpush1.bf16.msra.mxu0 0
        %1293 = vmatprep.subr.bf16.mxu0 0
        %1294 = vmatpush1.bf16.msra.mxu0 0
        %1295 = vmatprep.subr.bf16.mxu0 0
        %1296 = vmatpush1.bf16.msra.mxu0 0
        %1297 = vmatprep.subr.bf16.mxu0 0
        %1298 = vmatpush1.bf16.msra.mxu0 0
        %1299 = vmatprep.subr.bf16.mxu0 0
        %1300 = vmatpush1.bf16.msra.mxu0 0
        %1301 = vmatprep.subr.bf16.mxu0 0
        %1302 = vmatpush1.bf16.msra.mxu0 0
        %1303 = vmatprep.mubr.bf16.mxu0 0
        %1304 = vmatmul.mubr.bf16.gmra.mrb[0].mxu0 %v1269
        %v1305 = vpop.f32.mrb[0].mxu0
        %v1306 = vadd.f32 0.0, %v1305
        %v1307 = vpop.f32.mrb[0].mxu0
        %v1308 = vpop.f32.mrb[0].mxu0
        %v1309 = vadd.f32 0.0, %v1308
        %v1310 = vpop.f32.mrb[0].mxu0
        %1311 = vdwg.mxu0
        %v1312 = vpack.c.bf16 %v1309, %v1306
        %v1314 = vsel %vm502, %v1312, 0
        %v1317 = vsel %vm753, %v500, 0
        %1319 = vmatprep.subr.bf16.mxu0 0
        %1320 = vmatpush1.bf16.msra.mxu0 %v1317
        %1321 = vmatprep.subr.bf16.mxu0 0
        %1322 = vmatpush1.bf16.msra.mxu0 0
        %1323 = vmatprep.subr.bf16.mxu0 0
        %1324 = vmatpush1.bf16.msra.mxu0 0
        %1325 = vmatprep.subr.bf16.mxu0 0
        %1326 = vmatpush1.bf16.msra.mxu0 0
        %1327 = vmatprep.subr.bf16.mxu0 0
        %1328 = vmatpush1.bf16.msra.mxu0 0
        %1329 = vmatprep.subr.bf16.mxu0 0
        %1330 = vmatpush1.bf16.msra.mxu0 0
        %1331 = vmatprep.subr.bf16.mxu0 0
        %1332 = vmatpush1.bf16.msra.mxu0 0
        %1333 = vmatprep.subr.bf16.mxu0 0
        %1334 = vmatpush1.bf16.msra.mxu0 0
        %1335 = vmatprep.subr.bf16.mxu0 0
        %1336 = vmatpush1.bf16.msra.mxu0 0
        %1337 = vmatprep.subr.bf16.mxu0 0
        %1338 = vmatpush1.bf16.msra.mxu0 0
        %1339 = vmatprep.subr.bf16.mxu0 0
        %1340 = vmatpush1.bf16.msra.mxu0 0
        %1341 = vmatprep.subr.bf16.mxu0 0
        %1342 = vmatpush1.bf16.msra.mxu0 0
        %1343 = vmatprep.subr.bf16.mxu0 0
        %1344 = vmatpush1.bf16.msra.mxu0 0
        %1345 = vmatprep.subr.bf16.mxu0 0
        %1346 = vmatpush1.bf16.msra.mxu0 0
        %1347 = vmatprep.subr.bf16.mxu0 0
        %1348 = vmatpush1.bf16.msra.mxu0 0
        %1349 = vmatprep.subr.bf16.mxu0 0
        %1350 = vmatpush1.bf16.msra.mxu0 0
        %1351 = vmatprep.mubr.bf16.mxu0 0
        %1352 = vmatmul.mubr.bf16.gmra.mrb[0].mxu0 %v1314
        %v1353 = vpop.f32.mrb[0].mxu0
        %v1354 = vadd.f32 0.0, %v1353
        %v1355 = vpop.f32.mrb[0].mxu0
        %v1356 = vpop.f32.mrb[0].mxu0
        %v1357 = vadd.f32 0.0, %v1356
        %v1358 = vpop.f32.mrb[0].mxu0
        %1359 = vdwg.mxu0
        %v1360 = vadd.f32 %v1189, %v1354
        %v1361 = vadd.f32 %v1190, %v1357
        %1362 = vrot.lane.b32.xlu0 %v496, 108
        %v1363 = vpop.permute.xlu0 %1362
        %1364 = vrot.lane.b32.xlu0 %v497, 108
        %v1365 = vpop.permute.xlu0 %1364
        %v1367 = vsel %vm502, %v1363, 0
        %v1370 = vsel %vm502, %v1365, 0
        %1372 = vmatprep.subr.bf16.mxu0 0
        %1373 = vmatpush1.bf16.xpose.msra.mxu0 %v1370
        %1374 = vmatprep.subr.bf16.mxu0 0
        %1375 = vmatpush1.bf16.xpose.msra.mxu0 0
        %1376 = vmatprep.subr.bf16.mxu0 0
        %1377 = vmatpush1.bf16.xpose.msra.mxu0 0
        %1378 = vmatprep.subr.bf16.mxu0 0
        %1379 = vmatpush1.bf16.xpose.msra.mxu0 0
        %1380 = vmatprep.subr.bf16.mxu0 0
        %1381 = vmatpush1.bf16.xpose.msra.mxu0 0
        %1382 = vmatprep.subr.bf16.mxu0 0
        %1383 = vmatpush1.bf16.xpose.msra.mxu0 0
        %1384 = vmatprep.subr.bf16.mxu0 0
        %1385 = vmatpush1.bf16.xpose.msra.mxu0 0
        %1386 = vmatprep.subr.bf16.mxu0 0
        %1387 = vmatpush1.bf16.xpose.msra.mxu0 0
        %1388 = vmatprep.subr.bf16.mxu0 0
        %1389 = vmatpush1.bf16.xpose.msra.mxu0 0
        %1390 = vmatprep.subr.bf16.mxu0 0
        %1391 = vmatpush1.bf16.xpose.msra.mxu0 0
        %1392 = vmatprep.subr.bf16.mxu0 0
        %1393 = vmatpush1.bf16.xpose.msra.mxu0 0
        %1394 = vmatprep.subr.bf16.mxu0 0
        %1395 = vmatpush1.bf16.xpose.msra.mxu0 0
        %1396 = vmatprep.subr.bf16.mxu0 0
        %1397 = vmatpush1.bf16.xpose.msra.mxu0 0
        %1398 = vmatprep.subr.bf16.mxu0 0
        %1399 = vmatpush1.bf16.xpose.msra.mxu0 0
        %1400 = vmatprep.subr.bf16.mxu0 0
        %1401 = vmatpush1.bf16.xpose.msra.mxu0 0
        %1402 = vmatprep.subr.bf16.mxu0 0
        %1403 = vmatpush1.bf16.xpose.msra.mxu0 0
        %1404 = vmatprep.mubr.bf16.mxu0 0
        %1405 = vmatmul.mubr.bf16.gmra.mrb[0].mxu0 %v1367
        %v1406 = vpop.f32.mrb[0].mxu0
        %v1407 = vadd.f32 0.0, %v1406
        %v1408 = vpop.f32.mrb[0].mxu0
        %v1409 = vpop.f32.mrb[0].mxu0
        %v1410 = vadd.f32 0.0, %v1409
        %v1411 = vpop.f32.mrb[0].mxu0
        %1412 = vdwg.mxu0
        %v1413 = vsel %vm550, %v1407, -inf
        %1414 = vmax.xlane.f32.xlu0 %v1413
        %v1415 = vpop.xlane.xlu0 %1414
        %v1416 = vsel %vm550, %v1410, -inf
        %1417 = vmax.xlane.f32.xlu0 %v1416
        %v1418 = vpop.xlane.xlu0 %1417
        %v1419 = vsub.f32 %v1407, %v1415
        %v1420 = vsub.f32 %v1410, %v1418
        %v1421 = vmul.f32 %v1419, 1.442695
        %v1422 = vpow.pop %v1421
        %v1423 = vmul.f32 %v1420, 1.442695
        %v1424 = vpow.pop %v1423
        %v1425 = vsel %vm550, %v1422, 0.0
        %1426 = vadd.xlane.f32.xlu0 %v1425
        %v1427 = vpop.xlane.xlu0 %1426
        %v1428 = vsel %vm550, %v1424, 0.0
        %1429 = vadd.xlane.f32.xlu0 %v1428
        %v1430 = vpop.xlane.xlu0 %1429
        %v1431 = vrcp.pop %v1427
        %v1432 = vrcp.pop %v1430
        %v1433 = vmul.f32 %v1422, %v1431
        %v1434 = vmul.f32 %v1424, %v1432
        %v1435 = vpack.c.bf16 %v1434, %v1433
        %1436 = vrot.lane.b32.xlu0 %v497, 76
        %v1437 = vpop.permute.xlu0 %1436
        %v1440 = vsel %vm550, %v1435, 0
        %1442 = vmatprep.subr.bf16.mxu0 0
        %1443 = vmatpush1.bf16.msra.mxu0 %v1437
        %1444 = vmatprep.subr.bf16.mxu0 0
        %1445 = vmatpush1.bf16.msra.mxu0 0
        %1446 = vmatprep.subr.bf16.mxu0 0
        %1447 = vmatpush1.bf16.msra.mxu0 0
        %1448 = vmatprep.subr.bf16.mxu0 0
        %1449 = vmatpush1.bf16.msra.mxu0 0
        %1450 = vmatprep.subr.bf16.mxu0 0
        %1451 = vmatpush1.bf16.msra.mxu0 0
        %1452 = vmatprep.subr.bf16.mxu0 0
        %1453 = vmatpush1.bf16.msra.mxu0 0
        %1454 = vmatprep.subr.bf16.mxu0 0
        %1455 = vmatpush1.bf16.msra.mxu0 0
        %1456 = vmatprep.subr.bf16.mxu0 0
        %1457 = vmatpush1.bf16.msra.mxu0 0
        %1458 = vmatprep.subr.bf16.mxu0 0
        %1459 = vmatpush1.bf16.msra.mxu0 0
        %1460 = vmatprep.subr.bf16.mxu0 0
        %1461 = vmatpush1.bf16.msra.mxu0 0
        %1462 = vmatprep.subr.bf16.mxu0 0
        %1463 = vmatpush1.bf16.msra.mxu0 0
        %1464 = vmatprep.subr.bf16.mxu0 0
        %1465 = vmatpush1.bf16.msra.mxu0 0
        %1466 = vmatprep.subr.bf16.mxu0 0
        %1467 = vmatpush1.bf16.msra.mxu0 0
        %1468 = vmatprep.subr.bf16.mxu0 0
        %1469 = vmatpush1.bf16.msra.mxu0 0
        %1470 = vmatprep.subr.bf16.mxu0 0
        %1471 = vmatpush1.bf16.msra.mxu0 0
        %1472 = vmatprep.subr.bf16.mxu0 0
        %1473 = vmatpush1.bf16.msra.mxu0 0
        %1474 = vmatprep.mubr.bf16.mxu0 0
        %1475 = vmatmul.mubr.bf16.gmra.mrb[0].mxu0 %v1440
        %v1476 = vpop.f32.mrb[0].mxu0
        %v1477 = vadd.f32 0.0, %v1476
        %v1478 = vpop.f32.mrb[0].mxu0
        %v1479 = vpop.f32.mrb[0].mxu0
        %v1480 = vadd.f32 0.0, %v1479
        %v1481 = vpop.f32.mrb[0].mxu0
        %1482 = vdwg.mxu0
        %v1483 = vpack.c.bf16 %v1480, %v1477
        %v1485 = vunpack.c.l.b16 %v500
        %v1486 = vpack.c.b16 %v1485, %v1485
        %v1487 = vrot.slane %v1486, 2
        %v1489 = vsel %vm502, %v1483, 0
        %v1492 = vsel %vm753, %v1487, 0
        %1494 = vmatprep.subr.bf16.mxu0 0
        %1495 = vmatpush1.bf16.msra.mxu0 %v1492
        %1496 = vmatprep.subr.bf16.mxu0 0
        %1497 = vmatpush1.bf16.msra.mxu0 0
        %1498 = vmatprep.subr.bf16.mxu0 0
        %1499 = vmatpush1.bf16.msra.mxu0 0
        %1500 = vmatprep.subr.bf16.mxu0 0
        %1501 = vmatpush1.bf16.msra.mxu0 0
        %1502 = vmatprep.subr.bf16.mxu0 0
        %1503 = vmatpush1.bf16.msra.mxu0 0
        %1504 = vmatprep.subr.bf16.mxu0 0
        %1505 = vmatpush1.bf16.msra.mxu0 0
        %1506 = vmatprep.subr.bf16.mxu0 0
        %1507 = vmatpush1.bf16.msra.mxu0 0
        %1508 = vmatprep.subr.bf16.mxu0 0
        %1509 = vmatpush1.bf16.msra.mxu0 0
        %1510 = vmatprep.subr.bf16.mxu0 0
        %1511 = vmatpush1.bf16.msra.mxu0 0
        %1512 = vmatprep.subr.bf16.mxu0 0
        %1513 = vmatpush1.bf16.msra.mxu0 0
        %1514 = vmatprep.subr.bf16.mxu0 0
        %1515 = vmatpush1.bf16.msra.mxu0 0
        %1516 = vmatprep.subr.bf16.mxu0 0
        %1517 = vmatpush1.bf16.msra.mxu0 0
        %1518 = vmatprep.subr.bf16.mxu0 0
        %1519 = vmatpush1.bf16.msra.mxu0 0
        %1520 = vmatprep.subr.bf16.mxu0 0
        %1521 = vmatpush1.bf16.msra.mxu0 0
        %1522 = vmatprep.subr.bf16.mxu0 0
        %1523 = vmatpush1.bf16.msra.mxu0 0
        %1524 = vmatprep.subr.bf16.mxu0 0
        %1525 = vmatpush1.bf16.msra.mxu0 0
        %1526 = vmatprep.mubr.bf16.mxu0 0
        %1527 = vmatmul.mubr.bf16.gmra.mrb[0].mxu0 %v1489
        %v1528 = vpop.f32.mrb[0].mxu0
        %v1529 = vadd.f32 0.0, %v1528
        %v1530 = vpop.f32.mrb[0].mxu0
        %v1531 = vpop.f32.mrb[0].mxu0
        %v1532 = vadd.f32 0.0, %v1531
        %v1533 = vpop.f32.mrb[0].mxu0
        %1534 = vdwg.mxu0
        %v1535 = vadd.f32 %v1360, %v1529
        %v1536 = vadd.f32 %v1361, %v1532
        %1537 = vrot.lane.b32.xlu0 %v496, 104
        %v1538 = vpop.permute.xlu0 %1537
        %1539 = vrot.lane.b32.xlu0 %v497, 104
        %v1540 = vpop.permute.xlu0 %1539
        %v1542 = vsel %vm502, %v1538, 0
        %v1545 = vsel %vm502, %v1540, 0
        %1547 = vmatprep.subr.bf16.mxu0 0
        %1548 = vmatpush1.bf16.xpose.msra.mxu0 %v1545
        %1549 = vmatprep.subr.bf16.mxu0 0
        %1550 = vmatpush1.bf16.xpose.msra.mxu0 0
        %1551 = vmatprep.subr.bf16.mxu0 0
        %1552 = vmatpush1.bf16.xpose.msra.mxu0 0
        %1553 = vmatprep.subr.bf16.mxu0 0
        %1554 = vmatpush1.bf16.xpose.msra.mxu0 0
        %1555 = vmatprep.subr.bf16.mxu0 0
        %1556 = vmatpush1.bf16.xpose.msra.mxu0 0
        %1557 = vmatprep.subr.bf16.mxu0 0
        %1558 = vmatpush1.bf16.xpose.msra.mxu0 0
        %1559 = vmatprep.subr.bf16.mxu0 0
        %1560 = vmatpush1.bf16.xpose.msra.mxu0 0
        %1561 = vmatprep.subr.bf16.mxu0 0
        %1562 = vmatpush1.bf16.xpose.msra.mxu0 0
        %1563 = vmatprep.subr.bf16.mxu0 0
        %1564 = vmatpush1.bf16.xpose.msra.mxu0 0
        %1565 = vmatprep.subr.bf16.mxu0 0
        %1566 = vmatpush1.bf16.xpose.msra.mxu0 0
        %1567 = vmatprep.subr.bf16.mxu0 0
        %1568 = vmatpush1.bf16.xpose.msra.mxu0 0
        %1569 = vmatprep.subr.bf16.mxu0 0
        %1570 = vmatpush1.bf16.xpose.msra.mxu0 0
        %1571 = vmatprep.subr.bf16.mxu0 0
        %1572 = vmatpush1.bf16.xpose.msra.mxu0 0
        %1573 = vmatprep.subr.bf16.mxu0 0
        %1574 = vmatpush1.bf16.xpose.msra.mxu0 0
        %1575 = vmatprep.subr.bf16.mxu0 0
        %1576 = vmatpush1.bf16.xpose.msra.mxu0 0
        %1577 = vmatprep.subr.bf16.mxu0 0
        %1578 = vmatpush1.bf16.xpose.msra.mxu0 0
        %1579 = vmatprep.mubr.bf16.mxu0 0
        %1580 = vmatmul.mubr.bf16.gmra.mrb[0].mxu0 %v1542
        %v1581 = vpop.f32.mrb[0].mxu0
        %v1582 = vadd.f32 0.0, %v1581
        %v1583 = vpop.f32.mrb[0].mxu0
        %v1584 = vpop.f32.mrb[0].mxu0
        %v1585 = vadd.f32 0.0, %v1584
        %v1586 = vpop.f32.mrb[0].mxu0
        %1587 = vdwg.mxu0
        %v1588 = vsel %vm550, %v1582, -inf
        %1589 = vmax.xlane.f32.xlu0 %v1588
        %v1590 = vpop.xlane.xlu0 %1589
        %v1591 = vsel %vm550, %v1585, -inf
        %1592 = vmax.xlane.f32.xlu0 %v1591
        %v1593 = vpop.xlane.xlu0 %1592
        %v1594 = vsub.f32 %v1582, %v1590
        %v1595 = vsub.f32 %v1585, %v1593
        %v1596 = vmul.f32 %v1594, 1.442695
        %v1597 = vpow.pop %v1596
        %v1598 = vmul.f32 %v1595, 1.442695
        %v1599 = vpow.pop %v1598
        %v1600 = vsel %vm550, %v1597, 0.0
        %1601 = vadd.xlane.f32.xlu0 %v1600
        %v1602 = vpop.xlane.xlu0 %1601
        %v1603 = vsel %vm550, %v1599, 0.0
        %1604 = vadd.xlane.f32.xlu0 %v1603
        %v1605 = vpop.xlane.xlu0 %1604
        %v1606 = vrcp.pop %v1602
        %v1607 = vrcp.pop %v1605
        %v1608 = vmul.f32 %v1597, %v1606
        %v1609 = vmul.f32 %v1599, %v1607
        %v1610 = vpack.c.bf16 %v1609, %v1608
        %1611 = vrot.lane.b32.xlu0 %v497, 72
        %v1612 = vpop.permute.xlu0 %1611
        %v1615 = vsel %vm550, %v1610, 0
        %1617 = vmatprep.subr.bf16.mxu0 0
        %1618 = vmatpush1.bf16.msra.mxu0 %v1612
        %1619 = vmatprep.subr.bf16.mxu0 0
        %1620 = vmatpush1.bf16.msra.mxu0 0
        %1621 = vmatprep.subr.bf16.mxu0 0
        %1622 = vmatpush1.bf16.msra.mxu0 0
        %1623 = vmatprep.subr.bf16.mxu0 0
        %1624 = vmatpush1.bf16.msra.mxu0 0
        %1625 = vmatprep.subr.bf16.mxu0 0
        %1626 = vmatpush1.bf16.msra.mxu0 0
        %1627 = vmatprep.subr.bf16.mxu0 0
        %1628 = vmatpush1.bf16.msra.mxu0 0
        %1629 = vmatprep.subr.bf16.mxu0 0
        %1630 = vmatpush1.bf16.msra.mxu0 0
        %1631 = vmatprep.subr.bf16.mxu0 0
        %1632 = vmatpush1.bf16.msra.mxu0 0
        %1633 = vmatprep.subr.bf16.mxu0 0
        %1634 = vmatpush1.bf16.msra.mxu0 0
        %1635 = vmatprep.subr.bf16.mxu0 0
        %1636 = vmatpush1.bf16.msra.mxu0 0
        %1637 = vmatprep.subr.bf16.mxu0 0
        %1638 = vmatpush1.bf16.msra.mxu0 0
        %1639 = vmatprep.subr.bf16.mxu0 0
        %1640 = vmatpush1.bf16.msra.mxu0 0
        %1641 = vmatprep.subr.bf16.mxu0 0
        %1642 = vmatpush1.bf16.msra.mxu0 0
        %1643 = vmatprep.subr.bf16.mxu0 0
        %1644 = vmatpush1.bf16.msra.mxu0 0
        %1645 = vmatprep.subr.bf16.mxu0 0
        %1646 = vmatpush1.bf16.msra.mxu0 0
        %1647 = vmatprep.subr.bf16.mxu0 0
        %1648 = vmatpush1.bf16.msra.mxu0 0
        %1649 = vmatprep.mubr.bf16.mxu0 0
        %1650 = vmatmul.mubr.bf16.gmra.mrb[0].mxu0 %v1615
        %v1651 = vpop.f32.mrb[0].mxu0
        %v1652 = vadd.f32 0.0, %v1651
        %v1653 = vpop.f32.mrb[0].mxu0
        %v1654 = vpop.f32.mrb[0].mxu0
        %v1655 = vadd.f32 0.0, %v1654
        %v1656 = vpop.f32.mrb[0].mxu0
        %1657 = vdwg.mxu0
        %v1658 = vpack.c.bf16 %v1655, %v1652
        %v1660 = vsel %vm502, %v1658, 0
        %v1663 = vsel %vm753, %v501, 0
        %1665 = vmatprep.subr.bf16.mxu0 0
        %1666 = vmatpush1.bf16.msra.mxu0 %v1663
        %1667 = vmatprep.subr.bf16.mxu0 0
        %1668 = vmatpush1.bf16.msra.mxu0 0
        %1669 = vmatprep.subr.bf16.mxu0 0
        %1670 = vmatpush1.bf16.msra.mxu0 0
        %1671 = vmatprep.subr.bf16.mxu0 0
        %1672 = vmatpush1.bf16.msra.mxu0 0
        %1673 = vmatprep.subr.bf16.mxu0 0
        %1674 = vmatpush1.bf16.msra.mxu0 0
        %1675 = vmatprep.subr.bf16.mxu0 0
        %1676 = vmatpush1.bf16.msra.mxu0 0
        %1677 = vmatprep.subr.bf16.mxu0 0
        %1678 = vmatpush1.bf16.msra.mxu0 0
        %1679 = vmatprep.subr.bf16.mxu0 0
        %1680 = vmatpush1.bf16.msra.mxu0 0
        %1681 = vmatprep.subr.bf16.mxu0 0
        %1682 = vmatpush1.bf16.msra.mxu0 0
        %1683 = vmatprep.subr.bf16.mxu0 0
        %1684 = vmatpush1.bf16.msra.mxu0 0
        %1685 = vmatprep.subr.bf16.mxu0 0
        %1686 = vmatpush1.bf16.msra.mxu0 0
        %1687 = vmatprep.subr.bf16.mxu0 0
        %1688 = vmatpush1.bf16.msra.mxu0 0
        %1689 = vmatprep.subr.bf16.mxu0 0
        %1690 = vmatpush1.bf16.msra.mxu0 0
        %1691 = vmatprep.subr.bf16.mxu0 0
        %1692 = vmatpush1.bf16.msra.mxu0 0
        %1693 = vmatprep.subr.bf16.mxu0 0
        %1694 = vmatpush1.bf16.msra.mxu0 0
        %1695 = vmatprep.subr.bf16.mxu0 0
        %1696 = vmatpush1.bf16.msra.mxu0 0
        %1697 = vmatprep.mubr.bf16.mxu0 0
        %1698 = vmatmul.mubr.bf16.gmra.mrb[0].mxu0 %v1660
        %v1699 = vpop.f32.mrb[0].mxu0
        %v1700 = vadd.f32 0.0, %v1699
        %v1701 = vpop.f32.mrb[0].mxu0
        %v1702 = vpop.f32.mrb[0].mxu0
        %v1703 = vadd.f32 0.0, %v1702
        %v1704 = vpop.f32.mrb[0].mxu0
        %1705 = vdwg.mxu0
        %v1706 = vadd.f32 %v1535, %v1700
        %v1707 = vadd.f32 %v1536, %v1703
        %1708 = vrot.lane.b32.xlu0 %v496, 100
        %v1709 = vpop.permute.xlu0 %1708
        %1710 = vrot.lane.b32.xlu0 %v497, 100
        %v1711 = vpop.permute.xlu0 %1710
        %v1713 = vsel %vm502, %v1709, 0
        %v1716 = vsel %vm502, %v1711, 0
        %1718 = vmatprep.subr.bf16.mxu0 0
        %1719 = vmatpush1.bf16.xpose.msra.mxu0 %v1716
        %1720 = vmatprep.subr.bf16.mxu0 0
        %1721 = vmatpush1.bf16.xpose.msra.mxu0 0
        %1722 = vmatprep.subr.bf16.mxu0 0
        %1723 = vmatpush1.bf16.xpose.msra.mxu0 0
        %1724 = vmatprep.subr.bf16.mxu0 0
        %1725 = vmatpush1.bf16.xpose.msra.mxu0 0
        %1726 = vmatprep.subr.bf16.mxu0 0
        %1727 = vmatpush1.bf16.xpose.msra.mxu0 0
        %1728 = vmatprep.subr.bf16.mxu0 0
        %1729 = vmatpush1.bf16.xpose.msra.mxu0 0
        %1730 = vmatprep.subr.bf16.mxu0 0
        %1731 = vmatpush1.bf16.xpose.msra.mxu0 0
        %1732 = vmatprep.subr.bf16.mxu0 0
        %1733 = vmatpush1.bf16.xpose.msra.mxu0 0
        %1734 = vmatprep.subr.bf16.mxu0 0
        %1735 = vmatpush1.bf16.xpose.msra.mxu0 0
        %1736 = vmatprep.subr.bf16.mxu0 0
        %1737 = vmatpush1.bf16.xpose.msra.mxu0 0
        %1738 = vmatprep.subr.bf16.mxu0 0
        %1739 = vmatpush1.bf16.xpose.msra.mxu0 0
        %1740 = vmatprep.subr.bf16.mxu0 0
        %1741 = vmatpush1.bf16.xpose.msra.mxu0 0
        %1742 = vmatprep.subr.bf16.mxu0 0
        %1743 = vmatpush1.bf16.xpose.msra.mxu0 0
        %1744 = vmatprep.subr.bf16.mxu0 0
        %1745 = vmatpush1.bf16.xpose.msra.mxu0 0
        %1746 = vmatprep.subr.bf16.mxu0 0
        %1747 = vmatpush1.bf16.xpose.msra.mxu0 0
        %1748 = vmatprep.subr.bf16.mxu0 0
        %1749 = vmatpush1.bf16.xpose.msra.mxu0 0
        %1750 = vmatprep.mubr.bf16.mxu0 0
        %1751 = vmatmul.mubr.bf16.gmra.mrb[0].mxu0 %v1713
        %v1752 = vpop.f32.mrb[0].mxu0
        %v1753 = vadd.f32 0.0, %v1752
        %v1754 = vpop.f32.mrb[0].mxu0
        %v1755 = vpop.f32.mrb[0].mxu0
        %v1756 = vadd.f32 0.0, %v1755
        %v1757 = vpop.f32.mrb[0].mxu0
        %1758 = vdwg.mxu0
        %v1759 = vsel %vm550, %v1753, -inf
        %1760 = vmax.xlane.f32.xlu0 %v1759
        %v1761 = vpop.xlane.xlu0 %1760
        %v1762 = vsel %vm550, %v1756, -inf
        %1763 = vmax.xlane.f32.xlu0 %v1762
        %v1764 = vpop.xlane.xlu0 %1763
        %v1765 = vsub.f32 %v1753, %v1761
        %v1766 = vsub.f32 %v1756, %v1764
        %v1767 = vmul.f32 %v1765, 1.442695
        %v1768 = vpow.pop %v1767
        %v1769 = vmul.f32 %v1766, 1.442695
        %v1770 = vpow.pop %v1769
        %v1771 = vsel %vm550, %v1768, 0.0
        %1772 = vadd.xlane.f32.xlu0 %v1771
        %v1773 = vpop.xlane.xlu0 %1772
        %v1774 = vsel %vm550, %v1770, 0.0
        %1775 = vadd.xlane.f32.xlu0 %v1774
        %v1776 = vpop.xlane.xlu0 %1775
        %v1777 = vrcp.pop %v1773
        %v1778 = vrcp.pop %v1776
        %v1779 = vmul.f32 %v1768, %v1777
        %v1780 = vmul.f32 %v1770, %v1778
        %v1781 = vpack.c.bf16 %v1780, %v1779
        %1782 = vrot.lane.b32.xlu0 %v497, 68
        %v1783 = vpop.permute.xlu0 %1782
        %v1786 = vsel %vm550, %v1781, 0
        %1788 = vmatprep.subr.bf16.mxu0 0
        %1789 = vmatpush1.bf16.msra.mxu0 %v1783
        %1790 = vmatprep.subr.bf16.mxu0 0
        %1791 = vmatpush1.bf16.msra.mxu0 0
        %1792 = vmatprep.subr.bf16.mxu0 0
        %1793 = vmatpush1.bf16.msra.mxu0 0
        %1794 = vmatprep.subr.bf16.mxu0 0
        %1795 = vmatpush1.bf16.msra.mxu0 0
        %1796 = vmatprep.subr.bf16.mxu0 0
        %1797 = vmatpush1.bf16.msra.mxu0 0
        %1798 = vmatprep.subr.bf16.mxu0 0
        %1799 = vmatpush1.bf16.msra.mxu0 0
        %1800 = vmatprep.subr.bf16.mxu0 0
        %1801 = vmatpush1.bf16.msra.mxu0 0
        %1802 = vmatprep.subr.bf16.mxu0 0
        %1803 = vmatpush1.bf16.msra.mxu0 0
        %1804 = vmatprep.subr.bf16.mxu0 0
        %1805 = vmatpush1.bf16.msra.mxu0 0
        %1806 = vmatprep.subr.bf16.mxu0 0
        %1807 = vmatpush1.bf16.msra.mxu0 0
        %1808 = vmatprep.subr.bf16.mxu0 0
        %1809 = vmatpush1.bf16.msra.mxu0 0
        %1810 = vmatprep.subr.bf16.mxu0 0
        %1811 = vmatpush1.bf16.msra.mxu0 0
        %1812 = vmatprep.subr.bf16.mxu0 0
        %1813 = vmatpush1.bf16.msra.mxu0 0
        %1814 = vmatprep.subr.bf16.mxu0 0
        %1815 = vmatpush1.bf16.msra.mxu0 0
        %1816 = vmatprep.subr.bf16.mxu0 0
        %1817 = vmatpush1.bf16.msra.mxu0 0
        %1818 = vmatprep.subr.bf16.mxu0 0
        %1819 = vmatpush1.bf16.msra.mxu0 0
        %1820 = vmatprep.mubr.bf16.mxu0 0
        %1821 = vmatmul.mubr.bf16.gmra.mrb[0].mxu0 %v1786
        %v1822 = vpop.f32.mrb[0].mxu0
        %v1823 = vadd.f32 0.0, %v1822
        %v1824 = vpop.f32.mrb[0].mxu0
        %v1825 = vpop.f32.mrb[0].mxu0
        %v1826 = vadd.f32 0.0, %v1825
        %v1827 = vpop.f32.mrb[0].mxu0
        %1828 = vdwg.mxu0
        %v1829 = vpack.c.bf16 %v1826, %v1823
        %v1831 = vunpack.c.l.b16 %v501
        %v1832 = vpack.c.b16 %v1831, %v1831
        %v1833 = vrot.slane %v1832, 2
        %v1835 = vsel %vm502, %v1829, 0
        %v1838 = vsel %vm753, %v1833, 0
        %1840 = vmatprep.subr.bf16.mxu0 0
        %1841 = vmatpush1.bf16.msra.mxu0 %v1838
        %1842 = vmatprep.subr.bf16.mxu0 0
        %1843 = vmatpush1.bf16.msra.mxu0 0
        %1844 = vmatprep.subr.bf16.mxu0 0
        %1845 = vmatpush1.bf16.msra.mxu0 0
        %1846 = vmatprep.subr.bf16.mxu0 0
        %1847 = vmatpush1.bf16.msra.mxu0 0
        %1848 = vmatprep.subr.bf16.mxu0 0
        %1849 = vmatpush1.bf16.msra.mxu0 0
        %1850 = vmatprep.subr.bf16.mxu0 0
        %1851 = vmatpush1.bf16.msra.mxu0 0
        %1852 = vmatprep.subr.bf16.mxu0 0
        %1853 = vmatpush1.bf16.msra.mxu0 0
        %1854 = vmatprep.subr.bf16.mxu0 0
        %1855 = vmatpush1.bf16.msra.mxu0 0
        %1856 = vmatprep.subr.bf16.mxu0 0
        %1857 = vmatpush1.bf16.msra.mxu0 0
        %1858 = vmatprep.subr.bf16.mxu0 0
        %1859 = vmatpush1.bf16.msra.mxu0 0
        %1860 = vmatprep.subr.bf16.mxu0 0
        %1861 = vmatpush1.bf16.msra.mxu0 0
        %1862 = vmatprep.subr.bf16.mxu0 0
        %1863 = vmatpush1.bf16.msra.mxu0 0
        %1864 = vmatprep.subr.bf16.mxu0 0
        %1865 = vmatpush1.bf16.msra.mxu0 0
        %1866 = vmatprep.subr.bf16.mxu0 0
        %1867 = vmatpush1.bf16.msra.mxu0 0
        %1868 = vmatprep.subr.bf16.mxu0 0
        %1869 = vmatpush1.bf16.msra.mxu0 0
        %1870 = vmatprep.subr.bf16.mxu0 0
        %1871 = vmatpush1.bf16.msra.mxu0 0
        %1872 = vmatprep.mubr.bf16.mxu0 0
        %1873 = vmatmul.mubr.bf16.gmra.mrb[0].mxu0 %v1835
        %v1874 = vpop.f32.mrb[0].mxu0
        %v1875 = vadd.f32 0.0, %v1874
        %v1876 = vpop.f32.mrb[0].mxu0
        %v1877 = vpop.f32.mrb[0].mxu0
        %v1878 = vadd.f32 0.0, %v1877
        %v1879 = vpop.f32.mrb[0].mxu0
        %1880 = vdwg.mxu0
        %v1881 = vadd.f32 %v1706, %v1875
        %v1882 = vadd.f32 %v1707, %v1878
        %v1883 = vld [vmem:[%s5] sm:$0x1]
        %v1885 = vlaneseq
        %v1886 = vshrl.u32 %v1885, 7
        %v1887 = vsub.s32 0, %v1886
        %v1888 = vrot.slane %v1883, %v1887
        %v1890 = vadd.f32 %v1881, %v1888
        %v1891 = vadd.f32 %v1882, %v1888
        %1892 = vst.msk [vmem:[%s349] sm:$0xff] %vm451, %v1890
        %1893 = vst.msk [vmem:[%s349 + $0x8] sm:$0xff] %vm451, %v1891
        %s1894 = sand.u32 %s183, 1
        %s1895 = scalar_lea.sflag [#allocation5], %s1894
        %s1896 = sand.u32 %s183, 1
        %s1897 = smul.addr %s1896, 16
        %s1898 = scalar_lea.vmem [#allocation12], %s1897
        // Predicated region
        $region69: #{tpu_custom_call.1} parent=43 // pred_check
          %p1899 = pneg %p193
        $region70: #{tpu_custom_call.1} parent=43 // pred_check_branch
          %1901 = sbr.rel (%p1899) target = $region72
        $region71: #{tpu_custom_call.1} parent=43 // pred_region
          %s1902 = smul.u32 2, %s30
          %s1904 = ssub.s32 256, 256
          %1905 = vsyncadd %s1895, %s1904
          %s1906 = smul.addr %s29, 2
          %s1907 = sadd.s32 %s1902, %s1906
          %s1908 = smul.addr %s1907, 128
          %s1909 = scalar_lea.hbm %s6, %s1908
          %s1910 = sshll.u32 %s1898, 4
          %s1911 = int_to_ptr.vmem [resolvable:$true] %s1910
          %1916 = dma.vmem_to_hbm [thread:$0]  %s1911, 256, %s1909, %s1895, 128, 128, 8
        $region72: #{tpu_custom_call.1} parent=43 // pred_fallthru
          _
      $region44: #{tpu_custom_call.1} parent=5 // pred_fallthru
        _
      %p1917 = scmp.le.s32.totalorder 2, %s20
      // Predicated region
      $region73: #{tpu_custom_call.1} parent=5 // pred_check
        %p1918 = pneg %p1917
      $region74: #{tpu_custom_call.1} parent=5 // pred_check_branch
        %1920 = sbr.rel (%p1918) target = $region76
      $region75: #{tpu_custom_call.1} parent=5 // pred_region
        %s1921 = ssub.s32 %s20, 2
        // Predicated region
        $region77: #{tpu_custom_call.1} parent=75 // pred_check
          %p1922 = pneg %p199
        $region78: #{tpu_custom_call.1} parent=75 // pred_check_branch
          %1924 = sbr.rel (%p1922) target = $region80
        $region79: #{tpu_custom_call.1} parent=75 // pred_region
          %s1925 = sand.u32 %s184, 1
          %s1926 = scalar_lea.sflag [#allocation5], %s1925
          %s1927 = sand.u32 %s184, 1
          %s1928 = smul.addr %s1927, 16
          %s1929 = scalar_lea.vmem [#allocation12], %s1928
          %1930 = dma.done %s1926, 256
        $region80: #{tpu_custom_call.1} parent=75 // pred_fallthru
          _
      $region76: #{tpu_custom_call.1} parent=5 // pred_fallthru
        _
    $region6: #{tpu_custom_call.1} parent=1 // loop_footer
      %s24 = sadd.s32 1, %s20
    $region7: #{tpu_custom_call.1} parent=1 // loop_footer_branch
      %19 = sbr.rel target = $region3
    $region8: #{tpu_custom_call.1} parent=1 // loop_exit
      _
    %1931 = vsyncpa [#allocation4], 1
    %s1932 = scalar_lea.sflag [#allocation4], 1
    %1933 = vsyncpa %s1932, 1
    %1934 = vsyncpa [#allocation7], 1
    %s1935 = scalar_lea.sflag [#allocation7], 1
    %1936 = vsyncpa %s1935, 1
    %1937 = vsyncpa [#allocation10], 1
    %1938 = vsyncpa [#allocation5], 1
    %s1939 = scalar_lea.sflag [#allocation5], 1
    %1940 = vsyncpa %s1939, 1

// kernel: tpu_custom_call.1
$region0: #{tpu_custom_call.1}
  #allocation0 [shape = 'u32[]', space=smem, size = 0x4, offset = 0x4, fixed_abs, tag = 'smem constant byte address 0x4 - core index']
  #allocation1 [shape = 'u32[144,128]{1,0:T(1,128)}', space=vmem, size = 0x12000, scoped, tag = 'internal scratch']
  #allocation2 [shape = 'bf16[16,64]{1,0:T(16,128)(2,1)}', space=vmem, size = 0x1000, scoped, tag = 'scratch operand']
  %s0 = inlined_call_operand.hbm [shape: bf16[16,32], index: 0, kind: input, shape index: {}]
  %s1 = inlined_call_operand.hbm [shape: bf16[2,16,32], index: 1, kind: input, shape index: {}]
  %s2 = inlined_call_operand.hbm [shape: bf16[32,32], index: 2, kind: input, shape index: {}]
  %s3 = inlined_call_operand.hbm [shape: bf16[32,64], index: 3, kind: input, shape index: {}]
  %s4 = inlined_call_operand.hbm [shape: bf16[32,32], index: 4, kind: input, shape index: {}]
  %s5 = inlined_call_operand.vmem [shape: f32[1,32], index: 5, kind: input, shape index: {}]
  %s6 = inlined_call_operand.hbm [shape: f32[2,16,32], index: 6, kind: output, shape index: {}]
  %s7 = sld [smem:[#allocation0]]
  $region81: #{tpu_custom_call.1} parent=0
    _
  %s9 = ssub.s32 1, %s7
  %s10 = scalar_select 0, %s9, %s7
  $region1: #{tpu_custom_call.1} parent=0
    #allocation3 [shape = 'u8[4096]{0}', space=vmem, size = 0x1000, scoped, tag = 'input window, operand 0, single buffered']
    #allocation4 [shape = 's32[2]{0}', space=sflag, size = 0x8, scoped, tag = 'scoped memory for tpu_custom_call.1']
    #allocation5 [shape = 's32[2]{0}', space=sflag, size = 0x8, scoped, tag = 'scoped memory for tpu_custom_call.1']
    #allocation6 [shape = 'u8[8192]{0}', space=vmem, size = 0x2000, scoped, tag = 'input window, operand 1']
    #allocation7 [shape = 's32[2]{0}', space=sflag, size = 0x8, scoped, tag = 'scoped memory for tpu_custom_call.1']
    #allocation8 [shape = 'u8[8192]{0}', space=vmem, size = 0x2000, scoped, tag = 'input window, operand 2, single buffered']
    #allocation9 [shape = 'u8[8192]{0}', space=vmem, size = 0x2000, scoped, tag = 'input window, operand 3, single buffered']
    #allocation10 [shape = 's32[1]{0}', space=sflag, size = 0x4, scoped, tag = 'scoped memory for tpu_custom_call.1']
    #allocation11 [shape = 'u8[8192]{0}', space=vmem, size = 0x2000, scoped, tag = 'input window, operand 4, single buffered']
    #allocation12 [shape = 'u8[16384]{0}', space=vmem, size = 0x4000, scoped, tag = 'output window, operand 0']
    %11 = vsyncpa [#allocation4], 0
    %12 = vsyncpa [#allocation7], 0
    %s13 = scalar_lea.sflag [#allocation7], 1
    %14 = vsyncpa %s13, 0
    %15 = vsyncpa [#allocation10], 0
    %16 = vsyncpa [#allocation5], 0
    %s17 = scalar_lea.sflag [#allocation5], 1
    %18 = vsyncpa %s17, 0
    loop: start=0, step=1, limit=4
    $region2: #{tpu_custom_call.1} parent=1 // loop_pre_header
      _
    $region3: #{tpu_custom_call.1} parent=1 // loop_header
      %s20 = sphi 0, %s24
      %p21 = scmp.ge.s32.totalorder %s20, 4
      %s27 = sphi 0, %s39
      %s28 = sphi 0, %s35
      %s29 = sphi 0, %s27
      %s30 = sphi 0, %s28
      %s31 = sphi 0, %s29
      %s32 = sphi 0, %s30
      %s42 = sphi 0, %s44
      %s45 = sphi 0, %s42
      %s46 = sphi 0, %s45
      %s62 = sphi 0, %s46
      %s68 = sphi 0, %s70
      %s71 = sphi 0, %s68
      %s72 = sphi 0, %s71
      %s88 = sphi 0, %s72
      %s92 = sphi 0, %s92
      %s94 = sphi 0, %s92
      %s95 = sphi 0, %s94
      %s109 = sphi 0, %s95
      %s113 = sphi 0, %s113
      %s115 = sphi 0, %s113
      %s116 = sphi 0, %s115
      %s130 = sphi 0, %s116
      %s134 = sphi 0, %s134
      %s136 = sphi 0, %s134
      %s137 = sphi 0, %s136
      %s151 = sphi 0, %s137
      %s155 = sphi 0, %s155
      %s157 = sphi 0, %s155
      %s158 = sphi 0, %s157
      %s172 = sphi 0, %s158
      %s180 = sphi 0, %s182
      %s183 = sphi 0, %s180
      %s184 = sphi 0, %s183
      %s200 = sphi 0, %s184
    $region4: #{tpu_custom_call.1} parent=1 // loop_header_branch
      %23 = sbr.rel (%p21) target = $region8
    $region5: #{tpu_custom_call.1} parent=1 // loop_body
      %s25 = ssub.s32 %s20, 1
      %s26 = ssub.s32 %s20, 2
      %s33 = sadd.s32 1, %s28
      %p34 = scmp.ge.s32.totalorder %s33, 1
      %s35 = scalar_select %p34, 0, %s33
      %s36 = sadd.s32 1, %s27
      %s37 = scalar_select %p34, %s36, %s27
      %p38 = scmp.ge.s32.totalorder %s37, 2
      %s39 = scalar_select %p38, 0, %s37
      %s40 = ssub.s32 %s28, %s35
      %p41 = scmp.eq.s32.totalorder %s40, 0
      %s43 = sadd.s32 %s42, 1
      %s44 = scalar_select %p41, %s42, %s43
      %p47 = pneg %p41
      %p48 = scmp.eq.s32.totalorder %s20, 1
      %p49 = por %p47, %p48
      %p50 = scmp.ne.s32.totalorder %s42, %s45
      %p51 = scmp.eq.s32.totalorder %s20, 0
      %p52 = por %p50, %p51
      %p53 = scmp.ne.s32.totalorder %s42, %s45
      %p54 = scmp.eq.s32.totalorder %s25, 1
      %p55 = por %p53, %p54
      %p56 = scmp.ne.s32.totalorder %s45, %s46
      %p57 = scmp.eq.s32.totalorder %s25, 0
      %p58 = por %p56, %p57
      %p59 = scmp.ne.s32.totalorder %s45, %s46
      %p60 = scmp.eq.s32.totalorder %s26, 1
      %p61 = por %p59, %p60
      %p63 = scmp.ne.s32.totalorder %s46, %s62
      %p64 = scmp.eq.s32.totalorder %s26, 0
      %p65 = por %p63, %p64
      %s66 = ssub.s32 %s27, %s39
      %p67 = scmp.eq.s32.totalorder %s66, 0
      %s69 = sadd.s32 %s68, 1
      %s70 = scalar_select %p67, %s68, %s69
      %p73 = pneg %p67
      %p74 = scmp.eq.s32.totalorder %s20, 1
      %p75 = por %p73, %p74
      %p76 = scmp.ne.s32.totalorder %s68, %s71
      %p77 = scmp.eq.s32.totalorder %s20, 0
      %p78 = por %p76, %p77
      %p79 = scmp.ne.s32.totalorder %s68, %s71
      %p80 = scmp.eq.s32.totalorder %s25, 1
      %p81 = por %p79, %p80
      %p82 = scmp.ne.s32.totalorder %s71, %s72
      %p83 = scmp.eq.s32.totalorder %s25, 0
      %p84 = por %p82, %p83
      %p85 = scmp.ne.s32.totalorder %s71, %s72
      %p86 = scmp.eq.s32.totalorder %s26, 1
      %p87 = por %p85, %p86
      %p89 = scmp.ne.s32.totalorder %s72, %s88
      %p90 = scmp.eq.s32.totalorder %s26, 0
      %p91 = por %p89, %p90
      %s93 = sadd.s32 %s92, 1
      %p96 = scmp.eq.s32.totalorder %s20, 1
      %p97 = scmp.ne.s32.totalorder %s92, %s94
      %p98 = scmp.eq.s32.totalorder %s20, 0
      %p99 = por %p97, %p98
      %p100 = scmp.ne.s32.totalorder %s92, %s94
      %p101 = scmp.eq.s32.totalorder %s25, 1
      %p102 = por %p100, %p101
      %p103 = scmp.ne.s32.totalorder %s94, %s95
      %p104 = scmp.eq.s32.totalorder %s25, 0
      %p105 = por %p103, %p104
      %p106 = scmp.ne.s32.totalorder %s94, %s95
      %p107 = scmp.eq.s32.totalorder %s26, 1
      %p108 = por %p106, %p107
      %p110 = scmp.ne.s32.totalorder %s95, %s109
      %p111 = scmp.eq.s32.totalorder %s26, 0
      %p112 = por %p110, %p111
      %s114 = sadd.s32 %s113, 1
      %p117 = scmp.eq.s32.totalorder %s20, 1
      %p118 = scmp.ne.s32.totalorder %s113, %s115
      %p119 = scmp.eq.s32.totalorder %s20, 0
      %p120 = por %p118, %p119
      %p121 = scmp.ne.s32.totalorder %s113, %s115
      %p122 = scmp.eq.s32.totalorder %s25, 1
      %p123 = por %p121, %p122
      %p124 = scmp.ne.s32.totalorder %s115, %s116
      %p125 = scmp.eq.s32.totalorder %s25, 0
      %p126 = por %p124, %p125
      %p127 = scmp.ne.s32.totalorder %s115, %s116
      %p128 = scmp.eq.s32.totalorder %s26, 1
      %p129 = por %p127, %p128
      %p131 = scmp.ne.s32.totalorder %s116, %s130
      %p132 = scmp.eq.s32.totalorder %s26, 0
      %p133 = por %p131, %p132
      %s135 = sadd.s32 %s134, 1
      %p138 = scmp.eq.s32.totalorder %s20, 1
      %p139 = scmp.ne.s32.totalorder %s134, %s136
      %p140 = scmp.eq.s32.totalorder %s20, 0
      %p141 = por %p139, %p140
      %p142 = scmp.ne.s32.totalorder %s134, %s136
      %p143 = scmp.eq.s32.totalorder %s25, 1
      %p144 = por %p142, %p143
      %p145 = scmp.ne.s32.totalorder %s136, %s137
      %p146 = scmp.eq.s32.totalorder %s25, 0
      %p147 = por %p145, %p146
      %p148 = scmp.ne.s32.totalorder %s136, %s137
      %p149 = scmp.eq.s32.totalorder %s26, 1
      %p150 = por %p148, %p149
      %p152 = scmp.ne.s32.totalorder %s137, %s151
      %p153 = scmp.eq.s32.totalorder %s26, 0
      %p154 = por %p152, %p153
      %s156 = sadd.s32 %s155, 1
      %p159 = scmp.eq.s32.totalorder %s20, 1
      %p160 = scmp.ne.s32.totalorder %s155, %s157
      %p161 = scmp.eq.s32.totalorder %s20, 0
      %p162 = por %p160, %p161
      %p163 = scmp.ne.s32.totalorder %s155, %s157
      %p164 = scmp.eq.s32.totalorder %s25, 1
      %p165 = por %p163, %p164
      %p166 = scmp.ne.s32.totalorder %s157, %s158
      %p167 = scmp.eq.s32.totalorder %s25, 0
      %p168 = por %p166, %p167
      %p169 = scmp.ne.s32.totalorder %s157, %s158
      %p170 = scmp.eq.s32.totalorder %s26, 1
      %p171 = por %p169, %p170
      %p173 = scmp.ne.s32.totalorder %s158, %s172
      %p174 = scmp.eq.s32.totalorder %s26, 0
      %p175 = por %p173, %p174
      %s176 = ssub.s32 %s27, %s39
      %s177 = ssub.s32 %s28, %s35
      %s178 = sor.u32 %s176, %s177
      %p179 = scmp.eq.s32.totalorder %s178, 0
      %s181 = sadd.s32 %s180, 1
      %s182 = scalar_select %p179, %s180, %s181
      %p185 = pneg %p179
      %p186 = scmp.eq.s32.totalorder %s20, 1
      %p187 = por %p185, %p186
      %p188 = scmp.ne.s32.totalorder %s180, %s183
      %p189 = scmp.eq.s32.totalorder %s20, 0
      %p190 = por %p188, %p189
      %p191 = scmp.ne.s32.totalorder %s180, %s183
      %p192 = scmp.eq.s32.totalorder %s25, 1
      %p193 = por %p191, %p192
      %p194 = scmp.ne.s32.totalorder %s183, %s184
      %p195 = scmp.eq.s32.totalorder %s25, 0
      %p196 = por %p194, %p195
      %p197 = scmp.ne.s32.totalorder %s183, %s184
      %p198 = scmp.eq.s32.totalorder %s26, 1
      %p199 = por %p197, %p198
      %p201 = scmp.ne.s32.totalorder %s184, %s200
      %p202 = scmp.eq.s32.totalorder %s26, 0
      %p203 = por %p201, %p202
      %p204 = scmp.le.s32.totalorder 1, %s20
      %p205 = scmp.lt.s32.totalorder %s20, 3
      %p206 = pnand %p204, %p205
      %p207 = pneg %p206
      // Predicated region
      $region9: #{tpu_custom_call.1} parent=5 // pred_check
        _
      $region10: #{tpu_custom_call.1} parent=5 // pred_check_branch
        %209 = sbr.rel (%p206) target = $region12
      $region11: #{tpu_custom_call.1} parent=5 // pred_region
        %s210 = ssub.s32 %s20, 1
        // Predicated region
        $region13: #{tpu_custom_call.1} parent=11 // pred_check
          %p211 = pneg %p58
        $region14: #{tpu_custom_call.1} parent=11 // pred_check_branch
          %213 = sbr.rel (%p211) target = $region16
        $region15: #{tpu_custom_call.1} parent=11 // pred_region
          %s214 = smul.u32 2, %s30
          %s216 = ssub.s32 128, 128
          %217 = vsyncadd [#allocation4], %s216
          %s218 = smul.addr %s214, 64
          %s219 = scalar_lea.hbm %s0, %s218
          %s220 = sshll.u32 [#allocation3], 4
          %s221 = int_to_ptr.vmem [resolvable:$true] %s220
          %226 = dma.hbm_to_vmem [thread:$0]  %s219, 128, %s221, [#allocation4], 64, 64, 4
        $region16: #{tpu_custom_call.1} parent=11 // pred_fallthru
          _
        // Predicated region
        $region17: #{tpu_custom_call.1} parent=11 // pred_check
          %p227 = pneg %p105
        $region18: #{tpu_custom_call.1} parent=11 // pred_check_branch
          %229 = sbr.rel (%p227) target = $region20
        $region19: #{tpu_custom_call.1} parent=11 // pred_region
          %s231 = ssub.s32 256, 256
          %232 = vsyncadd [#allocation7], %s231
          %s233 = sshll.u32 [#allocation8], 4
          %s234 = int_to_ptr.vmem [resolvable:$true] %s233
          %239 = dma.hbm_to_vmem [thread:$0]  %s2, 256, %s234, [#allocation7], 64, 64, 4
        $region20: #{tpu_custom_call.1} parent=11 // pred_fallthru
          _
        // Predicated region
        $region21: #{tpu_custom_call.1} parent=11 // pred_check
          %p240 = pneg %p126
        $region22: #{tpu_custom_call.1} parent=11 // pred_check_branch
          %242 = sbr.rel (%p240) target = $region24
        $region23: #{tpu_custom_call.1} parent=11 // pred_region
          %s244 = ssub.s32 256, 256
          %245 = vsyncadd [#allocation10], %s244
          %s246 = sshll.u32 [#allocation9], 4
          %s247 = int_to_ptr.vmem [resolvable:$true] %s246
          %252 = dma.hbm_to_vmem [thread:$0]  %s3, 256, %s247, [#allocation10], 64, 64, 4
        $region24: #{tpu_custom_call.1} parent=11 // pred_fallthru
          _
        // Predicated region
        $region25: #{tpu_custom_call.1} parent=11 // pred_check
          %p253 = pneg %p147
        $region26: #{tpu_custom_call.1} parent=11 // pred_check_branch
          %255 = sbr.rel (%p253) target = $region28
        $region27: #{tpu_custom_call.1} parent=11 // pred_region
          %s257 = ssub.s32 256, 256
          %258 = vsyncadd [#allocation10], %s257
          %s259 = sshll.u32 [#allocation11], 4
          %s260 = int_to_ptr.vmem [resolvable:$true] %s259
          %265 = dma.hbm_to_vmem [thread:$0]  %s4, 256, %s260, [#allocation10], 64, 64, 4
        $region28: #{tpu_custom_call.1} parent=11 // pred_fallthru
          _
        // Predicated region
        $region29: #{tpu_custom_call.1} parent=11 // pred_check
          %p266 = pneg %p168
        $region30: #{tpu_custom_call.1} parent=11 // pred_check_branch
          %268 = sbr.rel (%p266) target = $region32
        $region31: #{tpu_custom_call.1} parent=11 // pred_region
          _
        $region32: #{tpu_custom_call.1} parent=11 // pred_fallthru
          _
      $region12: #{tpu_custom_call.1} parent=5 // pred_fallthru
        _
      %p269 = scmp.lt.s32.totalorder %s20, 2
      // Predicated region
      $region33: #{tpu_custom_call.1} parent=5 // pred_check
        %p270 = pneg %p269
      $region34: #{tpu_custom_call.1} parent=5 // pred_check_branch
        %272 = sbr.rel (%p270) target = $region36
      $region35: #{tpu_custom_call.1} parent=5 // pred_region
        // Predicated region
        $region37: #{tpu_custom_call.1} parent=35 // pred_check
          %p273 = pneg %p78
        $region38: #{tpu_custom_call.1} parent=35 // pred_check_branch
          %275 = sbr.rel (%p273) target = $region40
        $region39: #{tpu_custom_call.1} parent=35 // pred_region
          %s276 = sand.u32 %s20, 1
          %s277 = scalar_lea.sflag [#allocation7], %s276
          %s278 = sand.u32 %s68, 1
          %s279 = smul.addr %s278, 8
          %s280 = scalar_lea.vmem [#allocation6], %s279
          %s282 = ssub.s32 128, 128
          %283 = vsyncadd %s277, %s282
          %s284 = smul.addr %s27, 2
          %s285 = smul.addr %s284, 64
          %s286 = scalar_lea.hbm %s1, %s285
          %s287 = sshll.u32 %s280, 4
          %s288 = int_to_ptr.vmem [resolvable:$true] %s287
          %293 = dma.hbm_to_vmem [thread:$0]  %s286, 128, %s288, %s277, 64, 64, 4
        $region40: #{tpu_custom_call.1} parent=35 // pred_fallthru
          _
      $region36: #{tpu_custom_call.1} parent=5 // pred_fallthru
        _
      %p294 = scmp.le.s32.totalorder 1, %s20
      %p295 = scmp.lt.s32.totalorder %s20, 3
      %p296 = pnand %p294, %p295
      %p297 = pneg %p296
      // Predicated region
      $region41: #{tpu_custom_call.1} parent=5 // pred_check
        _
      $region42: #{tpu_custom_call.1} parent=5 // pred_check_branch
        %299 = sbr.rel (%p296) target = $region44
      $region43: #{tpu_custom_call.1} parent=5 // pred_region
        %s300 = ssub.s32 %s20, 1
        // Predicated region
        $region45: #{tpu_custom_call.1} parent=43 // pred_check
          %p301 = pneg %p58
        $region46: #{tpu_custom_call.1} parent=43 // pred_check_branch
          %303 = sbr.rel (%p301) target = $region48
        $region47: #{tpu_custom_call.1} parent=43 // pred_region
          %304 = dma.done [#allocation4], 128
        $region48: #{tpu_custom_call.1} parent=43 // pred_fallthru
          _
        %s305 = sand.u32 %s25, 1
        %s306 = scalar_lea.sflag [#allocation7], %s305
        %s307 = sand.u32 %s71, 1
        %s308 = smul.addr %s307, 8
        %s309 = scalar_lea.vmem [#allocation6], %s308
        // Predicated region
        $region49: #{tpu_custom_call.1} parent=43 // pred_check
          %p310 = pneg %p84
        $region50: #{tpu_custom_call.1} parent=43 // pred_check_branch
          %312 = sbr.rel (%p310) target = $region52
        $region51: #{tpu_custom_call.1} parent=43 // pred_region
          %313 = dma.done %s306, 128
        $region52: #{tpu_custom_call.1} parent=43 // pred_fallthru
          _
        // Predicated region
        $region53: #{tpu_custom_call.1} parent=43 // pred_check
          %p314 = pneg %p105
        $region54: #{tpu_custom_call.1} parent=43 // pred_check_branch
          %316 = sbr.rel (%p314) target = $region56
        $region55: #{tpu_custom_call.1} parent=43 // pred_region
          %317 = dma.done [#allocation7], 256
        $region56: #{tpu_custom_call.1} parent=43 // pred_fallthru
          _
        // Predicated region
        $region57: #{tpu_custom_call.1} parent=43 // pred_check
          %p318 = pneg %p126
        $region58: #{tpu_custom_call.1} parent=43 // pred_check_branch
          %320 = sbr.rel (%p318) target = $region60
        $region59: #{tpu_custom_call.1} parent=43 // pred_region
          %321 = dma.done [#allocation10], 256
        $region60: #{tpu_custom_call.1} parent=43 // pred_fallthru
          _
        // Predicated region
        $region61: #{tpu_custom_call.1} parent=43 // pred_check
          %p322 = pneg %p147
        $region62: #{tpu_custom_call.1} parent=43 // pred_check_branch
          %324 = sbr.rel (%p322) target = $region64
        $region63: #{tpu_custom_call.1} parent=43 // pred_region
          %325 = dma.done [#allocation10], 256
        $region64: #{tpu_custom_call.1} parent=43 // pred_fallthru
          _
        %p326 = pneg %p58
        %p327 = pneg %p55
        %s328 = sand.u32 %s25, 1
        %s329 = scalar_lea.sflag [#allocation7], %s328
        %s330 = sand.u32 %s71, 1
        %s331 = smul.addr %s330, 8
        %s332 = scalar_lea.vmem [#allocation6], %s331
        %p333 = pneg %p84
        %p334 = pneg %p81
        %p335 = pneg %p105
        %p336 = pneg %p102
        %p337 = pneg %p126
        %p338 = pneg %p123
        %p339 = pneg %p147
        %p340 = pneg %p144
        %p341 = pneg %p168
        %p342 = pneg %p165
        %p343 = pneg %p196
        %p344 = pneg %p193
        %s345 = sand.u32 %s183, 1
        %s346 = scalar_lea.sflag [#allocation5], %s345
        %s347 = sand.u32 %s183, 1
        %s348 = smul.addr %s347, 16
        %s349 = scalar_lea.vmem [#allocation12], %s348
        %s350 = smul.u32 2, %s30
        %s351 = smul.u32 2, %s30
        %p353 = scmp.eq.s32.totalorder %s30, 0
        // Predicated region
        $region65: #{tpu_custom_call.1} parent=43 // pred_check
          %p354 = pneg %p353
        $region66: #{tpu_custom_call.1} parent=43 // pred_check_branch
          %356 = sbr.rel (%p354) target = $region68
        $region67: #{tpu_custom_call.1} parent=43 // pred_region
          %v357 = vld [vmem:[%s309] sm:$0xf]
          %v358 = vld [vmem:[%s309 + $0x4] sm:$0xf]
          %v359 = vld [vmem:[#allocation9] sm:$0xf]
          %v360 = vld [vmem:[#allocation9 + $0x4] sm:$0xf]
          %v361 = vld [vmem:[#allocation9 + $0x8] sm:$0xf]
          %v362 = vld [vmem:[#allocation9 + $0xc] sm:$0xf]
          %v365 = vunpack.c.l.b16 %v357
          %v366 = vunpack.c.l.b16 %v358
          %v367 = vpack.c.b16 %v366, %v365
          %v372 = vunpack.c.l.b16 %v359
          %v373 = vunpack.c.l.b16 %v360
          %v374 = vunpack.c.l.b16 %v361
          %v375 = vunpack.c.l.b16 %v362
          %v376 = vpack.c.b16 %v373, %v372
          %v377 = vpack.c.b16 %v375, %v374
          %vm380 = vcmask 261120
          %v382 = vsel %vm380, %v367, 0
          %384 = vmatprep.subr.bf16.mxu0 0
          %385 = vmatpush1.bf16.msra.mxu0 %v376
          %386 = vmatprep.subr.bf16.mxu0 0
          %387 = vmatpush1.bf16.msra.mxu0 %v377
          %388 = vmatprep.subr.bf16.mxu0 0
          %389 = vmatpush1.bf16.msra.mxu0 0
          %390 = vmatprep.subr.bf16.mxu0 0
          %391 = vmatpush1.bf16.msra.mxu0 0
          %392 = vmatprep.subr.bf16.mxu0 0
          %393 = vmatpush1.bf16.msra.mxu0 0
          %394 = vmatprep.subr.bf16.mxu0 0
          %395 = vmatpush1.bf16.msra.mxu0 0
          %396 = vmatprep.subr.bf16.mxu0 0
          %397 = vmatpush1.bf16.msra.mxu0 0
          %398 = vmatprep.subr.bf16.mxu0 0
          %399 = vmatpush1.bf16.msra.mxu0 0
          %400 = vmatprep.subr.bf16.mxu0 0
          %401 = vmatpush1.bf16.msra.mxu0 0
          %402 = vmatprep.subr.bf16.mxu0 0
          %403 = vmatpush1.bf16.msra.mxu0 0
          %404 = vmatprep.subr.bf16.mxu0 0
          %405 = vmatpush1.bf16.msra.mxu0 0
          %406 = vmatprep.subr.bf16.mxu0 0
          %407 = vmatpush1.bf16.msra.mxu0 0
          %408 = vmatprep.subr.bf16.mxu0 0
          %409 = vmatpush1.bf16.msra.mxu0 0
          %410 = vmatprep.subr.bf16.mxu0 0
          %411 = vmatpush1.bf16.msra.mxu0 0
          %412 = vmatprep.subr.bf16.mxu0 0
          %413 = vmatpush1.bf16.msra.mxu0 0
          %414 = vmatprep.subr.bf16.mxu0 0
          %415 = vmatpush1.bf16.msra.mxu0 0
          %416 = vmatprep.mubr.bf16.mxu0 0
          %417 = vmatmul.mubr.bf16.gmra.mrb[0].mxu0 %v382
          %v418 = vpop.f32.mrb[0].mxu0
          %v419 = vadd.f32 0.0, %v418
          %v420 = vpop.f32.mrb[0].mxu0
          %v421 = vpop.f32.mrb[0].mxu0
          %v422 = vadd.f32 0.0, %v421
          %v423 = vpop.f32.mrb[0].mxu0
          %424 = vdwg.mxu0
          %v425 = vpack.c.bf16 %v422, %v419
          %vm426 = vcmask 523264
          %427 = vst.msk [vmem:[#allocation2] sm:$0xff] %vm426, %v425
        $region68: #{tpu_custom_call.1} parent=43 // pred_fallthru
          _
        %v428 = vld [vmem:[#allocation3] sm:$0xf]
        %v429 = vld [vmem:[#allocation3 + $0x4] sm:$0xf]
        %v430 = vld [vmem:[#allocation8] sm:$0xf]
        %v431 = vld [vmem:[#allocation8 + $0x4] sm:$0xf]
        %v432 = vld [vmem:[#allocation8 + $0x8] sm:$0xf]
        %v433 = vld [vmem:[#allocation8 + $0xc] sm:$0xf]
        %v436 = vunpack.c.l.b16 %v428
        %v437 = vunpack.c.l.b16 %v429
        %v438 = vpack.c.b16 %v437, %v436
        %v443 = vunpack.c.l.b16 %v430
        %v444 = vunpack.c.l.b16 %v431
        %v445 = vunpack.c.l.b16 %v432
        %v446 = vunpack.c.l.b16 %v433
        %v447 = vpack.c.b16 %v444, %v443
        %v448 = vpack.c.b16 %v446, %v445
        %vm451 = vcmask 261120
        %v453 = vsel %vm451, %v438, 0
        %455 = vmatprep.subr.bf16.mxu0 0
        %456 = vmatpush1.bf16.msra.mxu0 %v447
        %457 = vmatprep.subr.bf16.mxu0 0
        %458 = vmatpush1.bf16.msra.mxu0 %v448
        %459 = vmatprep.subr.bf16.mxu0 0
        %460 = vmatpush1.bf16.msra.mxu0 0
        %461 = vmatprep.subr.bf16.mxu0 0
        %462 = vmatpush1.bf16.msra.mxu0 0
        %463 = vmatprep.subr.bf16.mxu0 0
        %464 = vmatpush1.bf16.msra.mxu0 0
        %465 = vmatprep.subr.bf16.mxu0 0
        %466 = vmatpush1.bf16.msra.mxu0 0
        %467 = vmatprep.subr.bf16.mxu0 0
        %468 = vmatpush1.bf16.msra.mxu0 0
        %469 = vmatprep.subr.bf16.mxu0 0
        %470 = vmatpush1.bf16.msra.mxu0 0
        %471 = vmatprep.subr.bf16.mxu0 0
        %472 = vmatpush1.bf16.msra.mxu0 0
        %473 = vmatprep.subr.bf16.mxu0 0
        %474 = vmatpush1.bf16.msra.mxu0 0
        %475 = vmatprep.subr.bf16.mxu0 0
        %476 = vmatpush1.bf16.msra.mxu0 0
        %477 = vmatprep.subr.bf16.mxu0 0
        %478 = vmatpush1.bf16.msra.mxu0 0
        %479 = vmatprep.subr.bf16.mxu0 0
        %480 = vmatpush1.bf16.msra.mxu0 0
        %481 = vmatprep.subr.bf16.mxu0 0
        %482 = vmatpush1.bf16.msra.mxu0 0
        %483 = vmatprep.subr.bf16.mxu0 0
        %484 = vmatpush1.bf16.msra.mxu0 0
        %485 = vmatprep.subr.bf16.mxu0 0
        %486 = vmatpush1.bf16.msra.mxu0 0
        %487 = vmatprep.mubr.bf16.mxu0 0
        %488 = vmatmul.mubr.bf16.gmra.mrb[0].mxu0 %v453
        %v489 = vpop.f32.mrb[0].mxu0
        %v490 = vadd.f32 0.0, %v489
        %v491 = vpop.f32.mrb[0].mxu0
        %v492 = vpop.f32.mrb[0].mxu0
        %v493 = vadd.f32 0.0, %v492
        %v494 = vpop.f32.mrb[0].mxu0
        %495 = vdwg.mxu0
        %v496 = vpack.c.bf16 %v493, %v490
        %v497 = vld [vmem:[#allocation2] sm:$0xff]
        %v498 = vld [vmem:[#allocation11] sm:$0xf]
        %v499 = vld [vmem:[#allocation11 + $0x4] sm:$0xf]
        %v500 = vld [vmem:[#allocation11 + $0x8] sm:$0xf]
        %v501 = vld [vmem:[#allocation11 + $0xc] sm:$0xf]
        %vm502 = vcmask 31744
        %v504 = vsel %vm502, %v496, 0
        %v507 = vsel %vm502, %v497, 0
        %509 = vmatprep.subr.bf16.mxu0 0
        %510 = vmatpush1.bf16.xpose.msra.mxu0 %v507
        %511 = vmatprep.subr.bf16.mxu0 0
        %512 = vmatpush1.bf16.xpose.msra.mxu0 0
        %513 = vmatprep.subr.bf16.mxu0 0
        %514 = vmatpush1.bf16.xpose.msra.mxu0 0
        %515 = vmatprep.subr.bf16.mxu0 0
        %516 = vmatpush1.bf16.xpose.msra.mxu0 0
        %517 = vmatprep.subr.bf16.mxu0 0
        %518 = vmatpush1.bf16.xpose.msra.mxu0 0
        %519 = vmatprep.subr.bf16.mxu0 0
        %520 = vmatpush1.bf16.xpose.msra.mxu0 0
        %521 = vmatprep.subr.bf16.mxu0 0
        %522 = vmatpush1.bf16.xpose.msra.mxu0 0
        %523 = vmatprep.subr.bf16.mxu0 0
        %524 = vmatpush1.bf16.xpose.msra.mxu0 0
        %525 = vmatprep.subr.bf16.mxu0 0
        %526 = vmatpush1.bf16.xpose.msra.mxu0 0
        %527 = vmatprep.subr.bf16.mxu0 0
        %528 = vmatpush1.bf16.xpose.msra.mxu0 0
        %529 = vmatprep.subr.bf16.mxu0 0
        %530 = vmatpush1.bf16.xpose.msra.mxu0 0
        %531 = vmatprep.subr.bf16.mxu0 0
        %532 = vmatpush1.bf16.xpose.msra.mxu0 0
        %533 = vmatprep.subr.bf16.mxu0 0
        %534 = vmatpush1.bf16.xpose.msra.mxu0 0
        %535 = vmatprep.subr.bf16.mxu0 0
        %536 = vmatpush1.bf16.xpose.msra.mxu0 0
        %537 = vmatprep.subr.bf16.mxu0 0
        %538 = vmatpush1.bf16.xpose.msra.mxu0 0
        %539 = vmatprep.subr.bf16.mxu0 0
        %540 = vmatpush1.bf16.xpose.msra.mxu0 0
        %541 = vmatprep.mubr.bf16.mxu0 0
        %542 = vmatmul.mubr.bf16.gmra.mrb[0].mxu0 %v504
        %v543 = vpop.f32.mrb[0].mxu0
        %v544 = vadd.f32 0.0, %v543
        %v545 = vpop.f32.mrb[0].mxu0
        %v546 = vpop.f32.mrb[0].mxu0
        %v547 = vadd.f32 0.0, %v546
        %v548 = vpop.f32.mrb[0].mxu0
        %549 = vdwg.mxu0
        %vm550 = vcmask 130048
        %v551 = vsel %vm550, %v544, -inf
        %552 = vmax.xlane.f32.xlu0 %v551
        %v553 = vpop.xlane.xlu0 %552
        %v554 = vsel %vm550, %v547, -inf
        %555 = vmax.xlane.f32.xlu0 %v554
        %v556 = vpop.xlane.xlu0 %555
        %v557 = vsub.f32 %v544, %v553
        %v558 = vsub.f32 %v547, %v556
        %v559 = vmul.f32 %v557, 1.442695
        %v560 = vpow.pop %v559
        %v561 = vmul.f32 %v558, 1.442695
        %v562 = vpow.pop %v561
        %v563 = vsel %vm550, %v560, 0.0
        %564 = vadd.xlane.f32.xlu0 %v563
        %v565 = vpop.xlane.xlu0 %564
        %v566 = vsel %vm550, %v562, 0.0
        %567 = vadd.xlane.f32.xlu0 %v566
        %v568 = vpop.xlane.xlu0 %567
        %v569 = vrcp.pop %v565
        %v570 = vrcp.pop %v568
        %v571 = vmul.f32 %v560, %v569
        %v572 = vmul.f32 %v562, %v570
        %v573 = vpack.c.bf16 %v572, %v571
        %575 = vrot.lane.b32.xlu0 %v497, 96
        %v576 = vpop.permute.xlu0 %575
        %v579 = vsel %vm550, %v573, 0
        %581 = vmatprep.subr.bf16.mxu0 0
        %582 = vmatpush1.bf16.msra.mxu0 %v576
        %583 = vmatprep.subr.bf16.mxu0 0
        %584 = vmatpush1.bf16.msra.mxu0 0
        %585 = vmatprep.subr.bf16.mxu0 0
        %586 = vmatpush1.bf16.msra.mxu0 0
        %587 = vmatprep.subr.bf16.mxu0 0
        %588 = vmatpush1.bf16.msra.mxu0 0
        %589 = vmatprep.subr.bf16.mxu0 0
        %590 = vmatpush1.bf16.msra.mxu0 0
        %591 = vmatprep.subr.bf16.mxu0 0
        %592 = vmatpush1.bf16.msra.mxu0 0
        %593 = vmatprep.subr.bf16.mxu0 0
        %594 = vmatpush1.bf16.msra.mxu0 0
        %595 = vmatprep.subr.bf16.mxu0 0
        %596 = vmatpush1.bf16.msra.mxu0 0
        %597 = vmatprep.subr.bf16.mxu0 0
        %598 = vmatpush1.bf16.msra.mxu0 0
        %599 = vmatprep.subr.bf16.mxu0 0
        %600 = vmatpush1.bf16.msra.mxu0 0
        %601 = vmatprep.subr.bf16.mxu0 0
        %602 = vmatpush1.bf16.msra.mxu0 0
        %603 = vmatprep.subr.bf16.mxu0 0
        %604 = vmatpush1.bf16.msra.mxu0 0
        %605 = vmatprep.subr.bf16.mxu0 0
        %606 = vmatpush1.bf16.msra.mxu0 0
        %607 = vmatprep.subr.bf16.mxu0 0
        %608 = vmatpush1.bf16.msra.mxu0 0
        %609 = vmatprep.subr.bf16.mxu0 0
        %610 = vmatpush1.bf16.msra.mxu0 0
        %611 = vmatprep.subr.bf16.mxu0 0
        %612 = vmatpush1.bf16.msra.mxu0 0
        %613 = vmatprep.mubr.bf16.mxu0 0
        %614 = vmatmul.mubr.bf16.gmra.mrb[0].mxu0 %v579
        %v615 = vpop.f32.mrb[0].mxu0
        %v616 = vadd.f32 0.0, %v615
        %v617 = vpop.f32.mrb[0].mxu0
        %v618 = vpop.f32.mrb[0].mxu0
        %v619 = vadd.f32 0.0, %v618
        %v620 = vpop.f32.mrb[0].mxu0
        %621 = vdwg.mxu0
        %v622 = vpack.c.bf16 %v619, %v616
        %624 = vrot.lane.b32.xlu0 %v496, 124
        %v625 = vpop.permute.xlu0 %624
        %626 = vrot.lane.b32.xlu0 %v497, 124
        %v627 = vpop.permute.xlu0 %626
        %v629 = vsel %vm502, %v625, 0
        %v632 = vsel %vm502, %v627, 0
        %634 = vmatprep.subr.bf16.mxu0 0
        %635 = vmatpush1.bf16.xpose.msra.mxu0 %v632
        %636 = vmatprep.subr.bf16.mxu0 0
        %637 = vmatpush1.bf16.xpose.msra.mxu0 0
        %638 = vmatprep.subr.bf16.mxu0 0
        %639 = vmatpush1.bf16.xpose.msra.mxu0 0
        %640 = vmatprep.subr.bf16.mxu0 0
        %641 = vmatpush1.bf16.xpose.msra.mxu0 0
        %642 = vmatprep.subr.bf16.mxu0 0
        %643 = vmatpush1.bf16.xpose.msra.mxu0 0
        %644 = vmatprep.subr.bf16.mxu0 0
        %645 = vmatpush1.bf16.xpose.msra.mxu0 0
        %646 = vmatprep.subr.bf16.mxu0 0
        %647 = vmatpush1.bf16.xpose.msra.mxu0 0
        %648 = vmatprep.subr.bf16.mxu0 0
        %649 = vmatpush1.bf16.xpose.msra.mxu0 0
        %650 = vmatprep.subr.bf16.mxu0 0
        %651 = vmatpush1.bf16.xpose.msra.mxu0 0
        %652 = vmatprep.subr.bf16.mxu0 0
        %653 = vmatpush1.bf16.xpose.msra.mxu0 0
        %654 = vmatprep.subr.bf16.mxu0 0
        %655 = vmatpush1.bf16.xpose.msra.mxu0 0
        %656 = vmatprep.subr.bf16.mxu0 0
        %657 = vmatpush1.bf16.xpose.msra.mxu0 0
        %658 = vmatprep.subr.bf16.mxu0 0
        %659 = vmatpush1.bf16.xpose.msra.mxu0 0
        %660 = vmatprep.subr.bf16.mxu0 0
        %661 = vmatpush1.bf16.xpose.msra.mxu0 0
        %662 = vmatprep.subr.bf16.mxu0 0
        %663 = vmatpush1.bf16.xpose.msra.mxu0 0
        %664 = vmatprep.subr.bf16.mxu0 0
        %665 = vmatpush1.bf16.xpose.msra.mxu0 0
        %666 = vmatprep.mubr.bf16.mxu0 0
        %667 = vmatmul.mubr.bf16.gmra.mrb[0].mxu0 %v629
        %v668 = vpop.f32.mrb[0].mxu0
        %v669 = vadd.f32 0.0, %v668
        %v670 = vpop.f32.mrb[0].mxu0
        %v671 = vpop.f32.mrb[0].mxu0
        %v672 = vadd.f32 0.0, %v671
        %v673 = vpop.f32.mrb[0].mxu0
        %674 = vdwg.mxu0
        %v675 = vsel %vm550, %v669, -inf
        %676 = vmax.xlane.f32.xlu0 %v675
        %v677 = vpop.xlane.xlu0 %676
        %v678 = vsel %vm550, %v672, -inf
        %679 = vmax.xlane.f32.xlu0 %v678
        %v680 = vpop.xlane.xlu0 %679
        %v681 = vsub.f32 %v669, %v677
        %v682 = vsub.f32 %v672, %v680
        %v683 = vmul.f32 %v681, 1.442695
        %v684 = vpow.pop %v683
        %v685 = vmul.f32 %v682, 1.442695
        %v686 = vpow.pop %v685
        %v687 = vsel %vm550, %v684, 0.0
        %688 = vadd.xlane.f32.xlu0 %v687
        %v689 = vpop.xlane.xlu0 %688
        %v690 = vsel %vm550, %v686, 0.0
        %691 = vadd.xlane.f32.xlu0 %v690
        %v692 = vpop.xlane.xlu0 %691
        %v693 = vrcp.pop %v689
        %v694 = vrcp.pop %v692
        %v695 = vmul.f32 %v684, %v693
        %v696 = vmul.f32 %v686, %v694
        %v697 = vpack.c.bf16 %v696, %v695
        %698 = vrot.lane.b32.xlu0 %v497, 92
        %v699 = vpop.permute.xlu0 %698
        %v702 = vsel %vm550, %v697, 0
        %704 = vmatprep.subr.bf16.mxu0 0
        %705 = vmatpush1.bf16.msra.mxu0 %v699
        %706 = vmatprep.subr.bf16.mxu0 0
        %707 = vmatpush1.bf16.msra.mxu0 0
        %708 = vmatprep.subr.bf16.mxu0 0
        %709 = vmatpush1.bf16.msra.mxu0 0
        %710 = vmatprep.subr.bf16.mxu0 0
        %711 = vmatpush1.bf16.msra.mxu0 0
        %712 = vmatprep.subr.bf16.mxu0 0
        %713 = vmatpush1.bf16.msra.mxu0 0
        %714 = vmatprep.subr.bf16.mxu0 0
        %715 = vmatpush1.bf16.msra.mxu0 0
        %716 = vmatprep.subr.bf16.mxu0 0
        %717 = vmatpush1.bf16.msra.mxu0 0
        %718 = vmatprep.subr.bf16.mxu0 0
        %719 = vmatpush1.bf16.msra.mxu0 0
        %720 = vmatprep.subr.bf16.mxu0 0
        %721 = vmatpush1.bf16.msra.mxu0 0
        %722 = vmatprep.subr.bf16.mxu0 0
        %723 = vmatpush1.bf16.msra.mxu0 0
        %724 = vmatprep.subr.bf16.mxu0 0
        %725 = vmatpush1.bf16.msra.mxu0 0
        %726 = vmatprep.subr.bf16.mxu0 0
        %727 = vmatpush1.bf16.msra.mxu0 0
        %728 = vmatprep.subr.bf16.mxu0 0
        %729 = vmatpush1.bf16.msra.mxu0 0
        %730 = vmatprep.subr.bf16.mxu0 0
        %731 = vmatpush1.bf16.msra.mxu0 0
        %732 = vmatprep.subr.bf16.mxu0 0
        %733 = vmatpush1.bf16.msra.mxu0 0
        %734 = vmatprep.subr.bf16.mxu0 0
        %735 = vmatpush1.bf16.msra.mxu0 0
        %736 = vmatprep.mubr.bf16.mxu0 0
        %737 = vmatmul.mubr.bf16.gmra.mrb[0].mxu0 %v702
        %v738 = vpop.f32.mrb[0].mxu0
        %v739 = vadd.f32 0.0, %v738
        %v740 = vpop.f32.mrb[0].mxu0
        %v741 = vpop.f32.mrb[0].mxu0
        %v742 = vadd.f32 0.0, %v741
        %v743 = vpop.f32.mrb[0].mxu0
        %744 = vdwg.mxu0
        %v745 = vpack.c.bf16 %v742, %v739
        %v747 = vunpack.c.l.b16 %v498
        %v748 = vpack.c.b16 %v747, %v747
        %v749 = vrot.slane %v748, 2
        %v751 = vsel %vm502, %v745, 0
        %vm753 = vcmask 1041408
        %v755 = vsel %vm753, %v749, 0
        %757 = vmatprep.subr.bf16.mxu0 0
        %758 = vmatpush1.bf16.msra.mxu0 %v755
        %759 = vmatprep.subr.bf16.mxu0 0
        %760 = vmatpush1.bf16.msra.mxu0 0
        %761 = vmatprep.subr.bf16.mxu0 0
        %762 = vmatpush1.bf16.msra.mxu0 0
        %763 = vmatprep.subr.bf16.mxu0 0
        %764 = vmatpush1.bf16.msra.mxu0 0
        %765 = vmatprep.subr.bf16.mxu0 0
        %766 = vmatpush1.bf16.msra.mxu0 0
        %767 = vmatprep.subr.bf16.mxu0 0
        %768 = vmatpush1.bf16.msra.mxu0 0
        %769 = vmatprep.subr.bf16.mxu0 0
        %770 = vmatpush1.bf16.msra.mxu0 0
        %771 = vmatprep.subr.bf16.mxu0 0
        %772 = vmatpush1.bf16.msra.mxu0 0
        %773 = vmatprep.subr.bf16.mxu0 0
        %774 = vmatpush1.bf16.msra.mxu0 0
        %775 = vmatprep.subr.bf16.mxu0 0
        %776 = vmatpush1.bf16.msra.mxu0 0
        %777 = vmatprep.subr.bf16.mxu0 0
        %778 = vmatpush1.bf16.msra.mxu0 0
        %779 = vmatprep.subr.bf16.mxu0 0
        %780 = vmatpush1.bf16.msra.mxu0 0
        %781 = vmatprep.subr.bf16.mxu0 0
        %782 = vmatpush1.bf16.msra.mxu0 0
        %783 = vmatprep.subr.bf16.mxu0 0
        %784 = vmatpush1.bf16.msra.mxu0 0
        %785 = vmatprep.subr.bf16.mxu0 0
        %786 = vmatpush1.bf16.msra.mxu0 0
        %787 = vmatprep.subr.bf16.mxu0 0
        %788 = vmatpush1.bf16.msra.mxu0 0
        %789 = vmatprep.mubr.bf16.mxu0 0
        %790 = vmatmul.mubr.bf16.gmra.mrb[0].mxu0 %v751
        %v791 = vpop.f32.mrb[0].mxu0
        %v792 = vadd.f32 0.0, %v791
        %v793 = vpop.f32.mrb[0].mxu0
        %v794 = vpop.f32.mrb[0].mxu0
        %v795 = vadd.f32 0.0, %v794
        %v796 = vpop.f32.mrb[0].mxu0
        %797 = vdwg.mxu0
        %v799 = vsel %vm502, %v622, 0
        %v802 = vsel %vm753, %v498, 0
        %804 = vmatprep.subr.bf16.mxu0 0
        %805 = vmatpush1.bf16.msra.mxu0 %v802
        %806 = vmatprep.subr.bf16.mxu0 0
        %807 = vmatpush1.bf16.msra.mxu0 0
        %808 = vmatprep.subr.bf16.mxu0 0
        %809 = vmatpush1.bf16.msra.mxu0 0
        %810 = vmatprep.subr.bf16.mxu0 0
        %811 = vmatpush1.bf16.msra.mxu0 0
        %812 = vmatprep.subr.bf16.mxu0 0
        %813 = vmatpush1.bf16.msra.mxu0 0
        %814 = vmatprep.subr.bf16.mxu0 0
        %815 = vmatpush1.bf16.msra.mxu0 0
        %816 = vmatprep.subr.bf16.mxu0 0
        %817 = vmatpush1.bf16.msra.mxu0 0
        %818 = vmatprep.subr.bf16.mxu0 0
        %819 = vmatpush1.bf16.msra.mxu0 0
        %820 = vmatprep.subr.bf16.mxu0 0
        %821 = vmatpush1.bf16.msra.mxu0 0
        %822 = vmatprep.subr.bf16.mxu0 0
        %823 = vmatpush1.bf16.msra.mxu0 0
        %824 = vmatprep.subr.bf16.mxu0 0
        %825 = vmatpush1.bf16.msra.mxu0 0
        %826 = vmatprep.subr.bf16.mxu0 0
        %827 = vmatpush1.bf16.msra.mxu0 0
        %828 = vmatprep.subr.bf16.mxu0 0
        %829 = vmatpush1.bf16.msra.mxu0 0
        %830 = vmatprep.subr.bf16.mxu0 0
        %831 = vmatpush1.bf16.msra.mxu0 0
        %832 = vmatprep.subr.bf16.mxu0 0
        %833 = vmatpush1.bf16.msra.mxu0 0
        %834 = vmatprep.subr.bf16.mxu0 0
        %835 = vmatpush1.bf16.msra.mxu0 0
        %836 = vmatprep.mubr.bf16.mxu0 0
        %837 = vmatmul.mubr.bf16.gmra.mrb[0].mxu0 %v799
        %v838 = vpop.f32.mrb[0].mxu0
        %v839 = vadd.f32 %v792, %v838
        %v840 = vpop.f32.mrb[0].mxu0
        %v841 = vpop.f32.mrb[0].mxu0
        %v842 = vadd.f32 %v795, %v841
        %v843 = vpop.f32.mrb[0].mxu0
        %844 = vdwg.mxu0
        %845 = vrot.lane.b32.xlu0 %v496, 120
        %v846 = vpop.permute.xlu0 %845
        %847 = vrot.lane.b32.xlu0 %v497, 120
        %v848 = vpop.permute.xlu0 %847
        %v850 = vsel %vm502, %v846, 0
        %v853 = vsel %vm502, %v848, 0
        %855 = vmatprep.subr.bf16.mxu0 0
        %856 = vmatpush1.bf16.xpose.msra.mxu0 %v853
        %857 = vmatprep.subr.bf16.mxu0 0
        %858 = vmatpush1.bf16.xpose.msra.mxu0 0
        %859 = vmatprep.subr.bf16.mxu0 0
        %860 = vmatpush1.bf16.xpose.msra.mxu0 0
        %861 = vmatprep.subr.bf16.mxu0 0
        %862 = vmatpush1.bf16.xpose.msra.mxu0 0
        %863 = vmatprep.subr.bf16.mxu0 0
        %864 = vmatpush1.bf16.xpose.msra.mxu0 0
        %865 = vmatprep.subr.bf16.mxu0 0
        %866 = vmatpush1.bf16.xpose.msra.mxu0 0
        %867 = vmatprep.subr.bf16.mxu0 0
        %868 = vmatpush1.bf16.xpose.msra.mxu0 0
        %869 = vmatprep.subr.bf16.mxu0 0
        %870 = vmatpush1.bf16.xpose.msra.mxu0 0
        %871 = vmatprep.subr.bf16.mxu0 0
        %872 = vmatpush1.bf16.xpose.msra.mxu0 0
        %873 = vmatprep.subr.bf16.mxu0 0
        %874 = vmatpush1.bf16.xpose.msra.mxu0 0
        %875 = vmatprep.subr.bf16.mxu0 0
        %876 = vmatpush1.bf16.xpose.msra.mxu0 0
        %877 = vmatprep.subr.bf16.mxu0 0
        %878 = vmatpush1.bf16.xpose.msra.mxu0 0
        %879 = vmatprep.subr.bf16.mxu0 0
        %880 = vmatpush1.bf16.xpose.msra.mxu0 0
        %881 = vmatprep.subr.bf16.mxu0 0
        %882 = vmatpush1.bf16.xpose.msra.mxu0 0
        %883 = vmatprep.subr.bf16.mxu0 0
        %884 = vmatpush1.bf16.xpose.msra.mxu0 0
        %885 = vmatprep.subr.bf16.mxu0 0
        %886 = vmatpush1.bf16.xpose.msra.mxu0 0
        %887 = vmatprep.mubr.bf16.mxu0 0
        %888 = vmatmul.mubr.bf16.gmra.mrb[0].mxu0 %v850
        %v889 = vpop.f32.mrb[0].mxu0
        %v890 = vadd.f32 0.0, %v889
        %v891 = vpop.f32.mrb[0].mxu0
        %v892 = vpop.f32.mrb[0].mxu0
        %v893 = vadd.f32 0.0, %v892
        %v894 = vpop.f32.mrb[0].mxu0
        %895 = vdwg.mxu0
        %v896 = vsel %vm550, %v890, -inf
        %897 = vmax.xlane.f32.xlu0 %v896
        %v898 = vpop.xlane.xlu0 %897
        %v899 = vsel %vm550, %v893, -inf
        %900 = vmax.xlane.f32.xlu0 %v899
        %v901 = vpop.xlane.xlu0 %900
        %v902 = vsub.f32 %v890, %v898
        %v903 = vsub.f32 %v893, %v901
        %v904 = vmul.f32 %v902, 1.442695
        %v905 = vpow.pop %v904
        %v906 = vmul.f32 %v903, 1.442695
        %v907 = vpow.pop %v906
        %v908 = vsel %vm550, %v905, 0.0
        %909 = vadd.xlane.f32.xlu0 %v908
        %v910 = vpop.xlane.xlu0 %909
        %v911 = vsel %vm550, %v907, 0.0
        %912 = vadd.xlane.f32.xlu0 %v911
        %v913 = vpop.xlane.xlu0 %912
        %v914 = vrcp.pop %v910
        %v915 = vrcp.pop %v913
        %v916 = vmul.f32 %v905, %v914
        %v917 = vmul.f32 %v907, %v915
        %v918 = vpack.c.bf16 %v917, %v916
        %919 = vrot.lane.b32.xlu0 %v497, 88
        %v920 = vpop.permute.xlu0 %919
        %v923 = vsel %vm550, %v918, 0
        %925 = vmatprep.subr.bf16.mxu0 0
        %926 = vmatpush1.bf16.msra.mxu0 %v920
        %927 = vmatprep.subr.bf16.mxu0 0
        %928 = vmatpush1.bf16.msra.mxu0 0
        %929 = vmatprep.subr.bf16.mxu0 0
        %930 = vmatpush1.bf16.msra.mxu0 0
        %931 = vmatprep.subr.bf16.mxu0 0
        %932 = vmatpush1.bf16.msra.mxu0 0
        %933 = vmatprep.subr.bf16.mxu0 0
        %934 = vmatpush1.bf16.msra.mxu0 0
        %935 = vmatprep.subr.bf16.mxu0 0
        %936 = vmatpush1.bf16.msra.mxu0 0
        %937 = vmatprep.subr.bf16.mxu0 0
        %938 = vmatpush1.bf16.msra.mxu0 0
        %939 = vmatprep.subr.bf16.mxu0 0
        %940 = vmatpush1.bf16.msra.mxu0 0
        %941 = vmatprep.subr.bf16.mxu0 0
        %942 = vmatpush1.bf16.msra.mxu0 0
        %943 = vmatprep.subr.bf16.mxu0 0
        %944 = vmatpush1.bf16.msra.mxu0 0
        %945 = vmatprep.subr.bf16.mxu0 0
        %946 = vmatpush1.bf16.msra.mxu0 0
        %947 = vmatprep.subr.bf16.mxu0 0
        %948 = vmatpush1.bf16.msra.mxu0 0
        %949 = vmatprep.subr.bf16.mxu0 0
        %950 = vmatpush1.bf16.msra.mxu0 0
        %951 = vmatprep.subr.bf16.mxu0 0
        %952 = vmatpush1.bf16.msra.mxu0 0
        %953 = vmatprep.subr.bf16.mxu0 0
        %954 = vmatpush1.bf16.msra.mxu0 0
        %955 = vmatprep.subr.bf16.mxu0 0
        %956 = vmatpush1.bf16.msra.mxu0 0
        %957 = vmatprep.mubr.bf16.mxu0 0
        %958 = vmatmul.mubr.bf16.gmra.mrb[0].mxu0 %v923
        %v959 = vpop.f32.mrb[0].mxu0
        %v960 = vadd.f32 0.0, %v959
        %v961 = vpop.f32.mrb[0].mxu0
        %v962 = vpop.f32.mrb[0].mxu0
        %v963 = vadd.f32 0.0, %v962
        %v964 = vpop.f32.mrb[0].mxu0
        %965 = vdwg.mxu0
        %v966 = vpack.c.bf16 %v963, %v960
        %v968 = vsel %vm502, %v966, 0
        %v971 = vsel %vm753, %v499, 0
        %973 = vmatprep.subr.bf16.mxu0 0
        %974 = vmatpush1.bf16.msra.mxu0 %v971
        %975 = vmatprep.subr.bf16.mxu0 0
        %976 = vmatpush1.bf16.msra.mxu0 0
        %977 = vmatprep.subr.bf16.mxu0 0
        %978 = vmatpush1.bf16.msra.mxu0 0
        %979 = vmatprep.subr.bf16.mxu0 0
        %980 = vmatpush1.bf16.msra.mxu0 0
        %981 = vmatprep.subr.bf16.mxu0 0
        %982 = vmatpush1.bf16.msra.mxu0 0
        %983 = vmatprep.subr.bf16.mxu0 0
        %984 = vmatpush1.bf16.msra.mxu0 0
        %985 = vmatprep.subr.bf16.mxu0 0
        %986 = vmatpush1.bf16.msra.mxu0 0
        %987 = vmatprep.subr.bf16.mxu0 0
        %988 = vmatpush1.bf16.msra.mxu0 0
        %989 = vmatprep.subr.bf16.mxu0 0
        %990 = vmatpush1.bf16.msra.mxu0 0
        %991 = vmatprep.subr.bf16.mxu0 0
        %992 = vmatpush1.bf16.msra.mxu0 0
        %993 = vmatprep.subr.bf16.mxu0 0
        %994 = vmatpush1.bf16.msra.mxu0 0
        %995 = vmatprep.subr.bf16.mxu0 0
        %996 = vmatpush1.bf16.msra.mxu0 0
        %997 = vmatprep.subr.bf16.mxu0 0
        %998 = vmatpush1.bf16.msra.mxu0 0
        %999 = vmatprep.subr.bf16.mxu0 0
        %1000 = vmatpush1.bf16.msra.mxu0 0
        %1001 = vmatprep.subr.bf16.mxu0 0
        %1002 = vmatpush1.bf16.msra.mxu0 0
        %1003 = vmatprep.subr.bf16.mxu0 0
        %1004 = vmatpush1.bf16.msra.mxu0 0
        %1005 = vmatprep.mubr.bf16.mxu0 0
        %1006 = vmatmul.mubr.bf16.gmra.mrb[0].mxu0 %v968
        %v1007 = vpop.f32.mrb[0].mxu0
        %v1008 = vadd.f32 0.0, %v1007
        %v1009 = vpop.f32.mrb[0].mxu0
        %v1010 = vpop.f32.mrb[0].mxu0
        %v1011 = vadd.f32 0.0, %v1010
        %v1012 = vpop.f32.mrb[0].mxu0
        %1013 = vdwg.mxu0
        %v1014 = vadd.f32 %v839, %v1008
        %v1015 = vadd.f32 %v842, %v1011
        %1016 = vrot.lane.b32.xlu0 %v496, 116
        %v1017 = vpop.permute.xlu0 %1016
        %1018 = vrot.lane.b32.xlu0 %v497, 116
        %v1019 = vpop.permute.xlu0 %1018
        %v1021 = vsel %vm502, %v1017, 0
        %v1024 = vsel %vm502, %v1019, 0
        %1026 = vmatprep.subr.bf16.mxu0 0
        %1027 = vmatpush1.bf16.xpose.msra.mxu0 %v1024
        %1028 = vmatprep.subr.bf16.mxu0 0
        %1029 = vmatpush1.bf16.xpose.msra.mxu0 0
        %1030 = vmatprep.subr.bf16.mxu0 0
        %1031 = vmatpush1.bf16.xpose.msra.mxu0 0
        %1032 = vmatprep.subr.bf16.mxu0 0
        %1033 = vmatpush1.bf16.xpose.msra.mxu0 0
        %1034 = vmatprep.subr.bf16.mxu0 0
        %1035 = vmatpush1.bf16.xpose.msra.mxu0 0
        %1036 = vmatprep.subr.bf16.mxu0 0
        %1037 = vmatpush1.bf16.xpose.msra.mxu0 0
        %1038 = vmatprep.subr.bf16.mxu0 0
        %1039 = vmatpush1.bf16.xpose.msra.mxu0 0
        %1040 = vmatprep.subr.bf16.mxu0 0
        %1041 = vmatpush1.bf16.xpose.msra.mxu0 0
        %1042 = vmatprep.subr.bf16.mxu0 0
        %1043 = vmatpush1.bf16.xpose.msra.mxu0 0
        %1044 = vmatprep.subr.bf16.mxu0 0
        %1045 = vmatpush1.bf16.xpose.msra.mxu0 0
        %1046 = vmatprep.subr.bf16.mxu0 0
        %1047 = vmatpush1.bf16.xpose.msra.mxu0 0
        %1048 = vmatprep.subr.bf16.mxu0 0
        %1049 = vmatpush1.bf16.xpose.msra.mxu0 0
        %1050 = vmatprep.subr.bf16.mxu0 0
        %1051 = vmatpush1.bf16.xpose.msra.mxu0 0
        %1052 = vmatprep.subr.bf16.mxu0 0
        %1053 = vmatpush1.bf16.xpose.msra.mxu0 0
        %1054 = vmatprep.subr.bf16.mxu0 0
        %1055 = vmatpush1.bf16.xpose.msra.mxu0 0
        %1056 = vmatprep.subr.bf16.mxu0 0
        %1057 = vmatpush1.bf16.xpose.msra.mxu0 0
        %1058 = vmatprep.mubr.bf16.mxu0 0
        %1059 = vmatmul.mubr.bf16.gmra.mrb[0].mxu0 %v1021
        %v1060 = vpop.f32.mrb[0].mxu0
        %v1061 = vadd.f32 0.0, %v1060
        %v1062 = vpop.f32.mrb[0].mxu0
        %v1063 = vpop.f32.mrb[0].mxu0
        %v1064 = vadd.f32 0.0, %v1063
        %v1065 = vpop.f32.mrb[0].mxu0
        %1066 = vdwg.mxu0
        %v1067 = vsel %vm550, %v1061, -inf
        %1068 = vmax.xlane.f32.xlu0 %v1067
        %v1069 = vpop.xlane.xlu0 %1068
        %v1070 = vsel %vm550, %v1064, -inf
        %1071 = vmax.xlane.f32.xlu0 %v1070
        %v1072 = vpop.xlane.xlu0 %1071
        %v1073 = vsub.f32 %v1061, %v1069
        %v1074 = vsub.f32 %v1064, %v1072
        %v1075 = vmul.f32 %v1073, 1.442695
        %v1076 = vpow.pop %v1075
        %v1077 = vmul.f32 %v1074, 1.442695
        %v1078 = vpow.pop %v1077
        %v1079 = vsel %vm550, %v1076, 0.0
        %1080 = vadd.xlane.f32.xlu0 %v1079
        %v1081 = vpop.xlane.xlu0 %1080
        %v1082 = vsel %vm550, %v1078, 0.0
        %1083 = vadd.xlane.f32.xlu0 %v1082
        %v1084 = vpop.xlane.xlu0 %1083
        %v1085 = vrcp.pop %v1081
        %v1086 = vrcp.pop %v1084
        %v1087 = vmul.f32 %v1076, %v1085
        %v1088 = vmul.f32 %v1078, %v1086
        %v1089 = vpack.c.bf16 %v1088, %v1087
        %1090 = vrot.lane.b32.xlu0 %v497, 84
        %v1091 = vpop.permute.xlu0 %1090
        %v1094 = vsel %vm550, %v1089, 0
        %1096 = vmatprep.subr.bf16.mxu0 0
        %1097 = vmatpush1.bf16.msra.mxu0 %v1091
        %1098 = vmatprep.subr.bf16.mxu0 0
        %1099 = vmatpush1.bf16.msra.mxu0 0
        %1100 = vmatprep.subr.bf16.mxu0 0
        %1101 = vmatpush1.bf16.msra.mxu0 0
        %1102 = vmatprep.subr.bf16.mxu0 0
        %1103 = vmatpush1.bf16.msra.mxu0 0
        %1104 = vmatprep.subr.bf16.mxu0 0
        %1105 = vmatpush1.bf16.msra.mxu0 0
        %1106 = vmatprep.subr.bf16.mxu0 0
        %1107 = vmatpush1.bf16.msra.mxu0 0
        %1108 = vmatprep.subr.bf16.mxu0 0
        %1109 = vmatpush1.bf16.msra.mxu0 0
        %1110 = vmatprep.subr.bf16.mxu0 0
        %1111 = vmatpush1.bf16.msra.mxu0 0
        %1112 = vmatprep.subr.bf16.mxu0 0
        %1113 = vmatpush1.bf16.msra.mxu0 0
        %1114 = vmatprep.subr.bf16.mxu0 0
        %1115 = vmatpush1.bf16.msra.mxu0 0
        %1116 = vmatprep.subr.bf16.mxu0 0
        %1117 = vmatpush1.bf16.msra.mxu0 0
        %1118 = vmatprep.subr.bf16.mxu0 0
        %1119 = vmatpush1.bf16.msra.mxu0 0
        %1120 = vmatprep.subr.bf16.mxu0 0
        %1121 = vmatpush1.bf16.msra.mxu0 0
        %1122 = vmatprep.subr.bf16.mxu0 0
        %1123 = vmatpush1.bf16.msra.mxu0 0
        %1124 = vmatprep.subr.bf16.mxu0 0
        %1125 = vmatpush1.bf16.msra.mxu0 0
        %1126 = vmatprep.subr.bf16.mxu0 0
        %1127 = vmatpush1.bf16.msra.mxu0 0
        %1128 = vmatprep.mubr.bf16.mxu0 0
        %1129 = vmatmul.mubr.bf16.gmra.mrb[0].mxu0 %v1094
        %v1130 = vpop.f32.mrb[0].mxu0
        %v1131 = vadd.f32 0.0, %v1130
        %v1132 = vpop.f32.mrb[0].mxu0
        %v1133 = vpop.f32.mrb[0].mxu0
        %v1134 = vadd.f32 0.0, %v1133
        %v1135 = vpop.f32.mrb[0].mxu0
        %1136 = vdwg.mxu0
        %v1137 = vpack.c.bf16 %v1134, %v1131
        %v1139 = vunpack.c.l.b16 %v499
        %v1140 = vpack.c.b16 %v1139, %v1139
        %v1141 = vrot.slane %v1140, 2
        %v1143 = vsel %vm502, %v1137, 0
        %v1146 = vsel %vm753, %v1141, 0
        %1148 = vmatprep.subr.bf16.mxu0 0
        %1149 = vmatpush1.bf16.msra.mxu0 %v1146
        %1150 = vmatprep.subr.bf16.mxu0 0
        %1151 = vmatpush1.bf16.msra.mxu0 0
        %1152 = vmatprep.subr.bf16.mxu0 0
        %1153 = vmatpush1.bf16.msra.mxu0 0
        %1154 = vmatprep.subr.bf16.mxu0 0
        %1155 = vmatpush1.bf16.msra.mxu0 0
        %1156 = vmatprep.subr.bf16.mxu0 0
        %1157 = vmatpush1.bf16.msra.mxu0 0
        %1158 = vmatprep.subr.bf16.mxu0 0
        %1159 = vmatpush1.bf16.msra.mxu0 0
        %1160 = vmatprep.subr.bf16.mxu0 0
        %1161 = vmatpush1.bf16.msra.mxu0 0
        %1162 = vmatprep.subr.bf16.mxu0 0
        %1163 = vmatpush1.bf16.msra.mxu0 0
        %1164 = vmatprep.subr.bf16.mxu0 0
        %1165 = vmatpush1.bf16.msra.mxu0 0
        %1166 = vmatprep.subr.bf16.mxu0 0
        %1167 = vmatpush1.bf16.msra.mxu0 0
        %1168 = vmatprep.subr.bf16.mxu0 0
        %1169 = vmatpush1.bf16.msra.mxu0 0
        %1170 = vmatprep.subr.bf16.mxu0 0
        %1171 = vmatpush1.bf16.msra.mxu0 0
        %1172 = vmatprep.subr.bf16.mxu0 0
        %1173 = vmatpush1.bf16.msra.mxu0 0
        %1174 = vmatprep.subr.bf16.mxu0 0
        %1175 = vmatpush1.bf16.msra.mxu0 0
        %1176 = vmatprep.subr.bf16.mxu0 0
        %1177 = vmatpush1.bf16.msra.mxu0 0
        %1178 = vmatprep.subr.bf16.mxu0 0
        %1179 = vmatpush1.bf16.msra.mxu0 0
        %1180 = vmatprep.mubr.bf16.mxu0 0
        %1181 = vmatmul.mubr.bf16.gmra.mrb[0].mxu0 %v1143
        %v1182 = vpop.f32.mrb[0].mxu0
        %v1183 = vadd.f32 0.0, %v1182
        %v1184 = vpop.f32.mrb[0].mxu0
        %v1185 = vpop.f32.mrb[0].mxu0
        %v1186 = vadd.f32 0.0, %v1185
        %v1187 = vpop.f32.mrb[0].mxu0
        %1188 = vdwg.mxu0
        %v1189 = vadd.f32 %v1014, %v1183
        %v1190 = vadd.f32 %v1015, %v1186
        %1191 = vrot.lane.b32.xlu0 %v496, 112
        %v1192 = vpop.permute.xlu0 %1191
        %1193 = vrot.lane.b32.xlu0 %v497, 112
        %v1194 = vpop.permute.xlu0 %1193
        %v1196 = vsel %vm502, %v1192, 0
        %v1199 = vsel %vm502, %v1194, 0
        %1201 = vmatprep.subr.bf16.mxu0 0
        %1202 = vmatpush1.bf16.xpose.msra.mxu0 %v1199
        %1203 = vmatprep.subr.bf16.mxu0 0
        %1204 = vmatpush1.bf16.xpose.msra.mxu0 0
        %1205 = vmatprep.subr.bf16.mxu0 0
        %1206 = vmatpush1.bf16.xpose.msra.mxu0 0
        %1207 = vmatprep.subr.bf16.mxu0 0
        %1208 = vmatpush1.bf16.xpose.msra.mxu0 0
        %1209 = vmatprep.subr.bf16.mxu0 0
        %1210 = vmatpush1.bf16.xpose.msra.mxu0 0
        %1211 = vmatprep.subr.bf16.mxu0 0
        %1212 = vmatpush1.bf16.xpose.msra.mxu0 0
        %1213 = vmatprep.subr.bf16.mxu0 0
        %1214 = vmatpush1.bf16.xpose.msra.mxu0 0
        %1215 = vmatprep.subr.bf16.mxu0 0
        %1216 = vmatpush1.bf16.xpose.msra.mxu0 0
        %1217 = vmatprep.subr.bf16.mxu0 0
        %1218 = vmatpush1.bf16.xpose.msra.mxu0 0
        %1219 = vmatprep.subr.bf16.mxu0 0
        %1220 = vmatpush1.bf16.xpose.msra.mxu0 0
        %1221 = vmatprep.subr.bf16.mxu0 0
        %1222 = vmatpush1.bf16.xpose.msra.mxu0 0
        %1223 = vmatprep.subr.bf16.mxu0 0
        %1224 = vmatpush1.bf16.xpose.msra.mxu0 0
        %1225 = vmatprep.subr.bf16.mxu0 0
        %1226 = vmatpush1.bf16.xpose.msra.mxu0 0
        %1227 = vmatprep.subr.bf16.mxu0 0
        %1228 = vmatpush1.bf16.xpose.msra.mxu0 0
        %1229 = vmatprep.subr.bf16.mxu0 0
        %1230 = vmatpush1.bf16.xpose.msra.mxu0 0
        %1231 = vmatprep.subr.bf16.mxu0 0
        %1232 = vmatpush1.bf16.xpose.msra.mxu0 0
        %1233 = vmatprep.mubr.bf16.mxu0 0
        %1234 = vmatmul.mubr.bf16.gmra.mrb[0].mxu0 %v1196
        %v1235 = vpop.f32.mrb[0].mxu0
        %v1236 = vadd.f32 0.0, %v1235
        %v1237 = vpop.f32.mrb[0].mxu0
        %v1238 = vpop.f32.mrb[0].mxu0
        %v1239 = vadd.f32 0.0, %v1238
        %v1240 = vpop.f32.mrb[0].mxu0
        %1241 = vdwg.mxu0
        %v1242 = vsel %vm550, %v1236, -inf
        %1243 = vmax.xlane.f32.xlu0 %v1242
        %v1244 = vpop.xlane.xlu0 %1243
        %v1245 = vsel %vm550, %v1239, -inf
        %1246 = vmax.xlane.f32.xlu0 %v1245
        %v1247 = vpop.xlane.xlu0 %1246
        %v1248 = vsub.f32 %v1236, %v1244
        %v1249 = vsub.f32 %v1239, %v1247
        %v1250 = vmul.f32 %v1248, 1.442695
        %v1251 = vpow.pop %v1250
        %v1252 = vmul.f32 %v1249, 1.442695
        %v1253 = vpow.pop %v1252
        %v1254 = vsel %vm550, %v1251, 0.0
        %1255 = vadd.xlane.f32.xlu0 %v1254
        %v1256 = vpop.xlane.xlu0 %1255
        %v1257 = vsel %vm550, %v1253, 0.0
        %1258 = vadd.xlane.f32.xlu0 %v1257
        %v1259 = vpop.xlane.xlu0 %1258
        %v1260 = vrcp.pop %v1256
        %v1261 = vrcp.pop %v1259
        %v1262 = vmul.f32 %v1251, %v1260
        %v1263 = vmul.f32 %v1253, %v1261
        %v1264 = vpack.c.bf16 %v1263, %v1262
        %1265 = vrot.lane.b32.xlu0 %v497, 80
        %v1266 = vpop.permute.xlu0 %1265
        %v1269 = vsel %vm550, %v1264, 0
        %1271 = vmatprep.subr.bf16.mxu0 0
        %1272 = vmatpush1.bf16.msra.mxu0 %v1266
        %1273 = vmatprep.subr.bf16.mxu0 0
        %1274 = vmatpush1.bf16.msra.mxu0 0
        %1275 = vmatprep.subr.bf16.mxu0 0
        %1276 = vmatpush1.bf16.msra.mxu0 0
        %1277 = vmatprep.subr.bf16.mxu0 0
        %1278 = vmatpush1.bf16.msra.mxu0 0
        %1279 = vmatprep.subr.bf16.mxu0 0
        %1280 = vmatpush1.bf16.msra.mxu0 0
        %1281 = vmatprep.subr.bf16.mxu0 0
        %1282 = vmatpush1.bf16.msra.mxu0 0
        %1283 = vmatprep.subr.bf16.mxu0 0
        %1284 = vmatpush1.bf16.msra.mxu0 0
        %1285 = vmatprep.subr.bf16.mxu0 0
        %1286 = vmatpush1.bf16.msra.mxu0 0
        %1287 = vmatprep.subr.bf16.mxu0 0
        %1288 = vmatpush1.bf16.msra.mxu0 0
        %1289 = vmatprep.subr.bf16.mxu0 0
        %1290 = vmatpush1.bf16.msra.mxu0 0
        %1291 = vmatprep.subr.bf16.mxu0 0
        %1292 = vmatpush1.bf16.msra.mxu0 0
        %1293 = vmatprep.subr.bf16.mxu0 0
        %1294 = vmatpush1.bf16.msra.mxu0 0
        %1295 = vmatprep.subr.bf16.mxu0 0
        %1296 = vmatpush1.bf16.msra.mxu0 0
        %1297 = vmatprep.subr.bf16.mxu0 0
        %1298 = vmatpush1.bf16.msra.mxu0 0
        %1299 = vmatprep.subr.bf16.mxu0 0
        %1300 = vmatpush1.bf16.msra.mxu0 0
        %1301 = vmatprep.subr.bf16.mxu0 0
        %1302 = vmatpush1.bf16.msra.mxu0 0
        %1303 = vmatprep.mubr.bf16.mxu0 0
        %1304 = vmatmul.mubr.bf16.gmra.mrb[0].mxu0 %v1269
        %v1305 = vpop.f32.mrb[0].mxu0
        %v1306 = vadd.f32 0.0, %v1305
        %v1307 = vpop.f32.mrb[0].mxu0
        %v1308 = vpop.f32.mrb[0].mxu0
        %v1309 = vadd.f32 0.0, %v1308
        %v1310 = vpop.f32.mrb[0].mxu0
        %1311 = vdwg.mxu0
        %v1312 = vpack.c.bf16 %v1309, %v1306
        %v1314 = vsel %vm502, %v1312, 0
        %v1317 = vsel %vm753, %v500, 0
        %1319 = vmatprep.subr.bf16.mxu0 0
        %1320 = vmatpush1.bf16.msra.mxu0 %v1317
        %1321 = vmatprep.subr.bf16.mxu0 0
        %1322 = vmatpush1.bf16.msra.mxu0 0
        %1323 = vmatprep.subr.bf16.mxu0 0
        %1324 = vmatpush1.bf16.msra.mxu0 0
        %1325 = vmatprep.subr.bf16.mxu0 0
        %1326 = vmatpush1.bf16.msra.mxu0 0
        %1327 = vmatprep.subr.bf16.mxu0 0
        %1328 = vmatpush1.bf16.msra.mxu0 0
        %1329 = vmatprep.subr.bf16.mxu0 0
        %1330 = vmatpush1.bf16.msra.mxu0 0
        %1331 = vmatprep.subr.bf16.mxu0 0
        %1332 = vmatpush1.bf16.msra.mxu0 0
        %1333 = vmatprep.subr.bf16.mxu0 0
        %1334 = vmatpush1.bf16.msra.mxu0 0
        %1335 = vmatprep.subr.bf16.mxu0 0
        %1336 = vmatpush1.bf16.msra.mxu0 0
        %1337 = vmatprep.subr.bf16.mxu0 0
        %1338 = vmatpush1.bf16.msra.mxu0 0
        %1339 = vmatprep.subr.bf16.mxu0 0
        %1340 = vmatpush1.bf16.msra.mxu0 0
        %1341 = vmatprep.subr.bf16.mxu0 0
        %1342 = vmatpush1.bf16.msra.mxu0 0
        %1343 = vmatprep.subr.bf16.mxu0 0
        %1344 = vmatpush1.bf16.msra.mxu0 0
        %1345 = vmatprep.subr.bf16.mxu0 0
        %1346 = vmatpush1.bf16.msra.mxu0 0
        %1347 = vmatprep.subr.bf16.mxu0 0
        %1348 = vmatpush1.bf16.msra.mxu0 0
        %1349 = vmatprep.subr.bf16.mxu0 0
        %1350 = vmatpush1.bf16.msra.mxu0 0
        %1351 = vmatprep.mubr.bf16.mxu0 0
        %1352 = vmatmul.mubr.bf16.gmra.mrb[0].mxu0 %v1314
        %v1353 = vpop.f32.mrb[0].mxu0
        %v1354 = vadd.f32 0.0, %v1353
        %v1355 = vpop.f32.mrb[0].mxu0
        %v1356 = vpop.f32.mrb[0].mxu0
        %v1357 = vadd.f32 0.0, %v1356
        %v1358 = vpop.f32.mrb[0].mxu0
        %1359 = vdwg.mxu0
        %v1360 = vadd.f32 %v1189, %v1354
        %v1361 = vadd.f32 %v1190, %v1357
        %1362 = vrot.lane.b32.xlu0 %v496, 108
        %v1363 = vpop.permute.xlu0 %1362
        %1364 = vrot.lane.b32.xlu0 %v497, 108
        %v1365 = vpop.permute.xlu0 %1364
        %v1367 = vsel %vm502, %v1363, 0
        %v1370 = vsel %vm502, %v1365, 0
        %1372 = vmatprep.subr.bf16.mxu0 0
        %1373 = vmatpush1.bf16.xpose.msra.mxu0 %v1370
        %1374 = vmatprep.subr.bf16.mxu0 0
        %1375 = vmatpush1.bf16.xpose.msra.mxu0 0
        %1376 = vmatprep.subr.bf16.mxu0 0
        %1377 = vmatpush1.bf16.xpose.msra.mxu0 0
        %1378 = vmatprep.subr.bf16.mxu0 0
        %1379 = vmatpush1.bf16.xpose.msra.mxu0 0
        %1380 = vmatprep.subr.bf16.mxu0 0
        %1381 = vmatpush1.bf16.xpose.msra.mxu0 0
        %1382 = vmatprep.subr.bf16.mxu0 0
        %1383 = vmatpush1.bf16.xpose.msra.mxu0 0
        %1384 = vmatprep.subr.bf16.mxu0 0
        %1385 = vmatpush1.bf16.xpose.msra.mxu0 0
        %1386 = vmatprep.subr.bf16.mxu0 0
        %1387 = vmatpush1.bf16.xpose.msra.mxu0 0
        %1388 = vmatprep.subr.bf16.mxu0 0
        %1389 = vmatpush1.bf16.xpose.msra.mxu0 0
        %1390 = vmatprep.subr.bf16.mxu0 0
        %1391 = vmatpush1.bf16.xpose.msra.mxu0 0
        %1392 = vmatprep.subr.bf16.mxu0 0
        %1393 = vmatpush1.bf16.xpose.msra.mxu0 0
        %1394 = vmatprep.subr.bf16.mxu0 0
        %1395 = vmatpush1.bf16.xpose.msra.mxu0 0
        %1396 = vmatprep.subr.bf16.mxu0 0
        %1397 = vmatpush1.bf16.xpose.msra.mxu0 0
        %1398 = vmatprep.subr.bf16.mxu0 0
        %1399 = vmatpush1.bf16.xpose.msra.mxu0 0
        %1400 = vmatprep.subr.bf16.mxu0 0
        %1401 = vmatpush1.bf16.xpose.msra.mxu0 0
        %1402 = vmatprep.subr.bf16.mxu0 0
        %1403 = vmatpush1.bf16.xpose.msra.mxu0 0
        %1404 = vmatprep.mubr.bf16.mxu0 0
        %1405 = vmatmul.mubr.bf16.gmra.mrb[0].mxu0 %v1367
        %v1406 = vpop.f32.mrb[0].mxu0
        %v1407 = vadd.f32 0.0, %v1406
        %v1408 = vpop.f32.mrb[0].mxu0
        %v1409 = vpop.f32.mrb[0].mxu0
        %v1410 = vadd.f32 0.0, %v1409
        %v1411 = vpop.f32.mrb[0].mxu0
        %1412 = vdwg.mxu0
        %v1413 = vsel %vm550, %v1407, -inf
        %1414 = vmax.xlane.f32.xlu0 %v1413
        %v1415 = vpop.xlane.xlu0 %1414
        %v1416 = vsel %vm550, %v1410, -inf
        %1417 = vmax.xlane.f32.xlu0 %v1416
        %v1418 = vpop.xlane.xlu0 %1417
        %v1419 = vsub.f32 %v1407, %v1415
        %v1420 = vsub.f32 %v1410, %v1418
        %v1421 = vmul.f32 %v1419, 1.442695
        %v1422 = vpow.pop %v1421
        %v1423 = vmul.f32 %v1420, 1.442695
        %v1424 = vpow.pop %v1423
        %v1425 = vsel %vm550, %v1422, 0.0
        %1426 = vadd.xlane.f32.xlu0 %v1425
        %v1427 = vpop.xlane.xlu0 %1426
        %v1428 = vsel %vm550, %v1424, 0.0
        %1429 = vadd.xlane.f32.xlu0 %v1428
        %v1430 = vpop.xlane.xlu0 %1429
        %v1431 = vrcp.pop %v1427
        %v1432 = vrcp.pop %v1430
        %v1433 = vmul.f32 %v1422, %v1431
        %v1434 = vmul.f32 %v1424, %v1432
        %v1435 = vpack.c.bf16 %v1434, %v1433
        %1436 = vrot.lane.b32.xlu0 %v497, 76
        %v1437 = vpop.permute.xlu0 %1436
        %v1440 = vsel %vm550, %v1435, 0
        %1442 = vmatprep.subr.bf16.mxu0 0
        %1443 = vmatpush1.bf16.msra.mxu0 %v1437
        %1444 = vmatprep.subr.bf16.mxu0 0
        %1445 = vmatpush1.bf16.msra.mxu0 0
        %1446 = vmatprep.subr.bf16.mxu0 0
        %1447 = vmatpush1.bf16.msra.mxu0 0
        %1448 = vmatprep.subr.bf16.mxu0 0
        %1449 = vmatpush1.bf16.msra.mxu0 0
        %1450 = vmatprep.subr.bf16.mxu0 0
        %1451 = vmatpush1.bf16.msra.mxu0 0
        %1452 = vmatprep.subr.bf16.mxu0 0
        %1453 = vmatpush1.bf16.msra.mxu0 0
        %1454 = vmatprep.subr.bf16.mxu0 0
        %1455 = vmatpush1.bf16.msra.mxu0 0
        %1456 = vmatprep.subr.bf16.mxu0 0
        %1457 = vmatpush1.bf16.msra.mxu0 0
        %1458 = vmatprep.subr.bf16.mxu0 0
        %1459 = vmatpush1.bf16.msra.mxu0 0
        %1460 = vmatprep.subr.bf16.mxu0 0
        %1461 = vmatpush1.bf16.msra.mxu0 0
        %1462 = vmatprep.subr.bf16.mxu0 0
        %1463 = vmatpush1.bf16.msra.mxu0 0
        %1464 = vmatprep.subr.bf16.mxu0 0
        %1465 = vmatpush1.bf16.msra.mxu0 0
        %1466 = vmatprep.subr.bf16.mxu0 0
        %1467 = vmatpush1.bf16.msra.mxu0 0
        %1468 = vmatprep.subr.bf16.mxu0 0
        %1469 = vmatpush1.bf16.msra.mxu0 0
        %1470 = vmatprep.subr.bf16.mxu0 0
        %1471 = vmatpush1.bf16.msra.mxu0 0
        %1472 = vmatprep.subr.bf16.mxu0 0
        %1473 = vmatpush1.bf16.msra.mxu0 0
        %1474 = vmatprep.mubr.bf16.mxu0 0
        %1475 = vmatmul.mubr.bf16.gmra.mrb[0].mxu0 %v1440
        %v1476 = vpop.f32.mrb[0].mxu0
        %v1477 = vadd.f32 0.0, %v1476
        %v1478 = vpop.f32.mrb[0].mxu0
        %v1479 = vpop.f32.mrb[0].mxu0
        %v1480 = vadd.f32 0.0, %v1479
        %v1481 = vpop.f32.mrb[0].mxu0
        %1482 = vdwg.mxu0
        %v1483 = vpack.c.bf16 %v1480, %v1477
        %v1485 = vunpack.c.l.b16 %v500
        %v1486 = vpack.c.b16 %v1485, %v1485
        %v1487 = vrot.slane %v1486, 2
        %v1489 = vsel %vm502, %v1483, 0
        %v1492 = vsel %vm753, %v1487, 0
        %1494 = vmatprep.subr.bf16.mxu0 0
        %1495 = vmatpush1.bf16.msra.mxu0 %v1492
        %1496 = vmatprep.subr.bf16.mxu0 0
        %1497 = vmatpush1.bf16.msra.mxu0 0
        %1498 = vmatprep.subr.bf16.mxu0 0
        %1499 = vmatpush1.bf16.msra.mxu0 0
        %1500 = vmatprep.subr.bf16.mxu0 0
        %1501 = vmatpush1.bf16.msra.mxu0 0
        %1502 = vmatprep.subr.bf16.mxu0 0
        %1503 = vmatpush1.bf16.msra.mxu0 0
        %1504 = vmatprep.subr.bf16.mxu0 0
        %1505 = vmatpush1.bf16.msra.mxu0 0
        %1506 = vmatprep.subr.bf16.mxu0 0
        %1507 = vmatpush1.bf16.msra.mxu0 0
        %1508 = vmatprep.subr.bf16.mxu0 0
        %1509 = vmatpush1.bf16.msra.mxu0 0
        %1510 = vmatprep.subr.bf16.mxu0 0
        %1511 = vmatpush1.bf16.msra.mxu0 0
        %1512 = vmatprep.subr.bf16.mxu0 0
        %1513 = vmatpush1.bf16.msra.mxu0 0
        %1514 = vmatprep.subr.bf16.mxu0 0
        %1515 = vmatpush1.bf16.msra.mxu0 0
        %1516 = vmatprep.subr.bf16.mxu0 0
        %1517 = vmatpush1.bf16.msra.mxu0 0
        %1518 = vmatprep.subr.bf16.mxu0 0
        %1519 = vmatpush1.bf16.msra.mxu0 0
        %1520 = vmatprep.subr.bf16.mxu0 0
        %1521 = vmatpush1.bf16.msra.mxu0 0
        %1522 = vmatprep.subr.bf16.mxu0 0
        %1523 = vmatpush1.bf16.msra.mxu0 0
        %1524 = vmatprep.subr.bf16.mxu0 0
        %1525 = vmatpush1.bf16.msra.mxu0 0
        %1526 = vmatprep.mubr.bf16.mxu0 0
        %1527 = vmatmul.mubr.bf16.gmra.mrb[0].mxu0 %v1489
        %v1528 = vpop.f32.mrb[0].mxu0
        %v1529 = vadd.f32 0.0, %v1528
        %v1530 = vpop.f32.mrb[0].mxu0
        %v1531 = vpop.f32.mrb[0].mxu0
        %v1532 = vadd.f32 0.0, %v1531
        %v1533 = vpop.f32.mrb[0].mxu0
        %1534 = vdwg.mxu0
        %v1535 = vadd.f32 %v1360, %v1529
        %v1536 = vadd.f32 %v1361, %v1532
        %1537 = vrot.lane.b32.xlu0 %v496, 104
        %v1538 = vpop.permute.xlu0 %1537
        %1539 = vrot.lane.b32.xlu0 %v497, 104
        %v1540 = vpop.permute.xlu0 %1539
        %v1542 = vsel %vm502, %v1538, 0
        %v1545 = vsel %vm502, %v1540, 0
        %1547 = vmatprep.subr.bf16.mxu0 0
        %1548 = vmatpush1.bf16.xpose.msra.mxu0 %v1545
        %1549 = vmatprep.subr.bf16.mxu0 0
        %1550 = vmatpush1.bf16.xpose.msra.mxu0 0
        %1551 = vmatprep.subr.bf16.mxu0 0
        %1552 = vmatpush1.bf16.xpose.msra.mxu0 0
        %1553 = vmatprep.subr.bf16.mxu0 0
        %1554 = vmatpush1.bf16.xpose.msra.mxu0 0
        %1555 = vmatprep.subr.bf16.mxu0 0
        %1556 = vmatpush1.bf16.xpose.msra.mxu0 0
        %1557 = vmatprep.subr.bf16.mxu0 0
        %1558 = vmatpush1.bf16.xpose.msra.mxu0 0
        %1559 = vmatprep.subr.bf16.mxu0 0
        %1560 = vmatpush1.bf16.xpose.msra.mxu0 0
        %1561 = vmatprep.subr.bf16.mxu0 0
        %1562 = vmatpush1.bf16.xpose.msra.mxu0 0
        %1563 = vmatprep.subr.bf16.mxu0 0
        %1564 = vmatpush1.bf16.xpose.msra.mxu0 0
        %1565 = vmatprep.subr.bf16.mxu0 0
        %1566 = vmatpush1.bf16.xpose.msra.mxu0 0
        %1567 = vmatprep.subr.bf16.mxu0 0
        %1568 = vmatpush1.bf16.xpose.msra.mxu0 0
        %1569 = vmatprep.subr.bf16.mxu0 0
        %1570 = vmatpush1.bf16.xpose.msra.mxu0 0
        %1571 = vmatprep.subr.bf16.mxu0 0
        %1572 = vmatpush1.bf16.xpose.msra.mxu0 0
        %1573 = vmatprep.subr.bf16.mxu0 0
        %1574 = vmatpush1.bf16.xpose.msra.mxu0 0
        %1575 = vmatprep.subr.bf16.mxu0 0
        %1576 = vmatpush1.bf16.xpose.msra.mxu0 0
        %1577 = vmatprep.subr.bf16.mxu0 0
        %1578 = vmatpush1.bf16.xpose.msra.mxu0 0
        %1579 = vmatprep.mubr.bf16.mxu0 0
        %1580 = vmatmul.mubr.bf16.gmra.mrb[0].mxu0 %v1542
        %v1581 = vpop.f32.mrb[0].mxu0
        %v1582 = vadd.f32 0.0, %v1581
        %v1583 = vpop.f32.mrb[0].mxu0
        %v1584 = vpop.f32.mrb[0].mxu0
        %v1585 = vadd.f32 0.0, %v1584
        %v1586 = vpop.f32.mrb[0].mxu0
        %1587 = vdwg.mxu0
        %v1588 = vsel %vm550, %v1582, -inf
        %1589 = vmax.xlane.f32.xlu0 %v1588
        %v1590 = vpop.xlane.xlu0 %1589
        %v1591 = vsel %vm550, %v1585, -inf
        %1592 = vmax.xlane.f32.xlu0 %v1591
        %v1593 = vpop.xlane.xlu0 %1592
        %v1594 = vsub.f32 %v1582, %v1590
        %v1595 = vsub.f32 %v1585, %v1593
        %v1596 = vmul.f32 %v1594, 1.442695
        %v1597 = vpow.pop %v1596
        %v1598 = vmul.f32 %v1595, 1.442695
        %v1599 = vpow.pop %v1598
        %v1600 = vsel %vm550, %v1597, 0.0
        %1601 = vadd.xlane.f32.xlu0 %v1600
        %v1602 = vpop.xlane.xlu0 %1601
        %v1603 = vsel %vm550, %v1599, 0.0
        %1604 = vadd.xlane.f32.xlu0 %v1603
        %v1605 = vpop.xlane.xlu0 %1604
        %v1606 = vrcp.pop %v1602
        %v1607 = vrcp.pop %v1605
        %v1608 = vmul.f32 %v1597, %v1606
        %v1609 = vmul.f32 %v1599, %v1607
        %v1610 = vpack.c.bf16 %v1609, %v1608
        %1611 = vrot.lane.b32.xlu0 %v497, 72
        %v1612 = vpop.permute.xlu0 %1611
        %v1615 = vsel %vm550, %v1610, 0
        %1617 = vmatprep.subr.bf16.mxu0 0
        %1618 = vmatpush1.bf16.msra.mxu0 %v1612
        %1619 = vmatprep.subr.bf16.mxu0 0
        %1620 = vmatpush1.bf16.msra.mxu0 0
        %1621 = vmatprep.subr.bf16.mxu0 0
        %1622 = vmatpush1.bf16.msra.mxu0 0
        %1623 = vmatprep.subr.bf16.mxu0 0
        %1624 = vmatpush1.bf16.msra.mxu0 0
        %1625 = vmatprep.subr.bf16.mxu0 0
        %1626 = vmatpush1.bf16.msra.mxu0 0
        %1627 = vmatprep.subr.bf16.mxu0 0
        %1628 = vmatpush1.bf16.msra.mxu0 0
        %1629 = vmatprep.subr.bf16.mxu0 0
        %1630 = vmatpush1.bf16.msra.mxu0 0
        %1631 = vmatprep.subr.bf16.mxu0 0
        %1632 = vmatpush1.bf16.msra.mxu0 0
        %1633 = vmatprep.subr.bf16.mxu0 0
        %1634 = vmatpush1.bf16.msra.mxu0 0
        %1635 = vmatprep.subr.bf16.mxu0 0
        %1636 = vmatpush1.bf16.msra.mxu0 0
        %1637 = vmatprep.subr.bf16.mxu0 0
        %1638 = vmatpush1.bf16.msra.mxu0 0
        %1639 = vmatprep.subr.bf16.mxu0 0
        %1640 = vmatpush1.bf16.msra.mxu0 0
        %1641 = vmatprep.subr.bf16.mxu0 0
        %1642 = vmatpush1.bf16.msra.mxu0 0
        %1643 = vmatprep.subr.bf16.mxu0 0
        %1644 = vmatpush1.bf16.msra.mxu0 0
        %1645 = vmatprep.subr.bf16.mxu0 0
        %1646 = vmatpush1.bf16.msra.mxu0 0
        %1647 = vmatprep.subr.bf16.mxu0 0
        %1648 = vmatpush1.bf16.msra.mxu0 0
        %1649 = vmatprep.mubr.bf16.mxu0 0
        %1650 = vmatmul.mubr.bf16.gmra.mrb[0].mxu0 %v1615
        %v1651 = vpop.f32.mrb[0].mxu0
        %v1652 = vadd.f32 0.0, %v1651
        %v1653 = vpop.f32.mrb[0].mxu0
        %v1654 = vpop.f32.mrb[0].mxu0
        %v1655 = vadd.f32 0.0, %v1654
        %v1656 = vpop.f32.mrb[0].mxu0
        %1657 = vdwg.mxu0
        %v1658 = vpack.c.bf16 %v1655, %v1652
        %v1660 = vsel %vm502, %v1658, 0
        %v1663 = vsel %vm753, %v501, 0
        %1665 = vmatprep.subr.bf16.mxu0 0
        %1666 = vmatpush1.bf16.msra.mxu0 %v1663
        %1667 = vmatprep.subr.bf16.mxu0 0
        %1668 = vmatpush1.bf16.msra.mxu0 0
        %1669 = vmatprep.subr.bf16.mxu0 0
        %1670 = vmatpush1.bf16.msra.mxu0 0
        %1671 = vmatprep.subr.bf16.mxu0 0
        %1672 = vmatpush1.bf16.msra.mxu0 0
        %1673 = vmatprep.subr.bf16.mxu0 0
        %1674 = vmatpush1.bf16.msra.mxu0 0
        %1675 = vmatprep.subr.bf16.mxu0 0
        %1676 = vmatpush1.bf16.msra.mxu0 0
        %1677 = vmatprep.subr.bf16.mxu0 0
        %1678 = vmatpush1.bf16.msra.mxu0 0
        %1679 = vmatprep.subr.bf16.mxu0 0
        %1680 = vmatpush1.bf16.msra.mxu0 0
        %1681 = vmatprep.subr.bf16.mxu0 0
        %1682 = vmatpush1.bf16.msra.mxu0 0
        %1683 = vmatprep.subr.bf16.mxu0 0
        %1684 = vmatpush1.bf16.msra.mxu0 0
        %1685 = vmatprep.subr.bf16.mxu0 0
        %1686 = vmatpush1.bf16.msra.mxu0 0
        %1687 = vmatprep.subr.bf16.mxu0 0
        %1688 = vmatpush1.bf16.msra.mxu0 0
        %1689 = vmatprep.subr.bf16.mxu0 0
        %1690 = vmatpush1.bf16.msra.mxu0 0
        %1691 = vmatprep.subr.bf16.mxu0 0
        %1692 = vmatpush1.bf16.msra.mxu0 0
        %1693 = vmatprep.subr.bf16.mxu0 0
        %1694 = vmatpush1.bf16.msra.mxu0 0
        %1695 = vmatprep.subr.bf16.mxu0 0
        %1696 = vmatpush1.bf16.msra.mxu0 0
        %1697 = vmatprep.mubr.bf16.mxu0 0
        %1698 = vmatmul.mubr.bf16.gmra.mrb[0].mxu0 %v1660
        %v1699 = vpop.f32.mrb[0].mxu0
        %v1700 = vadd.f32 0.0, %v1699
        %v1701 = vpop.f32.mrb[0].mxu0
        %v1702 = vpop.f32.mrb[0].mxu0
        %v1703 = vadd.f32 0.0, %v1702
        %v1704 = vpop.f32.mrb[0].mxu0
        %1705 = vdwg.mxu0
        %v1706 = vadd.f32 %v1535, %v1700
        %v1707 = vadd.f32 %v1536, %v1703
        %1708 = vrot.lane.b32.xlu0 %v496, 100
        %v1709 = vpop.permute.xlu0 %1708
        %1710 = vrot.lane.b32.xlu0 %v497, 100
        %v1711 = vpop.permute.xlu0 %1710
        %v1713 = vsel %vm502, %v1709, 0
        %v1716 = vsel %vm502, %v1711, 0
        %1718 = vmatprep.subr.bf16.mxu0 0
        %1719 = vmatpush1.bf16.xpose.msra.mxu0 %v1716
        %1720 = vmatprep.subr.bf16.mxu0 0
        %1721 = vmatpush1.bf16.xpose.msra.mxu0 0
        %1722 = vmatprep.subr.bf16.mxu0 0
        %1723 = vmatpush1.bf16.xpose.msra.mxu0 0
        %1724 = vmatprep.subr.bf16.mxu0 0
        %1725 = vmatpush1.bf16.xpose.msra.mxu0 0
        %1726 = vmatprep.subr.bf16.mxu0 0
        %1727 = vmatpush1.bf16.xpose.msra.mxu0 0
        %1728 = vmatprep.subr.bf16.mxu0 0
        %1729 = vmatpush1.bf16.xpose.msra.mxu0 0
        %1730 = vmatprep.subr.bf16.mxu0 0
        %1731 = vmatpush1.bf16.xpose.msra.mxu0 0
        %1732 = vmatprep.subr.bf16.mxu0 0
        %1733 = vmatpush1.bf16.xpose.msra.mxu0 0
        %1734 = vmatprep.subr.bf16.mxu0 0
        %1735 = vmatpush1.bf16.xpose.msra.mxu0 0
        %1736 = vmatprep.subr.bf16.mxu0 0
        %1737 = vmatpush1.bf16.xpose.msra.mxu0 0
        %1738 = vmatprep.subr.bf16.mxu0 0
        %1739 = vmatpush1.bf16.xpose.msra.mxu0 0
        %1740 = vmatprep.subr.bf16.mxu0 0
        %1741 = vmatpush1.bf16.xpose.msra.mxu0 0
        %1742 = vmatprep.subr.bf16.mxu0 0
        %1743 = vmatpush1.bf16.xpose.msra.mxu0 0
        %1744 = vmatprep.subr.bf16.mxu0 0
        %1745 = vmatpush1.bf16.xpose.msra.mxu0 0
        %1746 = vmatprep.subr.bf16.mxu0 0
        %1747 = vmatpush1.bf16.xpose.msra.mxu0 0
        %1748 = vmatprep.subr.bf16.mxu0 0
        %1749 = vmatpush1.bf16.xpose.msra.mxu0 0
        %1750 = vmatprep.mubr.bf16.mxu0 0
        %1751 = vmatmul.mubr.bf16.gmra.mrb[0].mxu0 %v1713
        %v1752 = vpop.f32.mrb[0].mxu0
        %v1753 = vadd.f32 0.0, %v1752
        %v1754 = vpop.f32.mrb[0].mxu0
        %v1755 = vpop.f32.mrb[0].mxu0
        %v1756 = vadd.f32 0.0, %v1755
        %v1757 = vpop.f32.mrb[0].mxu0
        %1758 = vdwg.mxu0
        %v1759 = vsel %vm550, %v1753, -inf
        %1760 = vmax.xlane.f32.xlu0 %v1759
        %v1761 = vpop.xlane.xlu0 %1760
        %v1762 = vsel %vm550, %v1756, -inf
        %1763 = vmax.xlane.f32.xlu0 %v1762
        %v1764 = vpop.xlane.xlu0 %1763
        %v1765 = vsub.f32 %v1753, %v1761
        %v1766 = vsub.f32 %v1756, %v1764
        %v1767 = vmul.f32 %v1765, 1.442695
        %v1768 = vpow.pop %v1767
        %v1769 = vmul.f32 %v1766, 1.442695
        %v1770 = vpow.pop %v1769
        %v1771 = vsel %vm550, %v1768, 0.0
        %1772 = vadd.xlane.f32.xlu0 %v1771
        %v1773 = vpop.xlane.xlu0 %1772
        %v1774 = vsel %vm550, %v1770, 0.0
        %1775 = vadd.xlane.f32.xlu0 %v1774
        %v1776 = vpop.xlane.xlu0 %1775
        %v1777 = vrcp.pop %v1773
        %v1778 = vrcp.pop %v1776
        %v1779 = vmul.f32 %v1768, %v1777
        %v1780 = vmul.f32 %v1770, %v1778
        %v1781 = vpack.c.bf16 %v1780, %v1779
        %1782 = vrot.lane.b32.xlu0 %v497, 68
        %v1783 = vpop.permute.xlu0 %1782
        %v1786 = vsel %vm550, %v1781, 0
        %1788 = vmatprep.subr.bf16.mxu0 0
        %1789 = vmatpush1.bf16.msra.mxu0 %v1783
        %1790 = vmatprep.subr.bf16.mxu0 0
        %1791 = vmatpush1.bf16.msra.mxu0 0
        %1792 = vmatprep.subr.bf16.mxu0 0
        %1793 = vmatpush1.bf16.msra.mxu0 0
        %1794 = vmatprep.subr.bf16.mxu0 0
        %1795 = vmatpush1.bf16.msra.mxu0 0
        %1796 = vmatprep.subr.bf16.mxu0 0
        %1797 = vmatpush1.bf16.msra.mxu0 0
        %1798 = vmatprep.subr.bf16.mxu0 0
        %1799 = vmatpush1.bf16.msra.mxu0 0
        %1800 = vmatprep.subr.bf16.mxu0 0
        %1801 = vmatpush1.bf16.msra.mxu0 0
        %1802 = vmatprep.subr.bf16.mxu0 0
        %1803 = vmatpush1.bf16.msra.mxu0 0
        %1804 = vmatprep.subr.bf16.mxu0 0
        %1805 = vmatpush1.bf16.msra.mxu0 0
        %1806 = vmatprep.subr.bf16.mxu0 0
        %1807 = vmatpush1.bf16.msra.mxu0 0
        %1808 = vmatprep.subr.bf16.mxu0 0
        %1809 = vmatpush1.bf16.msra.mxu0 0
        %1810 = vmatprep.subr.bf16.mxu0 0
        %1811 = vmatpush1.bf16.msra.mxu0 0
        %1812 = vmatprep.subr.bf16.mxu0 0
        %1813 = vmatpush1.bf16.msra.mxu0 0
        %1814 = vmatprep.subr.bf16.mxu0 0
        %1815 = vmatpush1.bf16.msra.mxu0 0
        %1816 = vmatprep.subr.bf16.mxu0 0
        %1817 = vmatpush1.bf16.msra.mxu0 0
        %1818 = vmatprep.subr.bf16.mxu0 0
        %1819 = vmatpush1.bf16.msra.mxu0 0
        %1820 = vmatprep.mubr.bf16.mxu0 0
        %1821 = vmatmul.mubr.bf16.gmra.mrb[0].mxu0 %v1786
        %v1822 = vpop.f32.mrb[0].mxu0
        %v1823 = vadd.f32 0.0, %v1822
        %v1824 = vpop.f32.mrb[0].mxu0
        %v1825 = vpop.f32.mrb[0].mxu0
        %v1826 = vadd.f32 0.0, %v1825
        %v1827 = vpop.f32.mrb[0].mxu0
        %1828 = vdwg.mxu0
        %v1829 = vpack.c.bf16 %v1826, %v1823
        %v1831 = vunpack.c.l.b16 %v501
        %v1832 = vpack.c.b16 %v1831, %v1831
        %v1833 = vrot.slane %v1832, 2
        %v1835 = vsel %vm502, %v1829, 0
        %v1838 = vsel %vm753, %v1833, 0
        %1840 = vmatprep.subr.bf16.mxu0 0
        %1841 = vmatpush1.bf16.msra.mxu0 %v1838
        %1842 = vmatprep.subr.bf16.mxu0 0
        %1843 = vmatpush1.bf16.msra.mxu0 0
        %1844 = vmatprep.subr.bf16.mxu0 0
        %1845 = vmatpush1.bf16.msra.mxu0 0
        %1846 = vmatprep.subr.bf16.mxu0 0
        %1847 = vmatpush1.bf16.msra.mxu0 0
        %1848 = vmatprep.subr.bf16.mxu0 0
        %1849 = vmatpush1.bf16.msra.mxu0 0
        %1850 = vmatprep.subr.bf16.mxu0 0
        %1851 = vmatpush1.bf16.msra.mxu0 0
        %1852 = vmatprep.subr.bf16.mxu0 0
        %1853 = vmatpush1.bf16.msra.mxu0 0
        %1854 = vmatprep.subr.bf16.mxu0 0
        %1855 = vmatpush1.bf16.msra.mxu0 0
        %1856 = vmatprep.subr.bf16.mxu0 0
        %1857 = vmatpush1.bf16.msra.mxu0 0
        %1858 = vmatprep.subr.bf16.mxu0 0
        %1859 = vmatpush1.bf16.msra.mxu0 0
        %1860 = vmatprep.subr.bf16.mxu0 0
        %1861 = vmatpush1.bf16.msra.mxu0 0
        %1862 = vmatprep.subr.bf16.mxu0 0
        %1863 = vmatpush1.bf16.msra.mxu0 0
        %1864 = vmatprep.subr.bf16.mxu0 0
        %1865 = vmatpush1.bf16.msra.mxu0 0
        %1866 = vmatprep.subr.bf16.mxu0 0
        %1867 = vmatpush1.bf16.msra.mxu0 0
        %1868 = vmatprep.subr.bf16.mxu0 0
        %1869 = vmatpush1.bf16.msra.mxu0 0
        %1870 = vmatprep.subr.bf16.mxu0 0
        %1871 = vmatpush1.bf16.msra.mxu0 0
        %1872 = vmatprep.mubr.bf16.mxu0 0
        %1873 = vmatmul.mubr.bf16.gmra.mrb[0].mxu0 %v1835
        %v1874 = vpop.f32.mrb[0].mxu0
        %v1875 = vadd.f32 0.0, %v1874
        %v1876 = vpop.f32.mrb[0].mxu0
        %v1877 = vpop.f32.mrb[0].mxu0
        %v1878 = vadd.f32 0.0, %v1877
        %v1879 = vpop.f32.mrb[0].mxu0
        %1880 = vdwg.mxu0
        %v1881 = vadd.f32 %v1706, %v1875
        %v1882 = vadd.f32 %v1707, %v1878
        %v1883 = vld [vmem:[%s5] sm:$0x1]
        %v1885 = vlaneseq
        %v1886 = vshrl.u32 %v1885, 7
        %v1887 = vsub.s32 0, %v1886
        %v1888 = vrot.slane %v1883, %v1887
        %v1890 = vadd.f32 %v1881, %v1888
        %v1891 = vadd.f32 %v1882, %v1888
        %1892 = vst.msk [vmem:[%s349] sm:$0xff] %vm451, %v1890
        %1893 = vst.msk [vmem:[%s349 + $0x8] sm:$0xff] %vm451, %v1891
        %s1894 = sand.u32 %s183, 1
        %s1895 = scalar_lea.sflag [#allocation5], %s1894
        %s1896 = sand.u32 %s183, 1
        %s1897 = smul.addr %s1896, 16
        %s1898 = scalar_lea.vmem [#allocation12], %s1897
        // Predicated region
        $region69: #{tpu_custom_call.1} parent=43 // pred_check
          %p1899 = pneg %p193
        $region70: #{tpu_custom_call.1} parent=43 // pred_check_branch
          %1901 = sbr.rel (%p1899) target = $region72
        $region71: #{tpu_custom_call.1} parent=43 // pred_region
          %s1902 = smul.u32 2, %s30
          %s1904 = ssub.s32 256, 256
          %1905 = vsyncadd %s1895, %s1904
          %s1906 = smul.addr %s29, 2
          %s1907 = sadd.s32 %s1902, %s1906
          %s1908 = smul.addr %s1907, 128
          %s1909 = scalar_lea.hbm %s6, %s1908
          %s1910 = sshll.u32 %s1898, 4
          %s1911 = int_to_ptr.vmem [resolvable:$true] %s1910
          %1916 = dma.vmem_to_hbm [thread:$0]  %s1911, 256, %s1909, %s1895, 128, 128, 8
        $region72: #{tpu_custom_call.1} parent=43 // pred_fallthru
          _
      $region44: #{tpu_custom_call.1} parent=5 // pred_fallthru
        _
      %p1917 = scmp.le.s32.totalorder 2, %s20
      // Predicated region
      $region73: #{tpu_custom_call.1} parent=5 // pred_check
        %p1918 = pneg %p1917
      $region74: #{tpu_custom_call.1} parent=5 // pred_check_branch
        %1920 = sbr.rel (%p1918) target = $region76
      $region75: #{tpu_custom_call.1} parent=5 // pred_region
        %s1921 = ssub.s32 %s20, 2
        // Predicated region
        $region77: #{tpu_custom_call.1} parent=75 // pred_check
          %p1922 = pneg %p199
        $region78: #{tpu_custom_call.1} parent=75 // pred_check_branch
          %1924 = sbr.rel (%p1922) target = $region80
        $region79: #{tpu_custom_call.1} parent=75 // pred_region
          %s1925 = sand.u32 %s184, 1
          %s1926 = scalar_lea.sflag [#allocation5], %s1925
          %s1927 = sand.u32 %s184, 1
          %s1928 = smul.addr %s1927, 16
          %s1929 = scalar_lea.vmem [#allocation12], %s1928
          %1930 = dma.done %s1926, 256
        $region80: #{tpu_custom_call.1} parent=75 // pred_fallthru
          _
      $region76: #{tpu_custom_call.1} parent=5 // pred_fallthru
        _
    $region6: #{tpu_custom_call.1} parent=1 // loop_footer
      %s24 = sadd.s32 1, %s20
    $region7: #{tpu_custom_call.1} parent=1 // loop_footer_branch
      %19 = sbr.rel target = $region3
    $region8: #{tpu_custom_call.1} parent=1 // loop_exit
      _
    %1931 = vsyncpa [#allocation4], 1
    %s1932 = scalar_lea.sflag [#allocation4], 1
    %1933 = vsyncpa %s1932, 1
    %1934 = vsyncpa [#allocation7], 1
    %s1935 = scalar_lea.sflag [#allocation7], 1
    %1936 = vsyncpa %s1935, 1
    %1937 = vsyncpa [#allocation10], 1
    %1938 = vsyncpa [#allocation5], 1
    %s1939 = scalar_lea.sflag [#allocation5], 1
    %1940 = vsyncpa %s1939, 1

</llo_original>
